<compile_context>
chip_gen: v7x
topology: tpu7x:2x2x1
jax: 0.10.0
libtpu: 0.0.40
codegen_flags: <defaults>
</compile_context>

<pallas_src>
import functools
import math

import jax
import jax.numpy as jnp
from jax.experimental import pallas as pl
from jax.experimental.pallas import tpu as pltpu


# ----------------------------- config ---------------------------------------
class BertConfig:
    def __init__(self, hidden_size=32, num_hidden_layers=2, num_attention_heads=4,
                 intermediate_size=64, max_position_embeddings=32,
                 layer_norm_eps=1e-12, type_vocab_size=2):
        self.hidden_size = hidden_size
        self.num_hidden_layers = num_hidden_layers
        self.num_attention_heads = num_attention_heads
        self.intermediate_size = intermediate_size
        self.max_position_embeddings = max_position_embeddings
        self.layer_norm_eps = layer_norm_eps
        self.type_vocab_size = type_vocab_size


_SQRT_2_INV = 1.0 / math.sqrt(2.0)
_MASK_BIAS = -1e9                      # large finite (NaN-safe), ≈ HF finfo.min
_VMEM_LIMIT = 48 * 1024 * 1024         # under v7x's 64 MiB physical VMEM
# TODO(synk): at real BERT sizes on v7x, cast weights to bf16 (halves the
# streamed per-layer weight footprint) and/or use pl.Buffered(1) on the
# grid-invariant embedding inputs to stay inside the 64 MiB cap.


# ----------------------------- in-kernel math helpers ------------------------
def _layernorm_f32(v, g, b, eps):
    mean = jnp.mean(v, axis=-1, keepdims=True)
    c = v - mean
    var = jnp.mean(c * c, axis=-1, keepdims=True)
    return c * jax.lax.rsqrt(var + eps) * g + b


def _erf_f32(x):
    # Abramowitz & Stegun 7.1.26 rational erf (|err| < 1.5e-7), built from
    # exp/mul/add so exact-erf GELU stays fused in-kernel.  The division is an
    # EUP approx reciprocal (review).  TODO(synk): set approx=False for
    # bit-closer parity with torch.erf.
    a1, a2, a3, a4, a5 = (0.254829592, -0.284496736, 1.421413741,
                          -1.453152027, 1.061405429)
    p = 0.3275911
    sgn = jnp.where(x < 0.0, -1.0, 1.0)
    z = jnp.abs(x)
    t = pl.reciprocal(1.0 + p * z, approx=True)
    poly = t * (a1 + t * (a2 + t * (a3 + t * (a4 + t * a5))))
    return sgn * (1.0 - poly * jnp.exp(-z * z))


def _gelu_exact_f32(x):
    return x * 0.5 * (1.0 + _erf_f32(x * _SQRT_2_INV))


# ----------------------------- fused whole-model kernel ----------------------
def _midibert_kernel(emb_ref, inw_ref, add_ref, embln_ref, mask_ref,
                     wqkv_ref, bqkv_ref, wo_ref, wi_ref, bi_ref, w2_ref, vec_ref,
                     hid0_ref, hids_ref, h_scr, *, nh, eps):
    """Grid (b, l).  l==0 additionally runs the embedding path.  The running
    hidden state lives in the f32 VMEM scratch `h_scr` across the layer axis."""
    l = pl.program_id(1)
    mdt = wqkv_ref.dtype                                   # MXU operand dtype

    # ---- embeddings: in_linear (+ pos + token_type + bias) + LayerNorm ------
    @pl.when(l == 0)
    def _embed():
        x0 = emb_ref[0].astype(inw_ref.dtype)              # (S, E); sqrt(d) folded into W_in
        y = jnp.dot(x0, inw_ref[...], preferred_element_type=jnp.float32)
        y = y + add_ref[...]                               # (S, H) f32
        ln = embln_ref[...]                                 # (2, H) f32
        h0 = _layernorm_f32(y, ln[0:1], ln[1:2], eps)
        h_scr[...] = h0
        hid0_ref[0] = h0.astype(hid0_ref.dtype)

    x = h_scr[...]                                          # (S, H) f32
    S, H = x.shape
    hd = H // nh

    # ---- multi-head self-attention (heads batched on a non-lane axis) -------
    xb = jnp.broadcast_to(x.astype(mdt)[None], (3 * nh, S, H))
    qkv = jax.lax.dot_general(xb, wqkv_ref[0],              # (3nh, S, hd)
                              (((2,), (1,)), ((0,), (0,))),
                              preferred_element_type=jnp.float32)
    qkv = qkv + bqkv_ref[0]                                 # (3nh, 1, hd) f32, scale folded in Q
    q3, k3, v3 = qkv[:nh], qkv[nh:2 * nh], qkv[2 * nh:]

    s = jax.lax.dot_general(q3.astype(mdt), k3.astype(mdt),  # (nh, S, S)
                            (((2,), (2,)), ((0,), (0,))),
                            preferred_element_type=jnp.float32)
    s = s + mask_ref[...]                                   # (1,1,S) broadcast
    s = s - jnp.max(s, axis=-1, keepdims=True)
    p = jnp.exp(s)
    inv = pl.reciprocal(jnp.sum(p, axis=-1, keepdims=True), approx=True)
    ctx = jax.lax.dot_general(p.astype(mdt), v3.astype(mdt),  # (nh, S, hd)
                              (((2,), (1,)), ((0,), (0,))),
                              preferred_element_type=jnp.float32)
    ctx = ctx * inv                                         # normalize once per row

    vec = vec_ref[0]                                        # (6, H) f32: bo,ln1g,ln1b,b2,ln2g,ln2b
    attn = jax.lax.dot_general(ctx.astype(mdt), wo_ref[0],   # (nh, S, H)
                               (((2,), (1,)), ((0,), (0,))),
                               preferred_element_type=jnp.float32)
    attn = jnp.sum(attn, axis=0) + vec[0:1]                 # reduce heads -> (S, H)
    h1 = _layernorm_f32(attn + x, vec[1:2], vec[2:3], eps)

    # ---- feed-forward (exact-erf GELU), residual, LayerNorm ------------------
    inter = jnp.dot(h1.astype(mdt), wi_ref[0], preferred_element_type=jnp.float32)
    inter = _gelu_exact_f32(inter + bi_ref[0])              # (S, I), VMEM only
    ffo = jnp.dot(inter.astype(mdt), w2_ref[0], preferred_element_type=jnp.float32)
    ffo = ffo + vec[3:4]
    h2 = _layernorm_f32(ffo + h1, vec[4:5], vec[5:6], eps)

    h_scr[...] = h2
    hids_ref[0, 0] = h2.astype(hids_ref.dtype)


def midibert_encoder(packed, emb, emb_add, mask_bias, *, config):
    """emb:(B,S,E)  mask_bias:(B,1,S)  ->  (hid0:(B,S,H), hids:(L,B,S,H))."""
    B, S, E = emb.shape
    H = config.hidden_size
    I = config.intermediate_size
    L = config.num_hidden_layers
    nh = config.num_attention_heads
    hd = H // nh
    kernel = functools.partial(_midibert_kernel, nh=nh, eps=config.layer_norm_eps)

    return pl.pallas_call(
        kernel,
        out_shape=(jax.ShapeDtypeStruct((B, S, H), emb.dtype),
                   jax.ShapeDtypeStruct((L, B, S, H), emb.dtype)),
        grid=(B, L),
        in_specs=[
            pl.BlockSpec((1, S, E), lambda b, l: (b, 0, 0)),          # token embeddings
            pl.BlockSpec((E, H), lambda b, l: (0, 0)),                # in_linear_w * sqrt(E)
            pl.BlockSpec((S, H), lambda b, l: (0, 0)),                # pos + tok_type + b_in
            pl.BlockSpec((2, H), lambda b, l: (0, 0)),                # emb LN gamma/beta
            pl.BlockSpec((1, 1, S), lambda b, l: (b, 0, 0)),          # mask bias
            pl.BlockSpec((1, 3 * nh, H, hd), lambda b, l: (l, 0, 0, 0)),  # head-batched QKV W
            pl.BlockSpec((1, 3 * nh, 1, hd), lambda b, l: (l, 0, 0, 0)),  # head-batched QKV b
            pl.BlockSpec((1, nh, hd, H), lambda b, l: (l, 0, 0, 0)),      # head-batched W_o
            pl.BlockSpec((1, H, I), lambda b, l: (l, 0, 0)),          # W_i
            pl.BlockSpec((1, 1, I), lambda b, l: (l, 0, 0)),          # b_i
            pl.BlockSpec((1, I, H), lambda b, l: (l, 0, 0)),          # W_2
            pl.BlockSpec((1, 6, H), lambda b, l: (l, 0, 0)),          # packed per-layer vectors
        ],
        out_specs=(pl.BlockSpec((1, S, H), lambda b, l: (b, 0, 0)),       # embedding output
                   pl.BlockSpec((1, 1, S, H), lambda b, l: (l, b, 0, 0))),  # per-layer outputs
        scratch_shapes=[pltpu.VMEM((S, H), jnp.float32)],
        compiler_params=pltpu.CompilerParams(
            # TODO(synk): if B == 1 on v7x, split an extra parallel axis (e.g.
            # over S tiles) so both TensorCores are busy.
            dimension_semantics=("parallel", "arbitrary"),
            vmem_limit_bytes=_VMEM_LIMIT),
    )(emb, packed["in_w"], emb_add, packed["emb_ln"], mask_bias,
      packed["wqkv_r"], packed["bqkv_r"], packed["wo_r"],
      packed["wi"], packed["bi"], packed["w2"], packed["vec6"])


# ----------------------------- parameters -----------------------------------
def init_midibert_params(key, config, n_token, emb_size=256, dtype=jnp.float32):
    """Canonical (PyTorch-like) parameter layout; weight matrices in `dtype`."""
    H, I, L = config.hidden_size, config.intermediate_size, config.num_hidden_layers
    keys = iter(jax.random.split(key, 16 + 8 * L))

    def nrm(shape):
        return (jax.random.normal(next(keys), shape, jnp.float32) * 0.02).astype(dtype)

    zeros = lambda shape: jnp.zeros(shape, jnp.float32)
    ones = lambda shape: jnp.ones(shape, jnp.float32)

    params = {
        "word_emb": nrm((n_token, emb_size)),
        "in_linear_w": nrm((emb_size, H)), "in_linear_b": zeros((H,)),
        "pos_emb": nrm((config.max_position_embeddings, H)),
        "tok_type_emb": nrm((config.type_vocab_size, H)),
        "emb_ln_g": ones((H,)), "emb_ln_b": zeros((H,)),
        "pooler_w": nrm((H, H)), "pooler_b": zeros((H,)),
        "layers": [],
    }
    for _ in range(L):
        params["layers"].append({
            "wqkv": nrm((H, 3 * H)), "bqkv": zeros((3 * H,)),   # fused Q|K|V columns
            "wo": nrm((H, H)), "bo": zeros((H,)),
            "ln1_g": ones((H,)), "ln1_b": zeros((H,)),
            "wi": nrm((H, I)), "bi": zeros((I,)),
            "w2": nrm((I, H)), "b2": zeros((H,)),
            "ln2_g": ones((H,)), "ln2_b": zeros((H,)),
        })
    return params


def pack_midibert_params(params, config):
    """One-time weight preprocessing (outside the hot path):
       * fold sqrt(emb_size) into in_linear_w and 1/sqrt(head_dim) into Q
       * reshape Q/K/V and W_o into head-batched layouts (no in-kernel relayout)
       * stack per-layer tensors along a leading L axis
       * pack the six per-layer (H,) vectors into a single (L,6,H) array."""
    H = config.hidden_size
    nh = config.num_attention_heads
    hd = H // nh
    wdt = params["in_linear_w"].dtype
    emb_size = params["word_emb"].shape[1]
    scale = 1.0 / math.sqrt(hd)

    def per_layer(lp):
        wqkv = lp["wqkv"].astype(jnp.float32)
        bqkv = lp["bqkv"].astype(jnp.float32)
        wq, wk, wv = wqkv[:, :H], wqkv[:, H:2 * H], wqkv[:, 2 * H:]
        bq, bk, bv = bqkv[:H], bqkv[H:2 * H], bqkv[2 * H:]

        def heads(w):                                   # (H, H) -> (nh, H, hd)
            return w.reshape(H, nh, hd).transpose(1, 0, 2)

        wqkv_r = jnp.concatenate([heads(wq * scale), heads(wk), heads(wv)], axis=0)
        bqkv_r = jnp.concatenate([(bq * scale).reshape(nh, 1, hd),
                                  bk.reshape(nh, 1, hd),
                                  bv.reshape(nh, 1, hd)], axis=0)
        wo_r = lp["wo"].astype(jnp.float32).reshape(nh, hd, H)
        vec6 = jnp.stack([lp["bo"], lp["ln1_g"], lp["ln1_b"],
                          lp["b2"], lp["ln2_g"], lp["ln2_b"]]).astype(jnp.float32)
        return dict(wqkv_r=wqkv_r.astype(wdt), bqkv_r=bqkv_r,
                    wo_r=wo_r.astype(wdt),
                    wi=lp["wi"], bi=lp["bi"].astype(jnp.float32).reshape(1, -1),
                    w2=lp["w2"], vec6=vec6)

    layers = [per_layer(lp) for lp in params["layers"]]
    stack = lambda name: jnp.stack([l[name] for l in layers])

    emb_add = (params["pos_emb"].astype(jnp.float32)
               + params["tok_type_emb"][0].astype(jnp.float32)[None, :]
               + params["in_linear_b"].astype(jnp.float32)[None, :])    # (P, H)

    return {
        "word_emb": params["word_emb"],
        "in_w": (params["in_linear_w"].astype(jnp.float32)
                 * math.sqrt(emb_size)).astype(wdt),
        "emb_add": emb_add,
        "emb_ln": jnp.stack([params["emb_ln_g"], params["emb_ln_b"]]).astype(jnp.float32),
        "pooler_w": params["pooler_w"], "pooler_b": params["pooler_b"],
        "wqkv_r": stack("wqkv_r"), "bqkv_r": stack("bqkv_r"), "wo_r": stack("wo_r"),
        "wi": stack("wi"), "bi": stack("bi"), "w2": stack("w2"), "vec6": stack("vec6"),
    }


# ----------------------------- forward --------------------------------------
def midibert_forward(packed, config, input_id, attn_mask=None,
                     output_hidden_states=True):
    B, S = input_id.shape

    # Embedding table gather is glue (plain JAX); everything downstream is the
    # single fused Pallas kernel.
    emb = jnp.take(packed["word_emb"], input_id, axis=0)                 # (B,S,E)

    if attn_mask is None:
        attn_mask = jnp.ones((B, S), jnp.float32)
    mask_bias = ((1.0 - attn_mask.astype(jnp.float32)) * _MASK_BIAS)[:, None, :]  # (B,1,S)

    hid0, hids = midibert_encoder(packed, emb, packed["emb_add"][:S], mask_bias,
                                  config=config)

    h_last = hids[-1]                                                    # (B,S,H)
    # Pooler: (B,H)@(H,H) is pure launch overhead as a kernel -> plain JAX.
    pooled = jnp.tanh(h_last[:, 0, :].astype(jnp.float32)
                      @ packed["pooler_w"].astype(jnp.float32)
                      + packed["pooler_b"].astype(jnp.float32))

    out = {"last_hidden_state": h_last, "pooler_output": pooled}
    if output_hidden_states:
        out["hidden_states"] = (hid0,) + tuple(hids[i] for i in range(hids.shape[0]))
    return out


# ----------------------------- main ------------------------------------------
if __name__ == "__main__":
    # vocab (needs 'Pad_None' and 'Mask_None' like the REMI event vocab)
    tokens = [f"Tok_{i}" for i in range(18)] + ["Pad_None", "Mask_None"]
    e2w = {t: i for i, t in enumerate(tokens)}
    w2e = {i: t for t, i in e2w.items()}
    n_token = len(e2w)

    config = BertConfig(hidden_size=32, num_hidden_layers=2, num_attention_heads=4,
                        intermediate_size=64, max_position_embeddings=32)

    key = jax.random.PRNGKey(0)
    k_param, k_ids = jax.random.split(key)
    params = init_midibert_params(k_param, config, n_token, emb_size=256,
                                  dtype=jnp.float32)
    packed = pack_midibert_params(params, config)      # one-time preprocessing

    B, S = 2, 8
    input_id = jax.random.randint(k_ids, (B, S), 0, n_token, dtype=jnp.int32)
    attn_mask = jnp.ones((B, S), jnp.float32)

    fwd = jax.jit(lambda p, ids, m: midibert_forward(p, config, ids, m))
    out = fwd(packed, input_id, attn_mask)
    out = jax.block_until_ready(out)

    assert out["last_hidden_state"].shape == (B, S, config.hidden_size)
    assert out["pooler_output"].shape == (B, config.hidden_size)
    assert len(out["hidden_states"]) == config.num_hidden_layers + 1
    assert bool(jnp.all(jnp.isfinite(out["last_hidden_state"])))
    assert bool(jnp.all(jnp.isfinite(out["pooler_output"])))
    print("KERNEL_OK")
</pallas_src>

<mosaic_0001>
module attributes {stable_mosaic.version = 11 : i64} {
  func.func @_midibert_kernel(%arg0: i32, %arg1: i32, %arg2: memref<1x8x256xf32, #tpu.memory_space<vmem>>, %arg3: memref<256x32xf32, #tpu.memory_space<vmem>>, %arg4: memref<8x32xf32, #tpu.memory_space<vmem>>, %arg5: memref<2x32xf32, #tpu.memory_space<vmem>>, %arg6: memref<1x1x8xf32, #tpu.memory_space<vmem>>, %arg7: memref<1x12x32x8xf32, #tpu.memory_space<vmem>>, %arg8: memref<1x12x1x8xf32, #tpu.memory_space<vmem>>, %arg9: memref<1x4x8x32xf32, #tpu.memory_space<vmem>>, %arg10: memref<1x32x64xf32, #tpu.memory_space<vmem>>, %arg11: memref<1x1x64xf32, #tpu.memory_space<vmem>>, %arg12: memref<1x64x32xf32, #tpu.memory_space<vmem>>, %arg13: memref<1x6x32xf32, #tpu.memory_space<vmem>>, %arg14: memref<1x8x32xf32, #tpu.memory_space<vmem>>, %arg15: memref<1x1x8x32xf32, #tpu.memory_space<vmem>>, %arg16: memref<8x32xf32, #tpu.memory_space<vmem>>) attributes {dimension_semantics = [#tpu.dimension_semantics<parallel>, #tpu.dimension_semantics<arbitrary>], iteration_bounds = array<i64: 2, 2>, scalar_prefetch = 0 : i64, scratch_operands = 1 : i64, tpu.core_type = #tpu.core_type<tc>, window_params = [{transform_indices = @transform_0, window_bounds = array<i64: 1, 8, 256>}, {pipeline_mode = #tpu.pipeline_mode<synchronous>, transform_indices = @transform_1, window_bounds = array<i64: 256, 32>}, {pipeline_mode = #tpu.pipeline_mode<synchronous>, transform_indices = @transform_2, window_bounds = array<i64: 8, 32>}, {pipeline_mode = #tpu.pipeline_mode<synchronous>, transform_indices = @transform_3, window_bounds = array<i64: 2, 32>}, {transform_indices = @transform_4, window_bounds = array<i64: 1, 1, 8>}, {transform_indices = @transform_5, window_bounds = array<i64: 1, 12, 32, 8>}, {transform_indices = @transform_6, window_bounds = array<i64: 1, 12, 1, 8>}, {transform_indices = @transform_7, window_bounds = array<i64: 1, 4, 8, 32>}, {transform_indices = @transform_8, window_bounds = array<i64: 1, 32, 64>}, {transform_indices = @transform_9, window_bounds = array<i64: 1, 1, 64>}, {transform_indices = @transform_10, window_bounds = array<i64: 1, 64, 32>}, {transform_indices = @transform_11, window_bounds = array<i64: 1, 6, 32>}, {transform_indices = @transform_12, window_bounds = array<i64: 1, 8, 32>}, {transform_indices = @transform_13, window_bounds = array<i64: 1, 1, 8, 32>}]} {
    %c0_i32 = arith.constant 0 : i32
    %0 = arith.cmpi eq, %arg1, %c0_i32 : i32
    %1 = arith.extui %0 : i1 to i32
    %c0_i32_0 = arith.constant 0 : i32
    %2 = arith.cmpi ne, %1, %c0_i32_0 : i32
    scf.if %2 {
      %c0_68 = arith.constant 0 : index
      %c0_69 = arith.constant 0 : index
      %c0_70 = arith.constant 0 : index
      %144 = vector.load %arg2[%c0_68, %c0_69, %c0_70] : memref<1x8x256xf32, #tpu.memory_space<vmem>>, vector<1x8x256xf32>
      %145 = vector.shape_cast %144 : vector<1x8x256xf32> to vector<8x256xf32>
      %c0_71 = arith.constant 0 : index
      %c0_72 = arith.constant 0 : index
      %146 = vector.load %arg3[%c0_71, %c0_72] : memref<256x32xf32, #tpu.memory_space<vmem>>, vector<256x32xf32>
      %cst_73 = arith.constant dense<0.000000e+00> : vector<8x32xf32>
      %147 = tpu.matmul %145, %146, %cst_73 {dimension_numbers = #tpu.dot_dimension_numbers<[1], [0], [0], [1], [0, 0, 1, 1], [], []>} : vector<8x256xf32>, vector<256x32xf32>, vector<8x32xf32> -> vector<8x32xf32>
      %c0_74 = arith.constant 0 : index
      %c0_75 = arith.constant 0 : index
      %148 = vector.load %arg4[%c0_74, %c0_75] : memref<8x32xf32, #tpu.memory_space<vmem>>, vector<8x32xf32>
      %149 = arith.addf %147, %148 : vector<8x32xf32>
      %c0_76 = arith.constant 0 : index
      %c0_77 = arith.constant 0 : index
      %150 = vector.load %arg5[%c0_76, %c0_77] : memref<2x32xf32, #tpu.memory_space<vmem>>, vector<2x32xf32>
      %151 = vector.extract_strided_slice %150 {offsets = [0, 0], sizes = [1, 32], strides = [1, 1]} : vector<2x32xf32> to vector<1x32xf32>
      %152 = vector.extract_strided_slice %150 {offsets = [1, 0], sizes = [1, 32], strides = [1, 1]} : vector<2x32xf32> to vector<1x32xf32>
      %cst_78 = arith.constant dense<0.000000e+00> : vector<8xf32>
      %153 = vector.multi_reduction <add>, %149, %cst_78 [1] : vector<8x32xf32> to vector<8xf32>
      %154 = vector.shape_cast %153 : vector<8xf32> to vector<8x1xf32>
      %cst_79 = arith.constant 3.200000e+01 : f32
      %155 = vector.broadcast %cst_79 : f32 to vector<8x1xf32>
      %156 = arith.divf %154, %155 : vector<8x1xf32>
      %157 = vector.broadcast %156 : vector<8x1xf32> to vector<8x32xf32>
      %158 = arith.subf %149, %157 : vector<8x32xf32>
      %159 = arith.mulf %158, %158 : vector<8x32xf32>
      %cst_80 = arith.constant dense<0.000000e+00> : vector<8xf32>
      %160 = vector.multi_reduction <add>, %159, %cst_80 [1] : vector<8x32xf32> to vector<8xf32>
      %161 = vector.shape_cast %160 : vector<8xf32> to vector<8x1xf32>
      %cst_81 = arith.constant 3.200000e+01 : f32
      %162 = vector.broadcast %cst_81 : f32 to vector<8x1xf32>
      %163 = arith.divf %161, %162 : vector<8x1xf32>
      %cst_82 = arith.constant 9.99999996E-13 : f32
      %164 = vector.broadcast %cst_82 : f32 to vector<8x1xf32>
      %165 = arith.addf %163, %164 : vector<8x1xf32>
      %166 = math.rsqrt %165 : vector<8x1xf32>
      %167 = vector.broadcast %166 : vector<8x1xf32> to vector<8x32xf32>
      %168 = arith.mulf %158, %167 : vector<8x32xf32>
      %169 = vector.broadcast %151 : vector<1x32xf32> to vector<8x32xf32>
      %170 = arith.mulf %168, %169 : vector<8x32xf32>
      %171 = vector.broadcast %152 : vector<1x32xf32> to vector<8x32xf32>
      %172 = arith.addf %170, %171 : vector<8x32xf32>
      %c0_83 = arith.constant 0 : index
      %c0_84 = arith.constant 0 : index
      %173 = vector.load %arg16[%c0_83, %c0_84] : memref<8x32xf32, #tpu.memory_space<vmem>>, vector<8x32xf32>
      tpu.vector_store %arg16[%c0_83, %c0_84], %172 {strides = array<i32>} : memref<8x32xf32, #tpu.memory_space<vmem>>, vector<8x32xf32>,
      %c0_85 = arith.constant 0 : index
      %c0_86 = arith.constant 0 : index
      %c0_87 = arith.constant 0 : index
      %174 = vector.load %arg14[%c0_85, %c0_86, %c0_87] : memref<1x8x32xf32, #tpu.memory_space<vmem>>, vector<1x8x32xf32>
      %175 = vector.shape_cast %174 : vector<1x8x32xf32> to vector<8x32xf32>
      %176 = vector.shape_cast %172 : vector<8x32xf32> to vector<1x8x32xf32>
      tpu.vector_store %arg14[%c0_85, %c0_86, %c0_87], %176 {strides = array<i32>} : memref<1x8x32xf32, #tpu.memory_space<vmem>>, vector<1x8x32xf32>,
    } else {
    }
    %c0 = arith.constant 0 : index
    %c0_1 = arith.constant 0 : index
    %3 = vector.load %arg16[%c0, %c0_1] : memref<8x32xf32, #tpu.memory_space<vmem>>, vector<8x32xf32>
    %4 = vector.shape_cast %3 : vector<8x32xf32> to vector<1x8x32xf32>
    %5 = vector.shape_cast %4 : vector<1x8x32xf32> to vector<1x8x32xf32>
    %6 = vector.broadcast %5 : vector<1x8x32xf32> to vector<12x8x32xf32>
    %c0_2 = arith.constant 0 : index
    %c0_3 = arith.constant 0 : index
    %c0_4 = arith.constant 0 : index
    %c0_5 = arith.constant 0 : index
    %7 = vector.load %arg7[%c0_2, %c0_3, %c0_4, %c0_5] : memref<1x12x32x8xf32, #tpu.memory_space<vmem>>, vector<1x12x32x8xf32>
    %8 = vector.shape_cast %7 : vector<1x12x32x8xf32> to vector<12x32x8xf32>
    %cst = arith.constant dense<0.000000e+00> : vector<12x8x8xf32>
    %9 = tpu.matmul %6, %8, %cst {dimension_numbers = #tpu.dot_dimension_numbers<[2], [1], [1], [2], [0, 0, 0, 1, 1, 2], [0], [0]>} : vector<12x8x32xf32>, vector<12x32x8xf32>, vector<12x8x8xf32> -> vector<12x8x8xf32>
    %c0_6 = arith.constant 0 : index
    %c0_7 = arith.constant 0 : index
    %c0_8 = arith.constant 0 : index
    %c0_9 = arith.constant 0 : index
    %10 = vector.load %arg8[%c0_6, %c0_7, %c0_8, %c0_9] : memref<1x12x1x8xf32, #tpu.memory_space<vmem>>, vector<1x12x1x8xf32>
    %11 = vector.shape_cast %10 : vector<1x12x1x8xf32> to vector<12x1x8xf32>
    %12 = vector.broadcast %11 : vector<12x1x8xf32> to vector<12x8x8xf32>
    %13 = arith.addf %9, %12 : vector<12x8x8xf32>
    %14 = vector.extract_strided_slice %13 {offsets = [0, 0, 0], sizes = [4, 8, 8], strides = [1, 1, 1]} : vector<12x8x8xf32> to vector<4x8x8xf32>
    %15 = vector.extract_strided_slice %13 {offsets = [4, 0, 0], sizes = [4, 8, 8], strides = [1, 1, 1]} : vector<12x8x8xf32> to vector<4x8x8xf32>
    %16 = vector.extract_strided_slice %13 {offsets = [8, 0, 0], sizes = [4, 8, 8], strides = [1, 1, 1]} : vector<12x8x8xf32> to vector<4x8x8xf32>
    %cst_10 = arith.constant dense<0.000000e+00> : vector<4x8x8xf32>
    %17 = tpu.matmul %14, %15, %cst_10 {dimension_numbers = #tpu.dot_dimension_numbers<[2], [2], [1], [1], [0, 0, 0, 1, 1, 1], [0], [0]>} : vector<4x8x8xf32>, vector<4x8x8xf32>, vector<4x8x8xf32> -> vector<4x8x8xf32>
    %c0_11 = arith.constant 0 : index
    %c0_12 = arith.constant 0 : index
    %c0_13 = arith.constant 0 : index
    %18 = vector.load %arg6[%c0_11, %c0_12, %c0_13] : memref<1x1x8xf32, #tpu.memory_space<vmem>>, vector<1x1x8xf32>
    %19 = vector.broadcast %18 : vector<1x1x8xf32> to vector<4x8x8xf32>
    %20 = arith.addf %17, %19 : vector<4x8x8xf32>
    %cst_14 = arith.constant dense<0xFF800000> : vector<4x8xf32>
    %21 = vector.multi_reduction <maximumf>, %20, %cst_14 [2] : vector<4x8x8xf32> to vector<4x8xf32>
    %22 = vector.shape_cast %21 : vector<4x8xf32> to vector<4x8x1xf32>
    %23 = vector.broadcast %22 : vector<4x8x1xf32> to vector<4x8x8xf32>
    %24 = arith.subf %20, %23 : vector<4x8x8xf32>
    %25 = math.exp %24 : vector<4x8x8xf32>
    %cst_15 = arith.constant dense<0.000000e+00> : vector<4x8xf32>
    %26 = vector.multi_reduction <add>, %25, %cst_15 [2] : vector<4x8x8xf32> to vector<4x8xf32>
    %27 = vector.shape_cast %26 : vector<4x8xf32> to vector<4x8x1xf32>
    %28 = tpu.reciprocal %27 {approx = true} : vector<4x8x1xf32> -> vector<4x8x1xf32>
    %cst_16 = arith.constant dense<0.000000e+00> : vector<4x8x8xf32>
    %29 = tpu.matmul %25, %16, %cst_16 {dimension_numbers = #tpu.dot_dimension_numbers<[2], [1], [1], [2], [0, 0, 0, 1, 1, 2], [0], [0]>} : vector<4x8x8xf32>, vector<4x8x8xf32>, vector<4x8x8xf32> -> vector<4x8x8xf32>
    %30 = vector.broadcast %28 : vector<4x8x1xf32> to vector<4x8x8xf32>
    %31 = arith.mulf %29, %30 : vector<4x8x8xf32>
    %c0_17 = arith.constant 0 : index
    %c0_18 = arith.constant 0 : index
    %c0_19 = arith.constant 0 : index
    %32 = vector.load %arg13[%c0_17, %c0_18, %c0_19] : memref<1x6x32xf32, #tpu.memory_space<vmem>>, vector<1x6x32xf32>
    %33 = vector.shape_cast %32 : vector<1x6x32xf32> to vector<6x32xf32>
    %c0_20 = arith.constant 0 : index
    %c0_21 = arith.constant 0 : index
    %c0_22 = arith.constant 0 : index
    %c0_23 = arith.constant 0 : index
    %34 = vector.load %arg9[%c0_20, %c0_21, %c0_22, %c0_23] : memref<1x4x8x32xf32, #tpu.memory_space<vmem>>, vector<1x4x8x32xf32>
    %35 = vector.shape_cast %34 : vector<1x4x8x32xf32> to vector<4x8x32xf32>
    %cst_24 = arith.constant dense<0.000000e+00> : vector<4x8x32xf32>
    %36 = tpu.matmul %31, %35, %cst_24 {dimension_numbers = #tpu.dot_dimension_numbers<[2], [1], [1], [2], [0, 0, 0, 1, 1, 2], [0], [0]>} : vector<4x8x8xf32>, vector<4x8x32xf32>, vector<4x8x32xf32> -> vector<4x8x32xf32>
    %cst_25 = arith.constant dense<0.000000e+00> : vector<8x32xf32>
    %37 = vector.multi_reduction <add>, %36, %cst_25 [0] : vector<4x8x32xf32> to vector<8x32xf32>
    %38 = vector.extract_strided_slice %33 {offsets = [0, 0], sizes = [1, 32], strides = [1, 1]} : vector<6x32xf32> to vector<1x32xf32>
    %39 = vector.broadcast %38 : vector<1x32xf32> to vector<8x32xf32>
    %40 = arith.addf %37, %39 : vector<8x32xf32>
    %41 = arith.addf %40, %3 : vector<8x32xf32>
    %42 = vector.extract_strided_slice %33 {offsets = [1, 0], sizes = [1, 32], strides = [1, 1]} : vector<6x32xf32> to vector<1x32xf32>
    %43 = vector.extract_strided_slice %33 {offsets = [2, 0], sizes = [1, 32], strides = [1, 1]} : vector<6x32xf32> to vector<1x32xf32>
    %cst_26 = arith.constant dense<0.000000e+00> : vector<8xf32>
    %44 = vector.multi_reduction <add>, %41, %cst_26 [1] : vector<8x32xf32> to vector<8xf32>
    %45 = vector.shape_cast %44 : vector<8xf32> to vector<8x1xf32>
    %cst_27 = arith.constant 3.200000e+01 : f32
    %46 = vector.broadcast %cst_27 : f32 to vector<8x1xf32>
    %47 = arith.divf %45, %46 : vector<8x1xf32>
    %48 = vector.broadcast %47 : vector<8x1xf32> to vector<8x32xf32>
    %49 = arith.subf %41, %48 : vector<8x32xf32>
    %50 = arith.mulf %49, %49 : vector<8x32xf32>
    %cst_28 = arith.constant dense<0.000000e+00> : vector<8xf32>
    %51 = vector.multi_reduction <add>, %50, %cst_28 [1] : vector<8x32xf32> to vector<8xf32>
    %52 = vector.shape_cast %51 : vector<8xf32> to vector<8x1xf32>
    %cst_29 = arith.constant 3.200000e+01 : f32
    %53 = vector.broadcast %cst_29 : f32 to vector<8x1xf32>
    %54 = arith.divf %52, %53 : vector<8x1xf32>
    %cst_30 = arith.constant 9.99999996E-13 : f32
    %55 = vector.broadcast %cst_30 : f32 to vector<8x1xf32>
    %56 = arith.addf %54, %55 : vector<8x1xf32>
    %57 = math.rsqrt %56 : vector<8x1xf32>
    %58 = vector.broadcast %57 : vector<8x1xf32> to vector<8x32xf32>
    %59 = arith.mulf %49, %58 : vector<8x32xf32>
    %60 = vector.broadcast %42 : vector<1x32xf32> to vector<8x32xf32>
    %61 = arith.mulf %59, %60 : vector<8x32xf32>
    %62 = vector.broadcast %43 : vector<1x32xf32> to vector<8x32xf32>
    %63 = arith.addf %61, %62 : vector<8x32xf32>
    %c0_31 = arith.constant 0 : index
    %c0_32 = arith.constant 0 : index
    %c0_33 = arith.constant 0 : index
    %64 = vector.load %arg10[%c0_31, %c0_32, %c0_33] : memref<1x32x64xf32, #tpu.memory_space<vmem>>, vector<1x32x64xf32>
    %65 = vector.shape_cast %64 : vector<1x32x64xf32> to vector<32x64xf32>
    %cst_34 = arith.constant dense<0.000000e+00> : vector<8x64xf32>
    %66 = tpu.matmul %63, %65, %cst_34 {dimension_numbers = #tpu.dot_dimension_numbers<[1], [0], [0], [1], [0, 0, 1, 1], [], []>} : vector<8x32xf32>, vector<32x64xf32>, vector<8x64xf32> -> vector<8x64xf32>
    %c0_35 = arith.constant 0 : index
    %c0_36 = arith.constant 0 : index
    %c0_37 = arith.constant 0 : index
    %67 = vector.load %arg11[%c0_35, %c0_36, %c0_37] : memref<1x1x64xf32, #tpu.memory_space<vmem>>, vector<1x1x64xf32>
    %68 = vector.shape_cast %67 : vector<1x1x64xf32> to vector<1x64xf32>
    %69 = vector.broadcast %68 : vector<1x64xf32> to vector<8x64xf32>
    %70 = arith.addf %66, %69 : vector<8x64xf32>
    %cst_38 = arith.constant 5.000000e-01 : f32
    %71 = vector.broadcast %cst_38 : f32 to vector<8x64xf32>
    %72 = arith.mulf %70, %71 : vector<8x64xf32>
    %cst_39 = arith.constant 0.707106769 : f32
    %73 = vector.broadcast %cst_39 : f32 to vector<8x64xf32>
    %74 = arith.mulf %70, %73 : vector<8x64xf32>
    %cst_40 = arith.constant 0.000000e+00 : f32
    %75 = vector.broadcast %cst_40 : f32 to vector<8x64xf32>
    %76 = arith.cmpf olt, %74, %75 : vector<8x64xf32>
    %cst_41 = arith.constant -1.000000e+00 : f32
    %cst_42 = arith.constant 1.000000e+00 : f32
    %77 = vector.broadcast %cst_41 : f32 to vector<8x64xf32>
    %78 = vector.broadcast %cst_42 : f32 to vector<8x64xf32>
    %79 = arith.select %76, %77, %78 : vector<8x64xi1>, vector<8x64xf32>
    %80 = math.absf %74 : vector<8x64xf32>
    %cst_43 = arith.constant 0.327591091 : f32
    %81 = vector.broadcast %cst_43 : f32 to vector<8x64xf32>
    %82 = arith.mulf %81, %80 : vector<8x64xf32>
    %cst_44 = arith.constant 1.000000e+00 : f32
    %83 = vector.broadcast %cst_44 : f32 to vector<8x64xf32>
    %84 = arith.addf %83, %82 : vector<8x64xf32>
    %85 = tpu.reciprocal %84 {approx = true} : vector<8x64xf32> -> vector<8x64xf32>
    %cst_45 = arith.constant 1.06140542 : f32
    %86 = vector.broadcast %cst_45 : f32 to vector<8x64xf32>
    %87 = arith.mulf %85, %86 : vector<8x64xf32>
    %cst_46 = arith.constant -1.45315206 : f32
    %88 = vector.broadcast %cst_46 : f32 to vector<8x64xf32>
    %89 = arith.addf %88, %87 : vector<8x64xf32>
    %90 = arith.mulf %85, %89 : vector<8x64xf32>
    %cst_47 = arith.constant 1.42141378 : f32
    %91 = vector.broadcast %cst_47 : f32 to vector<8x64xf32>
    %92 = arith.addf %91, %90 : vector<8x64xf32>
    %93 = arith.mulf %85, %92 : vector<8x64xf32>
    %cst_48 = arith.constant -0.284496725 : f32
    %94 = vector.broadcast %cst_48 : f32 to vector<8x64xf32>
    %95 = arith.addf %94, %93 : vector<8x64xf32>
    %96 = arith.mulf %85, %95 : vector<8x64xf32>
    %cst_49 = arith.constant 0.254829586 : f32
    %97 = vector.broadcast %cst_49 : f32 to vector<8x64xf32>
    %98 = arith.addf %97, %96 : vector<8x64xf32>
    %99 = arith.mulf %85, %98 : vector<8x64xf32>
    %cst_50 = arith.constant 0.000000e+00 : f32
    %100 = vector.broadcast %cst_50 : f32 to vector<8x64xf32>
    %101 = arith.subf %100, %80 : vector<8x64xf32>
    %102 = arith.mulf %101, %80 : vector<8x64xf32>
    %103 = math.exp %102 : vector<8x64xf32>
    %104 = arith.mulf %99, %103 : vector<8x64xf32>
    %cst_51 = arith.constant 1.000000e+00 : f32
    %105 = vector.broadcast %cst_51 : f32 to vector<8x64xf32>
    %106 = arith.subf %105, %104 : vector<8x64xf32>
    %107 = arith.mulf %79, %106 : vector<8x64xf32>
    %cst_52 = arith.constant 1.000000e+00 : f32
    %108 = vector.broadcast %cst_52 : f32 to vector<8x64xf32>
    %109 = arith.addf %108, %107 : vector<8x64xf32>
    %110 = arith.mulf %72, %109 : vector<8x64xf32>
    %c0_53 = arith.constant 0 : index
    %c0_54 = arith.constant 0 : index
    %c0_55 = arith.constant 0 : index
    %111 = vector.load %arg12[%c0_53, %c0_54, %c0_55] : memref<1x64x32xf32, #tpu.memory_space<vmem>>, vector<1x64x32xf32>
    %112 = vector.shape_cast %111 : vector<1x64x32xf32> to vector<64x32xf32>
    %cst_56 = arith.constant dense<0.000000e+00> : vector<8x32xf32>
    %113 = tpu.matmul %110, %112, %cst_56 {dimension_numbers = #tpu.dot_dimension_numbers<[1], [0], [0], [1], [0, 0, 1, 1], [], []>} : vector<8x64xf32>, vector<64x32xf32>, vector<8x32xf32> -> vector<8x32xf32>
    %114 = vector.extract_strided_slice %33 {offsets = [3, 0], sizes = [1, 32], strides = [1, 1]} : vector<6x32xf32> to vector<1x32xf32>
    %115 = vector.broadcast %114 : vector<1x32xf32> to vector<8x32xf32>
    %116 = arith.addf %113, %115 : vector<8x32xf32>
    %117 = arith.addf %116, %63 : vector<8x32xf32>
    %118 = vector.extract_strided_slice %33 {offsets = [4, 0], sizes = [1, 32], strides = [1, 1]} : vector<6x32xf32> to vector<1x32xf32>
    %119 = vector.extract_strided_slice %33 {offsets = [5, 0], sizes = [1, 32], strides = [1, 1]} : vector<6x32xf32> to vector<1x32xf32>
    %cst_57 = arith.constant dense<0.000000e+00> : vector<8xf32>
    %120 = vector.multi_reduction <add>, %117, %cst_57 [1] : vector<8x32xf32> to vector<8xf32>
    %121 = vector.shape_cast %120 : vector<8xf32> to vector<8x1xf32>
    %cst_58 = arith.constant 3.200000e+01 : f32
    %122 = vector.broadcast %cst_58 : f32 to vector<8x1xf32>
    %123 = arith.divf %121, %122 : vector<8x1xf32>
    %124 = vector.broadcast %123 : vector<8x1xf32> to vector<8x32xf32>
    %125 = arith.subf %117, %124 : vector<8x32xf32>
    %126 = arith.mulf %125, %125 : vector<8x32xf32>
    %cst_59 = arith.constant dense<0.000000e+00> : vector<8xf32>
    %127 = vector.multi_reduction <add>, %126, %cst_59 [1] : vector<8x32xf32> to vector<8xf32>
    %128 = vector.shape_cast %127 : vector<8xf32> to vector<8x1xf32>
    %cst_60 = arith.constant 3.200000e+01 : f32
    %129 = vector.broadcast %cst_60 : f32 to vector<8x1xf32>
    %130 = arith.divf %128, %129 : vector<8x1xf32>
    %cst_61 = arith.constant 9.99999996E-13 : f32
    %131 = vector.broadcast %cst_61 : f32 to vector<8x1xf32>
    %132 = arith.addf %130, %131 : vector<8x1xf32>
    %133 = math.rsqrt %132 : vector<8x1xf32>
    %134 = vector.broadcast %133 : vector<8x1xf32> to vector<8x32xf32>
    %135 = arith.mulf %125, %134 : vector<8x32xf32>
    %136 = vector.broadcast %118 : vector<1x32xf32> to vector<8x32xf32>
    %137 = arith.mulf %135, %136 : vector<8x32xf32>
    %138 = vector.broadcast %119 : vector<1x32xf32> to vector<8x32xf32>
    %139 = arith.addf %137, %138 : vector<8x32xf32>
    %c0_62 = arith.constant 0 : index
    %c0_63 = arith.constant 0 : index
    %140 = vector.load %arg16[%c0_62, %c0_63] : memref<8x32xf32, #tpu.memory_space<vmem>>, vector<8x32xf32>
    tpu.vector_store %arg16[%c0_62, %c0_63], %139 {strides = array<i32>} : memref<8x32xf32, #tpu.memory_space<vmem>>, vector<8x32xf32>,
    %c0_64 = arith.constant 0 : index
    %c0_65 = arith.constant 0 : index
    %c0_66 = arith.constant 0 : index
    %c0_67 = arith.constant 0 : index
    %141 = vector.load %arg15[%c0_64, %c0_65, %c0_66, %c0_67] : memref<1x1x8x32xf32, #tpu.memory_space<vmem>>, vector<1x1x8x32xf32>
    %142 = vector.shape_cast %141 : vector<1x1x8x32xf32> to vector<8x32xf32>
    %143 = vector.shape_cast %139 : vector<8x32xf32> to vector<1x1x8x32xf32>
    tpu.vector_store %arg15[%c0_64, %c0_65, %c0_66, %c0_67], %143 {strides = array<i32>} : memref<1x1x8x32xf32, #tpu.memory_space<vmem>>, vector<1x1x8x32xf32>,
    return
  }
  func.func @transform_0(%arg0: i32, %arg1: i32) -> (i32, i32, i32) {
    %c0_i32 = arith.constant 0 : i32
    %c0_i32_0 = arith.constant 0 : i32
    %c0_i32_1 = arith.constant 0 : i32
    return %arg0, %c0_i32, %c0_i32_0 : i32, i32, i32
  }
  func.func @transform_1(%arg0: i32, %arg1: i32) -> (i32, i32) {
    %c0_i32 = arith.constant 0 : i32
    %c0_i32_0 = arith.constant 0 : i32
    %c0_i32_1 = arith.constant 0 : i32
    return %c0_i32, %c0_i32_0 : i32, i32
  }
  func.func @transform_2(%arg0: i32, %arg1: i32) -> (i32, i32) {
    %c0_i32 = arith.constant 0 : i32
    %c0_i32_0 = arith.constant 0 : i32
    %c0_i32_1 = arith.constant 0 : i32
    return %c0_i32, %c0_i32_0 : i32, i32
  }
  func.func @transform_3(%arg0: i32, %arg1: i32) -> (i32, i32) {
    %c0_i32 = arith.constant 0 : i32
    %c0_i32_0 = arith.constant 0 : i32
    %c0_i32_1 = arith.constant 0 : i32
    return %c0_i32, %c0_i32_0 : i32, i32
  }
  func.func @transform_4(%arg0: i32, %arg1: i32) -> (i32, i32, i32) {
    %c0_i32 = arith.constant 0 : i32
    %c0_i32_0 = arith.constant 0 : i32
    %c0_i32_1 = arith.constant 0 : i32
    return %arg0, %c0_i32, %c0_i32_0 : i32, i32, i32
  }
  func.func @transform_5(%arg0: i32, %arg1: i32) -> (i32, i32, i32, i32) {
    %c0_i32 = arith.constant 0 : i32
    %c0_i32_0 = arith.constant 0 : i32
    %c0_i32_1 = arith.constant 0 : i32
    %c0_i32_2 = arith.constant 0 : i32
    return %arg1, %c0_i32, %c0_i32_0, %c0_i32_1 : i32, i32, i32, i32
  }
  func.func @transform_6(%arg0: i32, %arg1: i32) -> (i32, i32, i32, i32) {
    %c0_i32 = arith.constant 0 : i32
    %c0_i32_0 = arith.constant 0 : i32
    %c0_i32_1 = arith.constant 0 : i32
    %c0_i32_2 = arith.constant 0 : i32
    return %arg1, %c0_i32, %c0_i32_0, %c0_i32_1 : i32, i32, i32, i32
  }
  func.func @transform_7(%arg0: i32, %arg1: i32) -> (i32, i32, i32, i32) {
    %c0_i32 = arith.constant 0 : i32
    %c0_i32_0 = arith.constant 0 : i32
    %c0_i32_1 = arith.constant 0 : i32
    %c0_i32_2 = arith.constant 0 : i32
    return %arg1, %c0_i32, %c0_i32_0, %c0_i32_1 : i32, i32, i32, i32
  }
  func.func @transform_8(%arg0: i32, %arg1: i32) -> (i32, i32, i32) {
    %c0_i32 = arith.constant 0 : i32
    %c0_i32_0 = arith.constant 0 : i32
    %c0_i32_1 = arith.constant 0 : i32
    return %arg1, %c0_i32, %c0_i32_0 : i32, i32, i32
  }
  func.func @transform_9(%arg0: i32, %arg1: i32) -> (i32, i32, i32) {
    %c0_i32 = arith.constant 0 : i32
    %c0_i32_0 = arith.constant 0 : i32
    %c0_i32_1 = arith.constant 0 : i32
    return %arg1, %c0_i32, %c0_i32_0 : i32, i32, i32
  }
  func.func @transform_10(%arg0: i32, %arg1: i32) -> (i32, i32, i32) {
    %c0_i32 = arith.constant 0 : i32
    %c0_i32_0 = arith.constant 0 : i32
    %c0_i32_1 = arith.constant 0 : i32
    return %arg1, %c0_i32, %c0_i32_0 : i32, i32, i32
  }
  func.func @transform_11(%arg0: i32, %arg1: i32) -> (i32, i32, i32) {
    %c0_i32 = arith.constant 0 : i32
    %c0_i32_0 = arith.constant 0 : i32
    %c0_i32_1 = arith.constant 0 : i32
    return %arg1, %c0_i32, %c0_i32_0 : i32, i32, i32
  }
  func.func @transform_12(%arg0: i32, %arg1: i32) -> (i32, i32, i32) {
    %c0_i32 = arith.constant 0 : i32
    %c0_i32_0 = arith.constant 0 : i32
    %c0_i32_1 = arith.constant 0 : i32
    return %arg0, %c0_i32, %c0_i32_0 : i32, i32, i32
  }
  func.func @transform_13(%arg0: i32, %arg1: i32) -> (i32, i32, i32, i32) {
    %c0_i32 = arith.constant 0 : i32
    %c0_i32_0 = arith.constant 0 : i32
    %c0_i32_1 = arith.constant 0 : i32
    return %arg1, %arg0, %c0_i32, %c0_i32_0 : i32, i32, i32, i32
  }
}

</mosaic_0001>

<llo_original>
// kernel: _lambda_.1
$region0: #{_lambda_.1}
  #allocation0 [shape = 'u32[]', space=smem, size = 0x4, offset = 0x4, fixed_abs, tag = 'smem constant byte address 0x4 - core index']
  #allocation1 [shape = 'u32[144,128]{1,0:T(1,128)}', space=vmem, size = 0x12000, scoped, tag = 'internal scratch']
  #allocation2 [shape = 'f32[8,32]{1,0:T(8,128)}', space=vmem, size = 0x1000, scoped, tag = 'scratch operand']
  %s0 = inlined_call_operand.vmem [shape: f32[2,8,256], index: 0, kind: input, shape index: {}]
  %s1 = inlined_call_operand.vmem [shape: f32[256,32], index: 1, kind: input, shape index: {}]
  %s2 = inlined_call_operand.vmem [shape: f32[8,32], index: 2, kind: input, shape index: {}]
  %s3 = inlined_call_operand.vmem [shape: f32[2,32], index: 3, kind: input, shape index: {}]
  %s4 = inlined_call_operand.vmem [shape: f32[2,1,8], index: 4, kind: input, shape index: {}]
  %s5 = inlined_call_operand.vmem [shape: f32[2,12,32,8], index: 5, kind: input, shape index: {}]
  %s6 = inlined_call_operand.vmem [shape: f32[2,12,1,8], index: 6, kind: input, shape index: {}]
  %s7 = inlined_call_operand.vmem [shape: f32[2,4,8,32], index: 7, kind: input, shape index: {}]
  %s8 = inlined_call_operand.vmem [shape: f32[2,32,64], index: 8, kind: input, shape index: {}]
  %s9 = inlined_call_operand.vmem [shape: f32[2,1,64], index: 9, kind: input, shape index: {}]
  %s10 = inlined_call_operand.vmem [shape: f32[2,64,32], index: 10, kind: input, shape index: {}]
  %s11 = inlined_call_operand.vmem [shape: f32[2,6,32], index: 11, kind: input, shape index: {}]
  %s12 = inlined_call_operand.hbm [shape: f32[2,8,32], index: 12, kind: output, shape index: {0}]
  %s13 = inlined_call_operand.vmem [shape: f32[2,2,8,32], index: 13, kind: output, shape index: {1}]
  %14 = xla_tuple %s12, %s13
  %s15 = sld [smem:[#allocation0]]
  $region93: #{_lambda_.1} parent=0
    _
  %s17 = ssub.s32 1, %s15
  %s18 = scalar_select 0, %s17, %s15
  $region1: #{_lambda_.1} parent=0
    #allocation3 [shape = 'u8[8192]{0}', space=vmem, size = 0x2000, scoped, tag = 'output window, operand 0']
    #allocation4 [shape = 's32[2]{0}', space=sflag, size = 0x8, scoped, tag = 'scoped memory for _lambda_.1']
    %19 = vsyncpa [#allocation4], 0
    %s20 = scalar_lea.sflag [#allocation4], 1
    %21 = vsyncpa %s20, 0
    loop: start=0, step=1, limit=6
    $region2: #{_lambda_.1} parent=1 // loop_pre_header
      _
    $region3: #{_lambda_.1} parent=1 // loop_header
      %s23 = sphi 0, %s27
      %p24 = scmp.ge.s32.totalorder %s23, 6
      %s30 = sphi 0, %s42
      %s31 = sphi 0, %s38
      %s32 = sphi 0, %s30
      %s33 = sphi 0, %s31
      %s34 = sphi 0, %s32
      %s35 = sphi 0, %s33
      %s45 = sphi 0, %s47
      %s48 = sphi 0, %s45
      %s49 = sphi 0, %s48
      %s65 = sphi 0, %s49
      %s69 = sphi 0, %s69
      %s71 = sphi 0, %s69
      %s72 = sphi 0, %s71
      %s86 = sphi 0, %s72
      %s90 = sphi 0, %s90
      %s92 = sphi 0, %s90
      %s93 = sphi 0, %s92
      %s107 = sphi 0, %s93
      %s111 = sphi 0, %s111
      %s113 = sphi 0, %s111
      %s114 = sphi 0, %s113
      %s128 = sphi 0, %s114
      %s134 = sphi 0, %s136
      %s137 = sphi 0, %s134
      %s138 = sphi 0, %s137
      %s154 = sphi 0, %s138
      %s160 = sphi 0, %s162
      %s163 = sphi 0, %s160
      %s164 = sphi 0, %s163
      %s180 = sphi 0, %s164
      %s186 = sphi 0, %s188
      %s189 = sphi 0, %s186
      %s190 = sphi 0, %s189
      %s206 = sphi 0, %s190
      %s212 = sphi 0, %s214
      %s215 = sphi 0, %s212
      %s216 = sphi 0, %s215
      %s232 = sphi 0, %s216
      %s238 = sphi 0, %s240
      %s241 = sphi 0, %s238
      %s242 = sphi 0, %s241
      %s258 = sphi 0, %s242
      %s264 = sphi 0, %s266
      %s267 = sphi 0, %s264
      %s268 = sphi 0, %s267
      %s284 = sphi 0, %s268
      %s290 = sphi 0, %s292
      %s293 = sphi 0, %s290
      %s294 = sphi 0, %s293
      %s310 = sphi 0, %s294
      %s316 = sphi 0, %s318
      %s319 = sphi 0, %s316
      %s320 = sphi 0, %s319
      %s336 = sphi 0, %s320
      %s342 = sphi 0, %s344
      %s345 = sphi 0, %s342
      %s346 = sphi 0, %s345
      %s362 = sphi 0, %s346
      %s370 = sphi 0, %s372
      %s373 = sphi 0, %s370
      %s374 = sphi 0, %s373
      %s390 = sphi 0, %s374
    $region4: #{_lambda_.1} parent=1 // loop_header_branch
      %26 = sbr.rel (%p24) target = $region8
    $region5: #{_lambda_.1} parent=1 // loop_body
      %s28 = ssub.s32 %s23, 1
      %s29 = ssub.s32 %s23, 2
      %s36 = sadd.s32 1, %s31
      %p37 = scmp.ge.s32.totalorder %s36, 2
      %s38 = scalar_select %p37, 0, %s36
      %s39 = sadd.s32 1, %s30
      %s40 = scalar_select %p37, %s39, %s30
      %p41 = scmp.ge.s32.totalorder %s40, 2
      %s42 = scalar_select %p41, 0, %s40
      %s43 = ssub.s32 %s30, %s42
      %p44 = scmp.eq.s32.totalorder %s43, 0
      %s46 = sadd.s32 %s45, 1
      %s47 = scalar_select %p44, %s45, %s46
      %p50 = pneg %p44
      %p51 = scmp.eq.s32.totalorder %s23, 3
      %p52 = por %p50, %p51
      %p53 = scmp.ne.s32.totalorder %s45, %s48
      %p54 = scmp.eq.s32.totalorder %s23, 0
      %p55 = por %p53, %p54
      %p56 = scmp.ne.s32.totalorder %s45, %s48
      %p57 = scmp.eq.s32.totalorder %s28, 3
      %p58 = por %p56, %p57
      %p59 = scmp.ne.s32.totalorder %s48, %s49
      %p60 = scmp.eq.s32.totalorder %s28, 0
      %p61 = por %p59, %p60
      %p62 = scmp.ne.s32.totalorder %s48, %s49
      %p63 = scmp.eq.s32.totalorder %s29, 3
      %p64 = por %p62, %p63
      %p66 = scmp.ne.s32.totalorder %s49, %s65
      %p67 = scmp.eq.s32.totalorder %s29, 0
      %p68 = por %p66, %p67
      %s70 = sadd.s32 %s69, 1
      %p73 = scmp.eq.s32.totalorder %s23, 3
      %p74 = scmp.ne.s32.totalorder %s69, %s71
      %p75 = scmp.eq.s32.totalorder %s23, 0
      %p76 = por %p74, %p75
      %p77 = scmp.ne.s32.totalorder %s69, %s71
      %p78 = scmp.eq.s32.totalorder %s28, 3
      %p79 = por %p77, %p78
      %p80 = scmp.ne.s32.totalorder %s71, %s72
      %p81 = scmp.eq.s32.totalorder %s28, 0
      %p82 = por %p80, %p81
      %p83 = scmp.ne.s32.totalorder %s71, %s72
      %p84 = scmp.eq.s32.totalorder %s29, 3
      %p85 = por %p83, %p84
      %p87 = scmp.ne.s32.totalorder %s72, %s86
      %p88 = scmp.eq.s32.totalorder %s29, 0
      %p89 = por %p87, %p88
      %s91 = sadd.s32 %s90, 1
      %p94 = scmp.eq.s32.totalorder %s23, 3
      %p95 = scmp.ne.s32.totalorder %s90, %s92
      %p96 = scmp.eq.s32.totalorder %s23, 0
      %p97 = por %p95, %p96
      %p98 = scmp.ne.s32.totalorder %s90, %s92
      %p99 = scmp.eq.s32.totalorder %s28, 3
      %p100 = por %p98, %p99
      %p101 = scmp.ne.s32.totalorder %s92, %s93
      %p102 = scmp.eq.s32.totalorder %s28, 0
      %p103 = por %p101, %p102
      %p104 = scmp.ne.s32.totalorder %s92, %s93
      %p105 = scmp.eq.s32.totalorder %s29, 3
      %p106 = por %p104, %p105
      %p108 = scmp.ne.s32.totalorder %s93, %s107
      %p109 = scmp.eq.s32.totalorder %s29, 0
      %p110 = por %p108, %p109
      %s112 = sadd.s32 %s111, 1
      %p115 = scmp.eq.s32.totalorder %s23, 3
      %p116 = scmp.ne.s32.totalorder %s111, %s113
      %p117 = scmp.eq.s32.totalorder %s23, 0
      %p118 = por %p116, %p117
      %p119 = scmp.ne.s32.totalorder %s111, %s113
      %p120 = scmp.eq.s32.totalorder %s28, 3
      %p121 = por %p119, %p120
      %p122 = scmp.ne.s32.totalorder %s113, %s114
      %p123 = scmp.eq.s32.totalorder %s28, 0
      %p124 = por %p122, %p123
      %p125 = scmp.ne.s32.totalorder %s113, %s114
      %p126 = scmp.eq.s32.totalorder %s29, 3
      %p127 = por %p125, %p126
      %p129 = scmp.ne.s32.totalorder %s114, %s128
      %p130 = scmp.eq.s32.totalorder %s29, 0
      %p131 = por %p129, %p130
      %s132 = ssub.s32 %s30, %s42
      %p133 = scmp.eq.s32.totalorder %s132, 0
      %s135 = sadd.s32 %s134, 1
      %s136 = scalar_select %p133, %s134, %s135
      %p139 = pneg %p133
      %p140 = scmp.eq.s32.totalorder %s23, 3
      %p141 = por %p139, %p140
      %p142 = scmp.ne.s32.totalorder %s134, %s137
      %p143 = scmp.eq.s32.totalorder %s23, 0
      %p144 = por %p142, %p143
      %p145 = scmp.ne.s32.totalorder %s134, %s137
      %p146 = scmp.eq.s32.totalorder %s28, 3
      %p147 = por %p145, %p146
      %p148 = scmp.ne.s32.totalorder %s137, %s138
      %p149 = scmp.eq.s32.totalorder %s28, 0
      %p150 = por %p148, %p149
      %p151 = scmp.ne.s32.totalorder %s137, %s138
      %p152 = scmp.eq.s32.totalorder %s29, 3
      %p153 = por %p151, %p152
      %p155 = scmp.ne.s32.totalorder %s138, %s154
      %p156 = scmp.eq.s32.totalorder %s29, 0
      %p157 = por %p155, %p156
      %s158 = ssub.s32 %s31, %s38
      %p159 = scmp.eq.s32.totalorder %s158, 0
      %s161 = sadd.s32 %s160, 1
      %s162 = scalar_select %p159, %s160, %s161
      %p165 = pneg %p159
      %p166 = scmp.eq.s32.totalorder %s23, 3
      %p167 = por %p165, %p166
      %p168 = scmp.ne.s32.totalorder %s160, %s163
      %p169 = scmp.eq.s32.totalorder %s23, 0
      %p170 = por %p168, %p169
      %p171 = scmp.ne.s32.totalorder %s160, %s163
      %p172 = scmp.eq.s32.totalorder %s28, 3
      %p173 = por %p171, %p172
      %p174 = scmp.ne.s32.totalorder %s163, %s164
      %p175 = scmp.eq.s32.totalorder %s28, 0
      %p176 = por %p174, %p175
      %p177 = scmp.ne.s32.totalorder %s163, %s164
      %p178 = scmp.eq.s32.totalorder %s29, 3
      %p179 = por %p177, %p178
      %p181 = scmp.ne.s32.totalorder %s164, %s180
      %p182 = scmp.eq.s32.totalorder %s29, 0
      %p183 = por %p181, %p182
      %s184 = ssub.s32 %s31, %s38
      %p185 = scmp.eq.s32.totalorder %s184, 0
      %s187 = sadd.s32 %s186, 1
      %s188 = scalar_select %p185, %s186, %s187
      %p191 = pneg %p185
      %p192 = scmp.eq.s32.totalorder %s23, 3
      %p193 = por %p191, %p192
      %p194 = scmp.ne.s32.totalorder %s186, %s189
      %p195 = scmp.eq.s32.totalorder %s23, 0
      %p196 = por %p194, %p195
      %p197 = scmp.ne.s32.totalorder %s186, %s189
      %p198 = scmp.eq.s32.totalorder %s28, 3
      %p199 = por %p197, %p198
      %p200 = scmp.ne.s32.totalorder %s189, %s190
      %p201 = scmp.eq.s32.totalorder %s28, 0
      %p202 = por %p200, %p201
      %p203 = scmp.ne.s32.totalorder %s189, %s190
      %p204 = scmp.eq.s32.totalorder %s29, 3
      %p205 = por %p203, %p204
      %p207 = scmp.ne.s32.totalorder %s190, %s206
      %p208 = scmp.eq.s32.totalorder %s29, 0
      %p209 = por %p207, %p208
      %s210 = ssub.s32 %s31, %s38
      %p211 = scmp.eq.s32.totalorder %s210, 0
      %s213 = sadd.s32 %s212, 1
      %s214 = scalar_select %p211, %s212, %s213
      %p217 = pneg %p211
      %p218 = scmp.eq.s32.totalorder %s23, 3
      %p219 = por %p217, %p218
      %p220 = scmp.ne.s32.totalorder %s212, %s215
      %p221 = scmp.eq.s32.totalorder %s23, 0
      %p222 = por %p220, %p221
      %p223 = scmp.ne.s32.totalorder %s212, %s215
      %p224 = scmp.eq.s32.totalorder %s28, 3
      %p225 = por %p223, %p224
      %p226 = scmp.ne.s32.totalorder %s215, %s216
      %p227 = scmp.eq.s32.totalorder %s28, 0
      %p228 = por %p226, %p227
      %p229 = scmp.ne.s32.totalorder %s215, %s216
      %p230 = scmp.eq.s32.totalorder %s29, 3
      %p231 = por %p229, %p230
      %p233 = scmp.ne.s32.totalorder %s216, %s232
      %p234 = scmp.eq.s32.totalorder %s29, 0
      %p235 = por %p233, %p234
      %s236 = ssub.s32 %s31, %s38
      %p237 = scmp.eq.s32.totalorder %s236, 0
      %s239 = sadd.s32 %s238, 1
      %s240 = scalar_select %p237, %s238, %s239
      %p243 = pneg %p237
      %p244 = scmp.eq.s32.totalorder %s23, 3
      %p245 = por %p243, %p244
      %p246 = scmp.ne.s32.totalorder %s238, %s241
      %p247 = scmp.eq.s32.totalorder %s23, 0
      %p248 = por %p246, %p247
      %p249 = scmp.ne.s32.totalorder %s238, %s241
      %p250 = scmp.eq.s32.totalorder %s28, 3
      %p251 = por %p249, %p250
      %p252 = scmp.ne.s32.totalorder %s241, %s242
      %p253 = scmp.eq.s32.totalorder %s28, 0
      %p254 = por %p252, %p253
      %p255 = scmp.ne.s32.totalorder %s241, %s242
      %p256 = scmp.eq.s32.totalorder %s29, 3
      %p257 = por %p255, %p256
      %p259 = scmp.ne.s32.totalorder %s242, %s258
      %p260 = scmp.eq.s32.totalorder %s29, 0
      %p261 = por %p259, %p260
      %s262 = ssub.s32 %s31, %s38
      %p263 = scmp.eq.s32.totalorder %s262, 0
      %s265 = sadd.s32 %s264, 1
      %s266 = scalar_select %p263, %s264, %s265
      %p269 = pneg %p263
      %p270 = scmp.eq.s32.totalorder %s23, 3
      %p271 = por %p269, %p270
      %p272 = scmp.ne.s32.totalorder %s264, %s267
      %p273 = scmp.eq.s32.totalorder %s23, 0
      %p274 = por %p272, %p273
      %p275 = scmp.ne.s32.totalorder %s264, %s267
      %p276 = scmp.eq.s32.totalorder %s28, 3
      %p277 = por %p275, %p276
      %p278 = scmp.ne.s32.totalorder %s267, %s268
      %p279 = scmp.eq.s32.totalorder %s28, 0
      %p280 = por %p278, %p279
      %p281 = scmp.ne.s32.totalorder %s267, %s268
      %p282 = scmp.eq.s32.totalorder %s29, 3
      %p283 = por %p281, %p282
      %p285 = scmp.ne.s32.totalorder %s268, %s284
      %p286 = scmp.eq.s32.totalorder %s29, 0
      %p287 = por %p285, %p286
      %s288 = ssub.s32 %s31, %s38
      %p289 = scmp.eq.s32.totalorder %s288, 0
      %s291 = sadd.s32 %s290, 1
      %s292 = scalar_select %p289, %s290, %s291
      %p295 = pneg %p289
      %p296 = scmp.eq.s32.totalorder %s23, 3
      %p297 = por %p295, %p296
      %p298 = scmp.ne.s32.totalorder %s290, %s293
      %p299 = scmp.eq.s32.totalorder %s23, 0
      %p300 = por %p298, %p299
      %p301 = scmp.ne.s32.totalorder %s290, %s293
      %p302 = scmp.eq.s32.totalorder %s28, 3
      %p303 = por %p301, %p302
      %p304 = scmp.ne.s32.totalorder %s293, %s294
      %p305 = scmp.eq.s32.totalorder %s28, 0
      %p306 = por %p304, %p305
      %p307 = scmp.ne.s32.totalorder %s293, %s294
      %p308 = scmp.eq.s32.totalorder %s29, 3
      %p309 = por %p307, %p308
      %p311 = scmp.ne.s32.totalorder %s294, %s310
      %p312 = scmp.eq.s32.totalorder %s29, 0
      %p313 = por %p311, %p312
      %s314 = ssub.s32 %s31, %s38
      %p315 = scmp.eq.s32.totalorder %s314, 0
      %s317 = sadd.s32 %s316, 1
      %s318 = scalar_select %p315, %s316, %s317
      %p321 = pneg %p315
      %p322 = scmp.eq.s32.totalorder %s23, 3
      %p323 = por %p321, %p322
      %p324 = scmp.ne.s32.totalorder %s316, %s319
      %p325 = scmp.eq.s32.totalorder %s23, 0
      %p326 = por %p324, %p325
      %p327 = scmp.ne.s32.totalorder %s316, %s319
      %p328 = scmp.eq.s32.totalorder %s28, 3
      %p329 = por %p327, %p328
      %p330 = scmp.ne.s32.totalorder %s319, %s320
      %p331 = scmp.eq.s32.totalorder %s28, 0
      %p332 = por %p330, %p331
      %p333 = scmp.ne.s32.totalorder %s319, %s320
      %p334 = scmp.eq.s32.totalorder %s29, 3
      %p335 = por %p333, %p334
      %p337 = scmp.ne.s32.totalorder %s320, %s336
      %p338 = scmp.eq.s32.totalorder %s29, 0
      %p339 = por %p337, %p338
      %s340 = ssub.s32 %s30, %s42
      %p341 = scmp.eq.s32.totalorder %s340, 0
      %s343 = sadd.s32 %s342, 1
      %s344 = scalar_select %p341, %s342, %s343
      %p347 = pneg %p341
      %p348 = scmp.eq.s32.totalorder %s23, 3
      %p349 = por %p347, %p348
      %p350 = scmp.ne.s32.totalorder %s342, %s345
      %p351 = scmp.eq.s32.totalorder %s23, 0
      %p352 = por %p350, %p351
      %p353 = scmp.ne.s32.totalorder %s342, %s345
      %p354 = scmp.eq.s32.totalorder %s28, 3
      %p355 = por %p353, %p354
      %p356 = scmp.ne.s32.totalorder %s345, %s346
      %p357 = scmp.eq.s32.totalorder %s28, 0
      %p358 = por %p356, %p357
      %p359 = scmp.ne.s32.totalorder %s345, %s346
      %p360 = scmp.eq.s32.totalorder %s29, 3
      %p361 = por %p359, %p360
      %p363 = scmp.ne.s32.totalorder %s346, %s362
      %p364 = scmp.eq.s32.totalorder %s29, 0
      %p365 = por %p363, %p364
      %s366 = ssub.s32 %s31, %s38
      %s367 = ssub.s32 %s30, %s42
      %s368 = sor.u32 %s366, %s367
      %p369 = scmp.eq.s32.totalorder %s368, 0
      %s371 = sadd.s32 %s370, 1
      %s372 = scalar_select %p369, %s370, %s371
      %p375 = pneg %p369
      %p376 = scmp.eq.s32.totalorder %s23, 3
      %p377 = por %p375, %p376
      %p378 = scmp.ne.s32.totalorder %s370, %s373
      %p379 = scmp.eq.s32.totalorder %s23, 0
      %p380 = por %p378, %p379
      %p381 = scmp.ne.s32.totalorder %s370, %s373
      %p382 = scmp.eq.s32.totalorder %s28, 3
      %p383 = por %p381, %p382
      %p384 = scmp.ne.s32.totalorder %s373, %s374
      %p385 = scmp.eq.s32.totalorder %s28, 0
      %p386 = por %p384, %p385
      %p387 = scmp.ne.s32.totalorder %s373, %s374
      %p388 = scmp.eq.s32.totalorder %s29, 3
      %p389 = por %p387, %p388
      %p391 = scmp.ne.s32.totalorder %s374, %s390
      %p392 = scmp.eq.s32.totalorder %s29, 0
      %p393 = por %p391, %p392
      %p394 = scmp.le.s32.totalorder 1, %s23
      %p395 = scmp.lt.s32.totalorder %s23, 5
      %p396 = pnand %p394, %p395
      %p397 = pneg %p396
      // Predicated region
      $region9: #{_lambda_.1} parent=5 // pred_check
        _
      $region10: #{_lambda_.1} parent=5 // pred_check_branch
        %399 = sbr.rel (%p396) target = $region12
      $region11: #{_lambda_.1} parent=5 // pred_region
        %s400 = ssub.s32 %s23, 1
        // Predicated region
        $region13: #{_lambda_.1} parent=11 // pred_check
          %p401 = pneg %p82
        $region14: #{_lambda_.1} parent=11 // pred_check_branch
          %403 = sbr.rel (%p401) target = $region16
        $region15: #{_lambda_.1} parent=11 // pred_region
          _
        $region16: #{_lambda_.1} parent=11 // pred_fallthru
          _
        // Predicated region
        $region17: #{_lambda_.1} parent=11 // pred_check
          %p404 = pneg %p103
        $region18: #{_lambda_.1} parent=11 // pred_check_branch
          %406 = sbr.rel (%p404) target = $region20
        $region19: #{_lambda_.1} parent=11 // pred_region
          _
        $region20: #{_lambda_.1} parent=11 // pred_fallthru
          _
        // Predicated region
        $region21: #{_lambda_.1} parent=11 // pred_check
          %p407 = pneg %p124
        $region22: #{_lambda_.1} parent=11 // pred_check_branch
          %409 = sbr.rel (%p407) target = $region24
        $region23: #{_lambda_.1} parent=11 // pred_region
          _
        $region24: #{_lambda_.1} parent=11 // pred_fallthru
          _
      $region12: #{_lambda_.1} parent=5 // pred_fallthru
        _
      %p410 = scmp.lt.s32.totalorder %s23, 4
      // Predicated region
      $region25: #{_lambda_.1} parent=5 // pred_check
        %p411 = pneg %p410
      $region26: #{_lambda_.1} parent=5 // pred_check_branch
        %413 = sbr.rel (%p411) target = $region28
      $region27: #{_lambda_.1} parent=5 // pred_region
        // Predicated region
        $region29: #{_lambda_.1} parent=27 // pred_check
          %p414 = pneg %p55
        $region30: #{_lambda_.1} parent=27 // pred_check_branch
          %416 = sbr.rel (%p414) target = $region32
        $region31: #{_lambda_.1} parent=27 // pred_region
          %p417 = scmp.lt.s32.totalorder %s30, 1
          %s418 = scalar_select %p417, %s30, 1
          %s419 = smul.addr %s418, 2
          %s420 = smul.addr %s419, 8
          %s421 = scalar_lea.vmem %s0, %s420
        $region32: #{_lambda_.1} parent=27 // pred_fallthru
          _
        // Predicated region
        $region33: #{_lambda_.1} parent=27 // pred_check
          %p422 = pneg %p144
        $region34: #{_lambda_.1} parent=27 // pred_check_branch
          %424 = sbr.rel (%p422) target = $region36
        $region35: #{_lambda_.1} parent=27 // pred_region
          %p425 = scmp.lt.s32.totalorder %s30, 1
          %s426 = scalar_select %p425, %s30, 1
          %s427 = scalar_lea.vmem %s4, %s426
        $region36: #{_lambda_.1} parent=27 // pred_fallthru
          _
        // Predicated region
        $region37: #{_lambda_.1} parent=27 // pred_check
          %p428 = pneg %p170
        $region38: #{_lambda_.1} parent=27 // pred_check_branch
          %430 = sbr.rel (%p428) target = $region40
        $region39: #{_lambda_.1} parent=27 // pred_region
          %p431 = scmp.lt.s32.totalorder %s31, 1
          %s432 = scalar_select %p431, %s31, 1
          %s433 = smul.addr %s432, 48
          %s434 = smul.addr %s433, 8
          %s435 = scalar_lea.vmem %s5, %s434
        $region40: #{_lambda_.1} parent=27 // pred_fallthru
          _
        // Predicated region
        $region41: #{_lambda_.1} parent=27 // pred_check
          %p436 = pneg %p196
        $region42: #{_lambda_.1} parent=27 // pred_check_branch
          %438 = sbr.rel (%p436) target = $region44
        $region43: #{_lambda_.1} parent=27 // pred_region
          %p439 = scmp.lt.s32.totalorder %s31, 1
          %s440 = scalar_select %p439, %s31, 1
          %s441 = smul.addr %s440, 12
          %s442 = scalar_lea.vmem %s6, %s441
        $region44: #{_lambda_.1} parent=27 // pred_fallthru
          _
        // Predicated region
        $region45: #{_lambda_.1} parent=27 // pred_check
          %p443 = pneg %p222
        $region46: #{_lambda_.1} parent=27 // pred_check_branch
          %445 = sbr.rel (%p443) target = $region48
        $region47: #{_lambda_.1} parent=27 // pred_region
          %p446 = scmp.lt.s32.totalorder %s31, 1
          %s447 = scalar_select %p446, %s31, 1
          %s448 = smul.addr %s447, 4
          %s449 = smul.addr %s448, 8
          %s450 = scalar_lea.vmem %s7, %s449
        $region48: #{_lambda_.1} parent=27 // pred_fallthru
          _
        // Predicated region
        $region49: #{_lambda_.1} parent=27 // pred_check
          %p451 = pneg %p248
        $region50: #{_lambda_.1} parent=27 // pred_check_branch
          %453 = sbr.rel (%p451) target = $region52
        $region51: #{_lambda_.1} parent=27 // pred_region
          %p454 = scmp.lt.s32.totalorder %s31, 1
          %s455 = scalar_select %p454, %s31, 1
          %s456 = smul.addr %s455, 4
          %s457 = smul.addr %s456, 8
          %s458 = scalar_lea.vmem %s8, %s457
        $region52: #{_lambda_.1} parent=27 // pred_fallthru
          _
        // Predicated region
        $region53: #{_lambda_.1} parent=27 // pred_check
          %p459 = pneg %p274
        $region54: #{_lambda_.1} parent=27 // pred_check_branch
          %461 = sbr.rel (%p459) target = $region56
        $region55: #{_lambda_.1} parent=27 // pred_region
          %p462 = scmp.lt.s32.totalorder %s31, 1
          %s463 = scalar_select %p462, %s31, 1
          %s464 = scalar_lea.vmem %s9, %s463
        $region56: #{_lambda_.1} parent=27 // pred_fallthru
          _
        // Predicated region
        $region57: #{_lambda_.1} parent=27 // pred_check
          %p465 = pneg %p300
        $region58: #{_lambda_.1} parent=27 // pred_check_branch
          %467 = sbr.rel (%p465) target = $region60
        $region59: #{_lambda_.1} parent=27 // pred_region
          %p468 = scmp.lt.s32.totalorder %s31, 1
          %s469 = scalar_select %p468, %s31, 1
          %s470 = smul.addr %s469, 8
          %s471 = smul.addr %s470, 8
          %s472 = scalar_lea.vmem %s10, %s471
        $region60: #{_lambda_.1} parent=27 // pred_fallthru
          _
        // Predicated region
        $region61: #{_lambda_.1} parent=27 // pred_check
          %p473 = pneg %p326
        $region62: #{_lambda_.1} parent=27 // pred_check_branch
          %475 = sbr.rel (%p473) target = $region64
        $region63: #{_lambda_.1} parent=27 // pred_region
          %p476 = scmp.lt.s32.totalorder %s31, 1
          %s477 = scalar_select %p476, %s31, 1
          %s478 = smul.addr %s477, 8
          %s479 = scalar_lea.vmem %s11, %s478
        $region64: #{_lambda_.1} parent=27 // pred_fallthru
          _
      $region28: #{_lambda_.1} parent=5 // pred_fallthru
        _
      %p480 = scmp.le.s32.totalorder 1, %s23
      %p481 = scmp.lt.s32.totalorder %s23, 5
      %p482 = pnand %p480, %p481
      %p483 = pneg %p482
      // Predicated region
      $region65: #{_lambda_.1} parent=5 // pred_check
        _
      $region66: #{_lambda_.1} parent=5 // pred_check_branch
        %485 = sbr.rel (%p482) target = $region68
      $region67: #{_lambda_.1} parent=5 // pred_region
        %s486 = ssub.s32 %s23, 1
        %p487 = scmp.lt.s32.totalorder %s32, 1
        %s488 = scalar_select %p487, %s32, 1
        %s489 = smul.addr %s488, 2
        %s490 = smul.addr %s489, 8
        %s491 = scalar_lea.vmem %s0, %s490
        %p492 = pneg %p61
        %p493 = pneg %p58
        %p494 = pneg %p82
        %p495 = pneg %p79
        %p496 = pneg %p103
        %p497 = pneg %p100
        %p498 = pneg %p124
        %p499 = pneg %p121
        %p500 = scmp.lt.s32.totalorder %s32, 1
        %s501 = scalar_select %p500, %s32, 1
        %s502 = scalar_lea.vmem %s4, %s501
        %p503 = pneg %p150
        %p504 = pneg %p147
        %p505 = scmp.lt.s32.totalorder %s33, 1
        %s506 = scalar_select %p505, %s33, 1
        %s507 = smul.addr %s506, 48
        %s508 = smul.addr %s507, 8
        %s509 = scalar_lea.vmem %s5, %s508
        %p510 = pneg %p176
        %p511 = pneg %p173
        %p512 = scmp.lt.s32.totalorder %s33, 1
        %s513 = scalar_select %p512, %s33, 1
        %s514 = smul.addr %s513, 12
        %s515 = scalar_lea.vmem %s6, %s514
        %p516 = pneg %p202
        %p517 = pneg %p199
        %p518 = scmp.lt.s32.totalorder %s33, 1
        %s519 = scalar_select %p518, %s33, 1
        %s520 = smul.addr %s519, 4
        %s521 = smul.addr %s520, 8
        %s522 = scalar_lea.vmem %s7, %s521
        %p523 = pneg %p228
        %p524 = pneg %p225
        %p525 = scmp.lt.s32.totalorder %s33, 1
        %s526 = scalar_select %p525, %s33, 1
        %s527 = smul.addr %s526, 4
        %s528 = smul.addr %s527, 8
        %s529 = scalar_lea.vmem %s8, %s528
        %p530 = pneg %p254
        %p531 = pneg %p251
        %p532 = scmp.lt.s32.totalorder %s33, 1
        %s533 = scalar_select %p532, %s33, 1
        %s534 = scalar_lea.vmem %s9, %s533
        %p535 = pneg %p280
        %p536 = pneg %p277
        %p537 = scmp.lt.s32.totalorder %s33, 1
        %s538 = scalar_select %p537, %s33, 1
        %s539 = smul.addr %s538, 8
        %s540 = smul.addr %s539, 8
        %s541 = scalar_lea.vmem %s10, %s540
        %p542 = pneg %p306
        %p543 = pneg %p303
        %p544 = scmp.lt.s32.totalorder %s33, 1
        %s545 = scalar_select %p544, %s33, 1
        %s546 = smul.addr %s545, 8
        %s547 = scalar_lea.vmem %s11, %s546
        %p548 = pneg %p332
        %p549 = pneg %p329
        %p550 = pneg %p358
        %p551 = pneg %p355
        %s552 = sand.u32 %s345, 1
        %s553 = scalar_lea.sflag [#allocation4], %s552
        %s554 = sand.u32 %s345, 1
        %s555 = smul.addr %s554, 8
        %s556 = scalar_lea.vmem [#allocation3], %s555
        %p557 = pneg %p386
        %p558 = pneg %p383
        %p559 = scmp.lt.s32.totalorder %s33, 1
        %s560 = scalar_select %p559, %s33, 1
        %p561 = scmp.lt.s32.totalorder %s32, 1
        %s562 = scalar_select %p561, %s32, 1
        %s563 = smul.addr %s560, 2
        %s564 = sadd.s32 %s562, %s563
        %s565 = smul.addr %s564, 8
        %s566 = scalar_lea.vmem %s13, %s565
        %p567 = scmp.lt.s32.totalorder %s32, 1
        %s568 = scalar_select %p567, %s32, 1
        %s569 = smul.addr %s568, 2
        %s570 = smul.addr %s569, 8
        %s571 = scalar_lea.vmem %s0, %s570
        %p572 = scmp.lt.s32.totalorder %s32, 1
        %s573 = scalar_select %p572, %s32, 1
        %s574 = scalar_lea.vmem %s4, %s573
        %p575 = scmp.lt.s32.totalorder %s33, 1
        %s576 = scalar_select %p575, %s33, 1
        %s577 = smul.addr %s576, 48
        %s578 = smul.addr %s577, 8
        %s579 = scalar_lea.vmem %s5, %s578
        %p580 = scmp.lt.s32.totalorder %s33, 1
        %s581 = scalar_select %p580, %s33, 1
        %s582 = smul.addr %s581, 12
        %s583 = scalar_lea.vmem %s6, %s582
        %p584 = scmp.lt.s32.totalorder %s33, 1
        %s585 = scalar_select %p584, %s33, 1
        %s586 = smul.addr %s585, 4
        %s587 = smul.addr %s586, 8
        %s588 = scalar_lea.vmem %s7, %s587
        %p589 = scmp.lt.s32.totalorder %s33, 1
        %s590 = scalar_select %p589, %s33, 1
        %s591 = smul.addr %s590, 4
        %s592 = smul.addr %s591, 8
        %s593 = scalar_lea.vmem %s8, %s592
        %p594 = scmp.lt.s32.totalorder %s33, 1
        %s595 = scalar_select %p594, %s33, 1
        %s596 = scalar_lea.vmem %s9, %s595
        %p597 = scmp.lt.s32.totalorder %s33, 1
        %s598 = scalar_select %p597, %s33, 1
        %s599 = smul.addr %s598, 8
        %s600 = smul.addr %s599, 8
        %s601 = scalar_lea.vmem %s10, %s600
        %p602 = scmp.lt.s32.totalorder %s33, 1
        %s603 = scalar_select %p602, %s33, 1
        %s604 = smul.addr %s603, 8
        %s605 = scalar_lea.vmem %s11, %s604
        %p606 = scmp.lt.s32.totalorder %s33, 1
        %s607 = scalar_select %p606, %s33, 1
        %p608 = scmp.lt.s32.totalorder %s32, 1
        %s609 = scalar_select %p608, %s32, 1
        %s610 = smul.addr %s607, 2
        %s611 = sadd.s32 %s609, %s610
        %s612 = smul.addr %s611, 8
        %s613 = scalar_lea.vmem %s13, %s612
        %p614 = scmp.eq.s32.totalorder %s33, 0
        // Predicated region
        $region69: #{_lambda_.1} parent=67 // pred_check
          %p615 = pneg %p614
        $region70: #{_lambda_.1} parent=67 // pred_check_branch
          %617 = sbr.rel (%p615) target = $region72
        $region71: #{_lambda_.1} parent=67 // pred_region
          %v618 = vld [vmem:[%s571] sm:$0xff]
          %v619 = vld [vmem:[%s571 + $0x8] sm:$0xff]
          %v620 = vld [vmem:[%s1] sm:$0xff]
          %v621 = vld [vmem:[%s1 + $0x8] sm:$0xff]
          %v622 = vld [vmem:[%s1 + $0x10] sm:$0xff]
          %v623 = vld [vmem:[%s1 + $0x18] sm:$0xff]
          %v624 = vld [vmem:[%s1 + $0x20] sm:$0xff]
          %v625 = vld [vmem:[%s1 + $0x28] sm:$0xff]
          %v626 = vld [vmem:[%s1 + $0x30] sm:$0xff]
          %v627 = vld [vmem:[%s1 + $0x38] sm:$0xff]
          %v628 = vld [vmem:[%s1 + $0x40] sm:$0xff]
          %v629 = vld [vmem:[%s1 + $0x48] sm:$0xff]
          %v630 = vld [vmem:[%s1 + $0x50] sm:$0xff]
          %v631 = vld [vmem:[%s1 + $0x58] sm:$0xff]
          %v632 = vld [vmem:[%s1 + $0x60] sm:$0xff]
          %v633 = vld [vmem:[%s1 + $0x68] sm:$0xff]
          %v634 = vld [vmem:[%s1 + $0x70] sm:$0xff]
          %v635 = vld [vmem:[%s1 + $0x78] sm:$0xff]
          %v636 = vld [vmem:[%s1 + $0x80] sm:$0xff]
          %v637 = vld [vmem:[%s1 + $0x88] sm:$0xff]
          %v638 = vld [vmem:[%s1 + $0x90] sm:$0xff]
          %v639 = vld [vmem:[%s1 + $0x98] sm:$0xff]
          %v640 = vld [vmem:[%s1 + $0xa0] sm:$0xff]
          %v641 = vld [vmem:[%s1 + $0xa8] sm:$0xff]
          %v642 = vld [vmem:[%s1 + $0xb0] sm:$0xff]
          %v643 = vld [vmem:[%s1 + $0xb8] sm:$0xff]
          %v644 = vld [vmem:[%s1 + $0xc0] sm:$0xff]
          %v645 = vld [vmem:[%s1 + $0xc8] sm:$0xff]
          %v646 = vld [vmem:[%s1 + $0xd0] sm:$0xff]
          %v647 = vld [vmem:[%s1 + $0xd8] sm:$0xff]
          %v648 = vld [vmem:[%s1 + $0xe0] sm:$0xff]
          %v649 = vld [vmem:[%s1 + $0xe8] sm:$0xff]
          %v650 = vld [vmem:[%s1 + $0xf0] sm:$0xff]
          %v651 = vld [vmem:[%s1 + $0xf8] sm:$0xff]
          %v652 = vld [vmem:[%s2] sm:$0xff]
          %653 = vmatprep.subr.mxu0 0.0
          %654 = vmatpush1.msra.mxu0 %v620
          %655 = vmatprep.subr.mxu0 0.0
          %656 = vmatpush1.msra.mxu0 %v621
          %657 = vmatprep.subr.mxu0 0.0
          %658 = vmatpush1.msra.mxu0 %v622
          %659 = vmatprep.subr.mxu0 0.0
          %660 = vmatpush1.msra.mxu0 %v623
          %661 = vmatprep.subr.mxu0 0.0
          %662 = vmatpush1.msra.mxu0 %v624
          %663 = vmatprep.subr.mxu0 0.0
          %664 = vmatpush1.msra.mxu0 %v625
          %665 = vmatprep.subr.mxu0 0.0
          %666 = vmatpush1.msra.mxu0 %v626
          %667 = vmatprep.subr.mxu0 0.0
          %668 = vmatpush1.msra.mxu0 %v627
          %669 = vmatprep.subr.mxu0 0.0
          %670 = vmatpush1.msra.mxu0 %v628
          %671 = vmatprep.subr.mxu0 0.0
          %672 = vmatpush1.msra.mxu0 %v629
          %673 = vmatprep.subr.mxu0 0.0
          %674 = vmatpush1.msra.mxu0 %v630
          %675 = vmatprep.subr.mxu0 0.0
          %676 = vmatpush1.msra.mxu0 %v631
          %677 = vmatprep.subr.mxu0 0.0
          %678 = vmatpush1.msra.mxu0 %v632
          %679 = vmatprep.subr.mxu0 0.0
          %680 = vmatpush1.msra.mxu0 %v633
          %681 = vmatprep.subr.mxu0 0.0
          %682 = vmatpush1.msra.mxu0 %v634
          %683 = vmatprep.subr.mxu0 0.0
          %684 = vmatpush1.msra.mxu0 %v635
          %685 = vmatprep.subr.mxu0 0.0
          %686 = vmatpush1.msra.mxu0 %v636
          %687 = vmatprep.subr.mxu0 0.0
          %688 = vmatpush1.msra.mxu0 %v637
          %689 = vmatprep.subr.mxu0 0.0
          %690 = vmatpush1.msra.mxu0 %v638
          %691 = vmatprep.subr.mxu0 0.0
          %692 = vmatpush1.msra.mxu0 %v639
          %693 = vmatprep.subr.mxu0 0.0
          %694 = vmatpush1.msra.mxu0 %v640
          %695 = vmatprep.subr.mxu0 0.0
          %696 = vmatpush1.msra.mxu0 %v641
          %697 = vmatprep.subr.mxu0 0.0
          %698 = vmatpush1.msra.mxu0 %v642
          %699 = vmatprep.subr.mxu0 0.0
          %700 = vmatpush1.msra.mxu0 %v643
          %701 = vmatprep.subr.mxu0 0.0
          %702 = vmatpush1.msra.mxu0 %v644
          %703 = vmatprep.subr.mxu0 0.0
          %704 = vmatpush1.msra.mxu0 %v645
          %705 = vmatprep.subr.mxu0 0.0
          %706 = vmatpush1.msra.mxu0 %v646
          %707 = vmatprep.subr.mxu0 0.0
          %708 = vmatpush1.msra.mxu0 %v647
          %709 = vmatprep.subr.mxu0 0.0
          %710 = vmatpush1.msra.mxu0 %v648
          %711 = vmatprep.subr.mxu0 0.0
          %712 = vmatpush1.msra.mxu0 %v649
          %713 = vmatprep.subr.mxu0 0.0
          %714 = vmatpush1.msra.mxu0 %v650
          %715 = vmatprep.subr.mxu0 0.0
          %716 = vmatpush1.msra.mxu0 %v651
          %717 = vmatprep.mubr.f32.mxu0 %v619
          %718 = vmatmul.mubr.f32.gmra.mrb[0].mxu0 %v618
          %v719 = vpop.f32.mrb[0].mxu0
          %v720 = vadd.f32 %v652, %v719
          %v721 = vpop.f32.mrb[0].mxu0
          %722 = vdwg.mxu0
          %v723 = vld [vmem:[%s3] sm:$0x3]
          %vm724 = vcmask 261120
          %v725 = vsel %vm724, %v720, 0.0
          %726 = vadd.xlane.f32.xlu0 %v725
          %v727 = vpop.xlane.xlu0 %726
          %v728 = vrcp.pop 32.0
          %v729 = vmul.f32 %v727, %v728
          %v730 = vsub.f32 %v720, %v729
          %v731 = vmul.f32 %v730, %v730
          %v732 = vsel %vm724, %v731, 0.0
          %733 = vadd.xlane.f32.xlu0 %v732
          %v734 = vpop.xlane.xlu0 %733
          %v735 = vmul.f32 %v734, %v728
          %v736 = vadd.f32 %v735, 1e-12
          %v737 = vrsqrt.pop %v736
          %v738 = vmul.f32 %v730, %v737
          %v739 = vlaneseq
          %v740 = vshrl.u32 %v739, 7
          %v741 = vsub.s32 0, %v740
          %v742 = vrot.slane %v723, %v741
          %v743 = vmul.f32 %v738, %v742
          %v744 = vlaneseq
          %v745 = vshrl.u32 %v744, 7
          %v746 = vsub.s32 1, %v745
          %v747 = vrot.slane %v723, %v746
          %v748 = vadd.f32 %v743, %v747
          %749 = vst.msk [vmem:[#allocation2] sm:$0xff] %vm724, %v748
          %750 = vst.msk [vmem:[%s556] sm:$0xff] %vm724, %v748
        $region72: #{_lambda_.1} parent=67 // pred_fallthru
          _
        %v751 = vld [vmem:[#allocation2] sm:$0xff]
        %v752 = vld [vmem:[%s579] sm:$0xff]
        %v753 = vld [vmem:[%s579 + $0x8] sm:$0xff]
        %v754 = vld [vmem:[%s579 + $0x10] sm:$0xff]
        %v755 = vld [vmem:[%s579 + $0x18] sm:$0xff]
        %v756 = vld [vmem:[%s579 + $0x20] sm:$0xff]
        %v757 = vld [vmem:[%s579 + $0x28] sm:$0xff]
        %v758 = vld [vmem:[%s579 + $0x30] sm:$0xff]
        %v759 = vld [vmem:[%s579 + $0x38] sm:$0xff]
        %v760 = vld [vmem:[%s579 + $0x40] sm:$0xff]
        %v761 = vld [vmem:[%s579 + $0x48] sm:$0xff]
        %v762 = vld [vmem:[%s579 + $0x50] sm:$0xff]
        %v763 = vld [vmem:[%s579 + $0x58] sm:$0xff]
        %v764 = vld [vmem:[%s579 + $0x60] sm:$0xff]
        %v765 = vld [vmem:[%s579 + $0x68] sm:$0xff]
        %v766 = vld [vmem:[%s579 + $0x70] sm:$0xff]
        %v767 = vld [vmem:[%s579 + $0x78] sm:$0xff]
        %v768 = vld [vmem:[%s579 + $0x80] sm:$0xff]
        %v769 = vld [vmem:[%s579 + $0x88] sm:$0xff]
        %v770 = vld [vmem:[%s579 + $0x90] sm:$0xff]
        %v771 = vld [vmem:[%s579 + $0x98] sm:$0xff]
        %v772 = vld [vmem:[%s579 + $0xa0] sm:$0xff]
        %v773 = vld [vmem:[%s579 + $0xa8] sm:$0xff]
        %v774 = vld [vmem:[%s579 + $0xb0] sm:$0xff]
        %v775 = vld [vmem:[%s579 + $0xb8] sm:$0xff]
        %v776 = vld [vmem:[%s579 + $0xc0] sm:$0xff]
        %v777 = vld [vmem:[%s579 + $0xc8] sm:$0xff]
        %v778 = vld [vmem:[%s579 + $0xd0] sm:$0xff]
        %v779 = vld [vmem:[%s579 + $0xd8] sm:$0xff]
        %v780 = vld [vmem:[%s579 + $0xe0] sm:$0xff]
        %v781 = vld [vmem:[%s579 + $0xe8] sm:$0xff]
        %v782 = vld [vmem:[%s579 + $0xf0] sm:$0xff]
        %v783 = vld [vmem:[%s579 + $0xf8] sm:$0xff]
        %v784 = vld [vmem:[%s579 + $0x100] sm:$0xff]
        %v785 = vld [vmem:[%s579 + $0x108] sm:$0xff]
        %v786 = vld [vmem:[%s579 + $0x110] sm:$0xff]
        %v787 = vld [vmem:[%s579 + $0x118] sm:$0xff]
        %v788 = vld [vmem:[%s579 + $0x120] sm:$0xff]
        %v789 = vld [vmem:[%s579 + $0x128] sm:$0xff]
        %v790 = vld [vmem:[%s579 + $0x130] sm:$0xff]
        %v791 = vld [vmem:[%s579 + $0x138] sm:$0xff]
        %v792 = vld [vmem:[%s579 + $0x140] sm:$0xff]
        %v793 = vld [vmem:[%s579 + $0x148] sm:$0xff]
        %v794 = vld [vmem:[%s579 + $0x150] sm:$0xff]
        %v795 = vld [vmem:[%s579 + $0x158] sm:$0xff]
        %v796 = vld [vmem:[%s579 + $0x160] sm:$0xff]
        %v797 = vld [vmem:[%s579 + $0x168] sm:$0xff]
        %v798 = vld [vmem:[%s579 + $0x170] sm:$0xff]
        %v799 = vld [vmem:[%s579 + $0x178] sm:$0xff]
        %v800 = vld [vmem:[%s583] sm:$0x1]
        %v801 = vld [vmem:[%s583 + $0x1] sm:$0x1]
        %v802 = vld [vmem:[%s583 + $0x2] sm:$0x1]
        %v803 = vld [vmem:[%s583 + $0x3] sm:$0x1]
        %v804 = vld [vmem:[%s583 + $0x4] sm:$0x1]
        %v805 = vld [vmem:[%s583 + $0x5] sm:$0x1]
        %v806 = vld [vmem:[%s583 + $0x6] sm:$0x1]
        %v807 = vld [vmem:[%s583 + $0x7] sm:$0x1]
        %v808 = vld [vmem:[%s583 + $0x8] sm:$0x1]
        %v809 = vld [vmem:[%s583 + $0x9] sm:$0x1]
        %v810 = vld [vmem:[%s583 + $0xa] sm:$0x1]
        %v811 = vld [vmem:[%s583 + $0xb] sm:$0x1]
        %v824 = vlaneseq
        %v825 = vshrl.u32 %v824, 7
        %v826 = vsub.s32 0, %v825
        %v827 = vrot.slane %v800, %v826
        %v828 = vlaneseq
        %v829 = vshrl.u32 %v828, 7
        %v830 = vsub.s32 0, %v829
        %v831 = vrot.slane %v801, %v830
        %v832 = vlaneseq
        %v833 = vshrl.u32 %v832, 7
        %v834 = vsub.s32 0, %v833
        %v835 = vrot.slane %v802, %v834
        %v836 = vlaneseq
        %v837 = vshrl.u32 %v836, 7
        %v838 = vsub.s32 0, %v837
        %v839 = vrot.slane %v803, %v838
        %v840 = vlaneseq
        %v841 = vshrl.u32 %v840, 7
        %v842 = vsub.s32 0, %v841
        %v843 = vrot.slane %v804, %v842
        %v844 = vlaneseq
        %v845 = vshrl.u32 %v844, 7
        %v846 = vsub.s32 0, %v845
        %v847 = vrot.slane %v805, %v846
        %v848 = vlaneseq
        %v849 = vshrl.u32 %v848, 7
        %v850 = vsub.s32 0, %v849
        %v851 = vrot.slane %v806, %v850
        %v852 = vlaneseq
        %v853 = vshrl.u32 %v852, 7
        %v854 = vsub.s32 0, %v853
        %v855 = vrot.slane %v807, %v854
        %v856 = vlaneseq
        %v857 = vshrl.u32 %v856, 7
        %v858 = vsub.s32 0, %v857
        %v859 = vrot.slane %v808, %v858
        %v860 = vlaneseq
        %v861 = vshrl.u32 %v860, 7
        %v862 = vsub.s32 0, %v861
        %v863 = vrot.slane %v809, %v862
        %v864 = vlaneseq
        %v865 = vshrl.u32 %v864, 7
        %v866 = vsub.s32 0, %v865
        %v867 = vrot.slane %v810, %v866
        %v868 = vlaneseq
        %v869 = vshrl.u32 %v868, 7
        %v870 = vsub.s32 0, %v869
        %v871 = vrot.slane %v811, %v870
        %vm884 = vcmask 261120
        %v886 = vsel %vm884, %v751, 0
        %888 = vmatprep.subr.mxu0 0.0
        %889 = vmatpush1.msra.mxu0 %v752
        %890 = vmatprep.subr.mxu0 0.0
        %891 = vmatpush1.msra.mxu0 %v753
        %892 = vmatprep.subr.mxu0 0.0
        %893 = vmatpush1.msra.mxu0 %v754
        %894 = vmatprep.subr.mxu0 0.0
        %895 = vmatpush1.msra.mxu0 %v755
        %896 = vmatprep.subr.mxu0 0.0
        %897 = vmatpush1.msra.mxu0 0.0
        %898 = vmatprep.subr.mxu0 0.0
        %899 = vmatpush1.msra.mxu0 0.0
        %900 = vmatprep.subr.mxu0 0.0
        %901 = vmatpush1.msra.mxu0 0.0
        %902 = vmatprep.subr.mxu0 0.0
        %903 = vmatpush1.msra.mxu0 0.0
        %904 = vmatprep.subr.mxu0 0.0
        %905 = vmatpush1.msra.mxu0 0.0
        %906 = vmatprep.subr.mxu0 0.0
        %907 = vmatpush1.msra.mxu0 0.0
        %908 = vmatprep.subr.mxu0 0.0
        %909 = vmatpush1.msra.mxu0 0.0
        %910 = vmatprep.subr.mxu0 0.0
        %911 = vmatpush1.msra.mxu0 0.0
        %912 = vmatprep.subr.mxu0 0.0
        %913 = vmatpush1.msra.mxu0 0.0
        %914 = vmatprep.subr.mxu0 0.0
        %915 = vmatpush1.msra.mxu0 0.0
        %916 = vmatprep.subr.mxu0 0.0
        %917 = vmatpush1.msra.mxu0 0.0
        %918 = vmatprep.subr.mxu0 0.0
        %919 = vmatpush1.msra.mxu0 0.0
        %920 = vmatprep.subr.mxu0 0.0
        %921 = vmatpush1.msra.mxu0 0.0
        %922 = vmatprep.subr.mxu0 0.0
        %923 = vmatpush1.msra.mxu0 0.0
        %924 = vmatprep.subr.mxu0 0.0
        %925 = vmatpush1.msra.mxu0 0.0
        %926 = vmatprep.subr.mxu0 0.0
        %927 = vmatpush1.msra.mxu0 0.0
        %928 = vmatprep.subr.mxu0 0.0
        %929 = vmatpush1.msra.mxu0 0.0
        %930 = vmatprep.subr.mxu0 0.0
        %931 = vmatpush1.msra.mxu0 0.0
        %932 = vmatprep.subr.mxu0 0.0
        %933 = vmatpush1.msra.mxu0 0.0
        %934 = vmatprep.subr.mxu0 0.0
        %935 = vmatpush1.msra.mxu0 0.0
        %936 = vmatprep.subr.mxu0 0.0
        %937 = vmatpush1.msra.mxu0 0.0
        %938 = vmatprep.subr.mxu0 0.0
        %939 = vmatpush1.msra.mxu0 0.0
        %940 = vmatprep.subr.mxu0 0.0
        %941 = vmatpush1.msra.mxu0 0.0
        %942 = vmatprep.subr.mxu0 0.0
        %943 = vmatpush1.msra.mxu0 0.0
        %944 = vmatprep.subr.mxu0 0.0
        %945 = vmatpush1.msra.mxu0 0.0
        %946 = vmatprep.subr.mxu0 0.0
        %947 = vmatpush1.msra.mxu0 0.0
        %948 = vmatprep.subr.mxu0 0.0
        %949 = vmatpush1.msra.mxu0 0.0
        %950 = vmatprep.subr.mxu0 0.0
        %951 = vmatpush1.msra.mxu0 0.0
        %952 = vmatprep.mubr.f32.mxu0 0.0
        %953 = vmatmul.mubr.f32.gmra.mrb[0].mxu0 %v886
        %v954 = vpop.f32.mrb[0].mxu0
        %v955 = vadd.f32 %v827, %v954
        %v956 = vpop.f32.mrb[0].mxu0
        %957 = vdwg.mxu0
        %958 = vmatprep.subr.mxu0 0.0
        %959 = vmatpush1.msra.mxu0 %v756
        %960 = vmatprep.subr.mxu0 0.0
        %961 = vmatpush1.msra.mxu0 %v757
        %962 = vmatprep.subr.mxu0 0.0
        %963 = vmatpush1.msra.mxu0 %v758
        %964 = vmatprep.subr.mxu0 0.0
        %965 = vmatpush1.msra.mxu0 %v759
        %966 = vmatprep.subr.mxu0 0.0
        %967 = vmatpush1.msra.mxu0 0.0
        %968 = vmatprep.subr.mxu0 0.0
        %969 = vmatpush1.msra.mxu0 0.0
        %970 = vmatprep.subr.mxu0 0.0
        %971 = vmatpush1.msra.mxu0 0.0
        %972 = vmatprep.subr.mxu0 0.0
        %973 = vmatpush1.msra.mxu0 0.0
        %974 = vmatprep.subr.mxu0 0.0
        %975 = vmatpush1.msra.mxu0 0.0
        %976 = vmatprep.subr.mxu0 0.0
        %977 = vmatpush1.msra.mxu0 0.0
        %978 = vmatprep.subr.mxu0 0.0
        %979 = vmatpush1.msra.mxu0 0.0
        %980 = vmatprep.subr.mxu0 0.0
        %981 = vmatpush1.msra.mxu0 0.0
        %982 = vmatprep.subr.mxu0 0.0
        %983 = vmatpush1.msra.mxu0 0.0
        %984 = vmatprep.subr.mxu0 0.0
        %985 = vmatpush1.msra.mxu0 0.0
        %986 = vmatprep.subr.mxu0 0.0
        %987 = vmatpush1.msra.mxu0 0.0
        %988 = vmatprep.subr.mxu0 0.0
        %989 = vmatpush1.msra.mxu0 0.0
        %990 = vmatprep.subr.mxu0 0.0
        %991 = vmatpush1.msra.mxu0 0.0
        %992 = vmatprep.subr.mxu0 0.0
        %993 = vmatpush1.msra.mxu0 0.0
        %994 = vmatprep.subr.mxu0 0.0
        %995 = vmatpush1.msra.mxu0 0.0
        %996 = vmatprep.subr.mxu0 0.0
        %997 = vmatpush1.msra.mxu0 0.0
        %998 = vmatprep.subr.mxu0 0.0
        %999 = vmatpush1.msra.mxu0 0.0
        %1000 = vmatprep.subr.mxu0 0.0
        %1001 = vmatpush1.msra.mxu0 0.0
        %1002 = vmatprep.subr.mxu0 0.0
        %1003 = vmatpush1.msra.mxu0 0.0
        %1004 = vmatprep.subr.mxu0 0.0
        %1005 = vmatpush1.msra.mxu0 0.0
        %1006 = vmatprep.subr.mxu0 0.0
        %1007 = vmatpush1.msra.mxu0 0.0
        %1008 = vmatprep.subr.mxu0 0.0
        %1009 = vmatpush1.msra.mxu0 0.0
        %1010 = vmatprep.subr.mxu0 0.0
        %1011 = vmatpush1.msra.mxu0 0.0
        %1012 = vmatprep.subr.mxu0 0.0
        %1013 = vmatpush1.msra.mxu0 0.0
        %1014 = vmatprep.subr.mxu0 0.0
        %1015 = vmatpush1.msra.mxu0 0.0
        %1016 = vmatprep.subr.mxu0 0.0
        %1017 = vmatpush1.msra.mxu0 0.0
        %1018 = vmatprep.subr.mxu0 0.0
        %1019 = vmatpush1.msra.mxu0 0.0
        %1020 = vmatprep.subr.mxu0 0.0
        %1021 = vmatpush1.msra.mxu0 0.0
        %1022 = vmatprep.mubr.f32.mxu0 0.0
        %1023 = vmatmul.mubr.f32.gmra.mrb[0].mxu0 %v886
        %v1024 = vpop.f32.mrb[0].mxu0
        %v1025 = vadd.f32 %v831, %v1024
        %v1026 = vpop.f32.mrb[0].mxu0
        %1027 = vdwg.mxu0
        %1028 = vmatprep.subr.mxu0 0.0
        %1029 = vmatpush1.msra.mxu0 %v760
        %1030 = vmatprep.subr.mxu0 0.0
        %1031 = vmatpush1.msra.mxu0 %v761
        %1032 = vmatprep.subr.mxu0 0.0
        %1033 = vmatpush1.msra.mxu0 %v762
        %1034 = vmatprep.subr.mxu0 0.0
        %1035 = vmatpush1.msra.mxu0 %v763
        %1036 = vmatprep.subr.mxu0 0.0
        %1037 = vmatpush1.msra.mxu0 0.0
        %1038 = vmatprep.subr.mxu0 0.0
        %1039 = vmatpush1.msra.mxu0 0.0
        %1040 = vmatprep.subr.mxu0 0.0
        %1041 = vmatpush1.msra.mxu0 0.0
        %1042 = vmatprep.subr.mxu0 0.0
        %1043 = vmatpush1.msra.mxu0 0.0
        %1044 = vmatprep.subr.mxu0 0.0
        %1045 = vmatpush1.msra.mxu0 0.0
        %1046 = vmatprep.subr.mxu0 0.0
        %1047 = vmatpush1.msra.mxu0 0.0
        %1048 = vmatprep.subr.mxu0 0.0
        %1049 = vmatpush1.msra.mxu0 0.0
        %1050 = vmatprep.subr.mxu0 0.0
        %1051 = vmatpush1.msra.mxu0 0.0
        %1052 = vmatprep.subr.mxu0 0.0
        %1053 = vmatpush1.msra.mxu0 0.0
        %1054 = vmatprep.subr.mxu0 0.0
        %1055 = vmatpush1.msra.mxu0 0.0
        %1056 = vmatprep.subr.mxu0 0.0
        %1057 = vmatpush1.msra.mxu0 0.0
        %1058 = vmatprep.subr.mxu0 0.0
        %1059 = vmatpush1.msra.mxu0 0.0
        %1060 = vmatprep.subr.mxu0 0.0
        %1061 = vmatpush1.msra.mxu0 0.0
        %1062 = vmatprep.subr.mxu0 0.0
        %1063 = vmatpush1.msra.mxu0 0.0
        %1064 = vmatprep.subr.mxu0 0.0
        %1065 = vmatpush1.msra.mxu0 0.0
        %1066 = vmatprep.subr.mxu0 0.0
        %1067 = vmatpush1.msra.mxu0 0.0
        %1068 = vmatprep.subr.mxu0 0.0
        %1069 = vmatpush1.msra.mxu0 0.0
        %1070 = vmatprep.subr.mxu0 0.0
        %1071 = vmatpush1.msra.mxu0 0.0
        %1072 = vmatprep.subr.mxu0 0.0
        %1073 = vmatpush1.msra.mxu0 0.0
        %1074 = vmatprep.subr.mxu0 0.0
        %1075 = vmatpush1.msra.mxu0 0.0
        %1076 = vmatprep.subr.mxu0 0.0
        %1077 = vmatpush1.msra.mxu0 0.0
        %1078 = vmatprep.subr.mxu0 0.0
        %1079 = vmatpush1.msra.mxu0 0.0
        %1080 = vmatprep.subr.mxu0 0.0
        %1081 = vmatpush1.msra.mxu0 0.0
        %1082 = vmatprep.subr.mxu0 0.0
        %1083 = vmatpush1.msra.mxu0 0.0
        %1084 = vmatprep.subr.mxu0 0.0
        %1085 = vmatpush1.msra.mxu0 0.0
        %1086 = vmatprep.subr.mxu0 0.0
        %1087 = vmatpush1.msra.mxu0 0.0
        %1088 = vmatprep.subr.mxu0 0.0
        %1089 = vmatpush1.msra.mxu0 0.0
        %1090 = vmatprep.subr.mxu0 0.0
        %1091 = vmatpush1.msra.mxu0 0.0
        %1092 = vmatprep.mubr.f32.mxu0 0.0
        %1093 = vmatmul.mubr.f32.gmra.mrb[0].mxu0 %v886
        %v1094 = vpop.f32.mrb[0].mxu0
        %v1095 = vadd.f32 %v835, %v1094
        %v1096 = vpop.f32.mrb[0].mxu0
        %1097 = vdwg.mxu0
        %1098 = vmatprep.subr.mxu0 0.0
        %1099 = vmatpush1.msra.mxu0 %v764
        %1100 = vmatprep.subr.mxu0 0.0
        %1101 = vmatpush1.msra.mxu0 %v765
        %1102 = vmatprep.subr.mxu0 0.0
        %1103 = vmatpush1.msra.mxu0 %v766
        %1104 = vmatprep.subr.mxu0 0.0
        %1105 = vmatpush1.msra.mxu0 %v767
        %1106 = vmatprep.subr.mxu0 0.0
        %1107 = vmatpush1.msra.mxu0 0.0
        %1108 = vmatprep.subr.mxu0 0.0
        %1109 = vmatpush1.msra.mxu0 0.0
        %1110 = vmatprep.subr.mxu0 0.0
        %1111 = vmatpush1.msra.mxu0 0.0
        %1112 = vmatprep.subr.mxu0 0.0
        %1113 = vmatpush1.msra.mxu0 0.0
        %1114 = vmatprep.subr.mxu0 0.0
        %1115 = vmatpush1.msra.mxu0 0.0
        %1116 = vmatprep.subr.mxu0 0.0
        %1117 = vmatpush1.msra.mxu0 0.0
        %1118 = vmatprep.subr.mxu0 0.0
        %1119 = vmatpush1.msra.mxu0 0.0
        %1120 = vmatprep.subr.mxu0 0.0
        %1121 = vmatpush1.msra.mxu0 0.0
        %1122 = vmatprep.subr.mxu0 0.0
        %1123 = vmatpush1.msra.mxu0 0.0
        %1124 = vmatprep.subr.mxu0 0.0
        %1125 = vmatpush1.msra.mxu0 0.0
        %1126 = vmatprep.subr.mxu0 0.0
        %1127 = vmatpush1.msra.mxu0 0.0
        %1128 = vmatprep.subr.mxu0 0.0
        %1129 = vmatpush1.msra.mxu0 0.0
        %1130 = vmatprep.subr.mxu0 0.0
        %1131 = vmatpush1.msra.mxu0 0.0
        %1132 = vmatprep.subr.mxu0 0.0
        %1133 = vmatpush1.msra.mxu0 0.0
        %1134 = vmatprep.subr.mxu0 0.0
        %1135 = vmatpush1.msra.mxu0 0.0
        %1136 = vmatprep.subr.mxu0 0.0
        %1137 = vmatpush1.msra.mxu0 0.0
        %1138 = vmatprep.subr.mxu0 0.0
        %1139 = vmatpush1.msra.mxu0 0.0
        %1140 = vmatprep.subr.mxu0 0.0
        %1141 = vmatpush1.msra.mxu0 0.0
        %1142 = vmatprep.subr.mxu0 0.0
        %1143 = vmatpush1.msra.mxu0 0.0
        %1144 = vmatprep.subr.mxu0 0.0
        %1145 = vmatpush1.msra.mxu0 0.0
        %1146 = vmatprep.subr.mxu0 0.0
        %1147 = vmatpush1.msra.mxu0 0.0
        %1148 = vmatprep.subr.mxu0 0.0
        %1149 = vmatpush1.msra.mxu0 0.0
        %1150 = vmatprep.subr.mxu0 0.0
        %1151 = vmatpush1.msra.mxu0 0.0
        %1152 = vmatprep.subr.mxu0 0.0
        %1153 = vmatpush1.msra.mxu0 0.0
        %1154 = vmatprep.subr.mxu0 0.0
        %1155 = vmatpush1.msra.mxu0 0.0
        %1156 = vmatprep.subr.mxu0 0.0
        %1157 = vmatpush1.msra.mxu0 0.0
        %1158 = vmatprep.subr.mxu0 0.0
        %1159 = vmatpush1.msra.mxu0 0.0
        %1160 = vmatprep.subr.mxu0 0.0
        %1161 = vmatpush1.msra.mxu0 0.0
        %1162 = vmatprep.mubr.f32.mxu0 0.0
        %1163 = vmatmul.mubr.f32.gmra.mrb[0].mxu0 %v886
        %v1164 = vpop.f32.mrb[0].mxu0
        %v1165 = vadd.f32 %v839, %v1164
        %v1166 = vpop.f32.mrb[0].mxu0
        %1167 = vdwg.mxu0
        %1168 = vmatprep.subr.mxu0 0.0
        %1169 = vmatpush1.msra.mxu0 %v768
        %1170 = vmatprep.subr.mxu0 0.0
        %1171 = vmatpush1.msra.mxu0 %v769
        %1172 = vmatprep.subr.mxu0 0.0
        %1173 = vmatpush1.msra.mxu0 %v770
        %1174 = vmatprep.subr.mxu0 0.0
        %1175 = vmatpush1.msra.mxu0 %v771
        %1176 = vmatprep.subr.mxu0 0.0
        %1177 = vmatpush1.msra.mxu0 0.0
        %1178 = vmatprep.subr.mxu0 0.0
        %1179 = vmatpush1.msra.mxu0 0.0
        %1180 = vmatprep.subr.mxu0 0.0
        %1181 = vmatpush1.msra.mxu0 0.0
        %1182 = vmatprep.subr.mxu0 0.0
        %1183 = vmatpush1.msra.mxu0 0.0
        %1184 = vmatprep.subr.mxu0 0.0
        %1185 = vmatpush1.msra.mxu0 0.0
        %1186 = vmatprep.subr.mxu0 0.0
        %1187 = vmatpush1.msra.mxu0 0.0
        %1188 = vmatprep.subr.mxu0 0.0
        %1189 = vmatpush1.msra.mxu0 0.0
        %1190 = vmatprep.subr.mxu0 0.0
        %1191 = vmatpush1.msra.mxu0 0.0
        %1192 = vmatprep.subr.mxu0 0.0
        %1193 = vmatpush1.msra.mxu0 0.0
        %1194 = vmatprep.subr.mxu0 0.0
        %1195 = vmatpush1.msra.mxu0 0.0
        %1196 = vmatprep.subr.mxu0 0.0
        %1197 = vmatpush1.msra.mxu0 0.0
        %1198 = vmatprep.subr.mxu0 0.0
        %1199 = vmatpush1.msra.mxu0 0.0
        %1200 = vmatprep.subr.mxu0 0.0
        %1201 = vmatpush1.msra.mxu0 0.0
        %1202 = vmatprep.subr.mxu0 0.0
        %1203 = vmatpush1.msra.mxu0 0.0
        %1204 = vmatprep.subr.mxu0 0.0
        %1205 = vmatpush1.msra.mxu0 0.0
        %1206 = vmatprep.subr.mxu0 0.0
        %1207 = vmatpush1.msra.mxu0 0.0
        %1208 = vmatprep.subr.mxu0 0.0
        %1209 = vmatpush1.msra.mxu0 0.0
        %1210 = vmatprep.subr.mxu0 0.0
        %1211 = vmatpush1.msra.mxu0 0.0
        %1212 = vmatprep.subr.mxu0 0.0
        %1213 = vmatpush1.msra.mxu0 0.0
        %1214 = vmatprep.subr.mxu0 0.0
        %1215 = vmatpush1.msra.mxu0 0.0
        %1216 = vmatprep.subr.mxu0 0.0
        %1217 = vmatpush1.msra.mxu0 0.0
        %1218 = vmatprep.subr.mxu0 0.0
        %1219 = vmatpush1.msra.mxu0 0.0
        %1220 = vmatprep.subr.mxu0 0.0
        %1221 = vmatpush1.msra.mxu0 0.0
        %1222 = vmatprep.subr.mxu0 0.0
        %1223 = vmatpush1.msra.mxu0 0.0
        %1224 = vmatprep.subr.mxu0 0.0
        %1225 = vmatpush1.msra.mxu0 0.0
        %1226 = vmatprep.subr.mxu0 0.0
        %1227 = vmatpush1.msra.mxu0 0.0
        %1228 = vmatprep.subr.mxu0 0.0
        %1229 = vmatpush1.msra.mxu0 0.0
        %1230 = vmatprep.subr.mxu0 0.0
        %1231 = vmatpush1.msra.mxu0 0.0
        %1232 = vmatprep.mubr.f32.mxu0 0.0
        %1233 = vmatmul.mubr.f32.gmra.mrb[0].mxu0 %v886
        %v1234 = vpop.f32.mrb[0].mxu0
        %v1235 = vadd.f32 %v843, %v1234
        %v1236 = vpop.f32.mrb[0].mxu0
        %1237 = vdwg.mxu0
        %1238 = vmatprep.subr.mxu0 0.0
        %1239 = vmatpush1.msra.mxu0 %v772
        %1240 = vmatprep.subr.mxu0 0.0
        %1241 = vmatpush1.msra.mxu0 %v773
        %1242 = vmatprep.subr.mxu0 0.0
        %1243 = vmatpush1.msra.mxu0 %v774
        %1244 = vmatprep.subr.mxu0 0.0
        %1245 = vmatpush1.msra.mxu0 %v775
        %1246 = vmatprep.subr.mxu0 0.0
        %1247 = vmatpush1.msra.mxu0 0.0
        %1248 = vmatprep.subr.mxu0 0.0
        %1249 = vmatpush1.msra.mxu0 0.0
        %1250 = vmatprep.subr.mxu0 0.0
        %1251 = vmatpush1.msra.mxu0 0.0
        %1252 = vmatprep.subr.mxu0 0.0
        %1253 = vmatpush1.msra.mxu0 0.0
        %1254 = vmatprep.subr.mxu0 0.0
        %1255 = vmatpush1.msra.mxu0 0.0
        %1256 = vmatprep.subr.mxu0 0.0
        %1257 = vmatpush1.msra.mxu0 0.0
        %1258 = vmatprep.subr.mxu0 0.0
        %1259 = vmatpush1.msra.mxu0 0.0
        %1260 = vmatprep.subr.mxu0 0.0
        %1261 = vmatpush1.msra.mxu0 0.0
        %1262 = vmatprep.subr.mxu0 0.0
        %1263 = vmatpush1.msra.mxu0 0.0
        %1264 = vmatprep.subr.mxu0 0.0
        %1265 = vmatpush1.msra.mxu0 0.0
        %1266 = vmatprep.subr.mxu0 0.0
        %1267 = vmatpush1.msra.mxu0 0.0
        %1268 = vmatprep.subr.mxu0 0.0
        %1269 = vmatpush1.msra.mxu0 0.0
        %1270 = vmatprep.subr.mxu0 0.0
        %1271 = vmatpush1.msra.mxu0 0.0
        %1272 = vmatprep.subr.mxu0 0.0
        %1273 = vmatpush1.msra.mxu0 0.0
        %1274 = vmatprep.subr.mxu0 0.0
        %1275 = vmatpush1.msra.mxu0 0.0
        %1276 = vmatprep.subr.mxu0 0.0
        %1277 = vmatpush1.msra.mxu0 0.0
        %1278 = vmatprep.subr.mxu0 0.0
        %1279 = vmatpush1.msra.mxu0 0.0
        %1280 = vmatprep.subr.mxu0 0.0
        %1281 = vmatpush1.msra.mxu0 0.0
        %1282 = vmatprep.subr.mxu0 0.0
        %1283 = vmatpush1.msra.mxu0 0.0
        %1284 = vmatprep.subr.mxu0 0.0
        %1285 = vmatpush1.msra.mxu0 0.0
        %1286 = vmatprep.subr.mxu0 0.0
        %1287 = vmatpush1.msra.mxu0 0.0
        %1288 = vmatprep.subr.mxu0 0.0
        %1289 = vmatpush1.msra.mxu0 0.0
        %1290 = vmatprep.subr.mxu0 0.0
        %1291 = vmatpush1.msra.mxu0 0.0
        %1292 = vmatprep.subr.mxu0 0.0
        %1293 = vmatpush1.msra.mxu0 0.0
        %1294 = vmatprep.subr.mxu0 0.0
        %1295 = vmatpush1.msra.mxu0 0.0
        %1296 = vmatprep.subr.mxu0 0.0
        %1297 = vmatpush1.msra.mxu0 0.0
        %1298 = vmatprep.subr.mxu0 0.0
        %1299 = vmatpush1.msra.mxu0 0.0
        %1300 = vmatprep.subr.mxu0 0.0
        %1301 = vmatpush1.msra.mxu0 0.0
        %1302 = vmatprep.mubr.f32.mxu0 0.0
        %1303 = vmatmul.mubr.f32.gmra.mrb[0].mxu0 %v886
        %v1304 = vpop.f32.mrb[0].mxu0
        %v1305 = vadd.f32 %v847, %v1304
        %v1306 = vpop.f32.mrb[0].mxu0
        %1307 = vdwg.mxu0
        %1308 = vmatprep.subr.mxu0 0.0
        %1309 = vmatpush1.msra.mxu0 %v776
        %1310 = vmatprep.subr.mxu0 0.0
        %1311 = vmatpush1.msra.mxu0 %v777
        %1312 = vmatprep.subr.mxu0 0.0
        %1313 = vmatpush1.msra.mxu0 %v778
        %1314 = vmatprep.subr.mxu0 0.0
        %1315 = vmatpush1.msra.mxu0 %v779
        %1316 = vmatprep.subr.mxu0 0.0
        %1317 = vmatpush1.msra.mxu0 0.0
        %1318 = vmatprep.subr.mxu0 0.0
        %1319 = vmatpush1.msra.mxu0 0.0
        %1320 = vmatprep.subr.mxu0 0.0
        %1321 = vmatpush1.msra.mxu0 0.0
        %1322 = vmatprep.subr.mxu0 0.0
        %1323 = vmatpush1.msra.mxu0 0.0
        %1324 = vmatprep.subr.mxu0 0.0
        %1325 = vmatpush1.msra.mxu0 0.0
        %1326 = vmatprep.subr.mxu0 0.0
        %1327 = vmatpush1.msra.mxu0 0.0
        %1328 = vmatprep.subr.mxu0 0.0
        %1329 = vmatpush1.msra.mxu0 0.0
        %1330 = vmatprep.subr.mxu0 0.0
        %1331 = vmatpush1.msra.mxu0 0.0
        %1332 = vmatprep.subr.mxu0 0.0
        %1333 = vmatpush1.msra.mxu0 0.0
        %1334 = vmatprep.subr.mxu0 0.0
        %1335 = vmatpush1.msra.mxu0 0.0
        %1336 = vmatprep.subr.mxu0 0.0
        %1337 = vmatpush1.msra.mxu0 0.0
        %1338 = vmatprep.subr.mxu0 0.0
        %1339 = vmatpush1.msra.mxu0 0.0
        %1340 = vmatprep.subr.mxu0 0.0
        %1341 = vmatpush1.msra.mxu0 0.0
        %1342 = vmatprep.subr.mxu0 0.0
        %1343 = vmatpush1.msra.mxu0 0.0
        %1344 = vmatprep.subr.mxu0 0.0
        %1345 = vmatpush1.msra.mxu0 0.0
        %1346 = vmatprep.subr.mxu0 0.0
        %1347 = vmatpush1.msra.mxu0 0.0
        %1348 = vmatprep.subr.mxu0 0.0
        %1349 = vmatpush1.msra.mxu0 0.0
        %1350 = vmatprep.subr.mxu0 0.0
        %1351 = vmatpush1.msra.mxu0 0.0
        %1352 = vmatprep.subr.mxu0 0.0
        %1353 = vmatpush1.msra.mxu0 0.0
        %1354 = vmatprep.subr.mxu0 0.0
        %1355 = vmatpush1.msra.mxu0 0.0
        %1356 = vmatprep.subr.mxu0 0.0
        %1357 = vmatpush1.msra.mxu0 0.0
        %1358 = vmatprep.subr.mxu0 0.0
        %1359 = vmatpush1.msra.mxu0 0.0
        %1360 = vmatprep.subr.mxu0 0.0
        %1361 = vmatpush1.msra.mxu0 0.0
        %1362 = vmatprep.subr.mxu0 0.0
        %1363 = vmatpush1.msra.mxu0 0.0
        %1364 = vmatprep.subr.mxu0 0.0
        %1365 = vmatpush1.msra.mxu0 0.0
        %1366 = vmatprep.subr.mxu0 0.0
        %1367 = vmatpush1.msra.mxu0 0.0
        %1368 = vmatprep.subr.mxu0 0.0
        %1369 = vmatpush1.msra.mxu0 0.0
        %1370 = vmatprep.subr.mxu0 0.0
        %1371 = vmatpush1.msra.mxu0 0.0
        %1372 = vmatprep.mubr.f32.mxu0 0.0
        %1373 = vmatmul.mubr.f32.gmra.mrb[0].mxu0 %v886
        %v1374 = vpop.f32.mrb[0].mxu0
        %v1375 = vadd.f32 %v851, %v1374
        %v1376 = vpop.f32.mrb[0].mxu0
        %1377 = vdwg.mxu0
        %1378 = vmatprep.subr.mxu0 0.0
        %1379 = vmatpush1.msra.mxu0 %v780
        %1380 = vmatprep.subr.mxu0 0.0
        %1381 = vmatpush1.msra.mxu0 %v781
        %1382 = vmatprep.subr.mxu0 0.0
        %1383 = vmatpush1.msra.mxu0 %v782
        %1384 = vmatprep.subr.mxu0 0.0
        %1385 = vmatpush1.msra.mxu0 %v783
        %1386 = vmatprep.subr.mxu0 0.0
        %1387 = vmatpush1.msra.mxu0 0.0
        %1388 = vmatprep.subr.mxu0 0.0
        %1389 = vmatpush1.msra.mxu0 0.0
        %1390 = vmatprep.subr.mxu0 0.0
        %1391 = vmatpush1.msra.mxu0 0.0
        %1392 = vmatprep.subr.mxu0 0.0
        %1393 = vmatpush1.msra.mxu0 0.0
        %1394 = vmatprep.subr.mxu0 0.0
        %1395 = vmatpush1.msra.mxu0 0.0
        %1396 = vmatprep.subr.mxu0 0.0
        %1397 = vmatpush1.msra.mxu0 0.0
        %1398 = vmatprep.subr.mxu0 0.0
        %1399 = vmatpush1.msra.mxu0 0.0
        %1400 = vmatprep.subr.mxu0 0.0
        %1401 = vmatpush1.msra.mxu0 0.0
        %1402 = vmatprep.subr.mxu0 0.0
        %1403 = vmatpush1.msra.mxu0 0.0
        %1404 = vmatprep.subr.mxu0 0.0
        %1405 = vmatpush1.msra.mxu0 0.0
        %1406 = vmatprep.subr.mxu0 0.0
        %1407 = vmatpush1.msra.mxu0 0.0
        %1408 = vmatprep.subr.mxu0 0.0
        %1409 = vmatpush1.msra.mxu0 0.0
        %1410 = vmatprep.subr.mxu0 0.0
        %1411 = vmatpush1.msra.mxu0 0.0
        %1412 = vmatprep.subr.mxu0 0.0
        %1413 = vmatpush1.msra.mxu0 0.0
        %1414 = vmatprep.subr.mxu0 0.0
        %1415 = vmatpush1.msra.mxu0 0.0
        %1416 = vmatprep.subr.mxu0 0.0
        %1417 = vmatpush1.msra.mxu0 0.0
        %1418 = vmatprep.subr.mxu0 0.0
        %1419 = vmatpush1.msra.mxu0 0.0
        %1420 = vmatprep.subr.mxu0 0.0
        %1421 = vmatpush1.msra.mxu0 0.0
        %1422 = vmatprep.subr.mxu0 0.0
        %1423 = vmatpush1.msra.mxu0 0.0
        %1424 = vmatprep.subr.mxu0 0.0
        %1425 = vmatpush1.msra.mxu0 0.0
        %1426 = vmatprep.subr.mxu0 0.0
        %1427 = vmatpush1.msra.mxu0 0.0
        %1428 = vmatprep.subr.mxu0 0.0
        %1429 = vmatpush1.msra.mxu0 0.0
        %1430 = vmatprep.subr.mxu0 0.0
        %1431 = vmatpush1.msra.mxu0 0.0
        %1432 = vmatprep.subr.mxu0 0.0
        %1433 = vmatpush1.msra.mxu0 0.0
        %1434 = vmatprep.subr.mxu0 0.0
        %1435 = vmatpush1.msra.mxu0 0.0
        %1436 = vmatprep.subr.mxu0 0.0
        %1437 = vmatpush1.msra.mxu0 0.0
        %1438 = vmatprep.subr.mxu0 0.0
        %1439 = vmatpush1.msra.mxu0 0.0
        %1440 = vmatprep.subr.mxu0 0.0
        %1441 = vmatpush1.msra.mxu0 0.0
        %1442 = vmatprep.mubr.f32.mxu0 0.0
        %1443 = vmatmul.mubr.f32.gmra.mrb[0].mxu0 %v886
        %v1444 = vpop.f32.mrb[0].mxu0
        %v1445 = vadd.f32 %v855, %v1444
        %v1446 = vpop.f32.mrb[0].mxu0
        %1447 = vdwg.mxu0
        %1448 = vmatprep.subr.mxu0 0.0
        %1449 = vmatpush1.msra.mxu0 %v784
        %1450 = vmatprep.subr.mxu0 0.0
        %1451 = vmatpush1.msra.mxu0 %v785
        %1452 = vmatprep.subr.mxu0 0.0
        %1453 = vmatpush1.msra.mxu0 %v786
        %1454 = vmatprep.subr.mxu0 0.0
        %1455 = vmatpush1.msra.mxu0 %v787
        %1456 = vmatprep.subr.mxu0 0.0
        %1457 = vmatpush1.msra.mxu0 0.0
        %1458 = vmatprep.subr.mxu0 0.0
        %1459 = vmatpush1.msra.mxu0 0.0
        %1460 = vmatprep.subr.mxu0 0.0
        %1461 = vmatpush1.msra.mxu0 0.0
        %1462 = vmatprep.subr.mxu0 0.0
        %1463 = vmatpush1.msra.mxu0 0.0
        %1464 = vmatprep.subr.mxu0 0.0
        %1465 = vmatpush1.msra.mxu0 0.0
        %1466 = vmatprep.subr.mxu0 0.0
        %1467 = vmatpush1.msra.mxu0 0.0
        %1468 = vmatprep.subr.mxu0 0.0
        %1469 = vmatpush1.msra.mxu0 0.0
        %1470 = vmatprep.subr.mxu0 0.0
        %1471 = vmatpush1.msra.mxu0 0.0
        %1472 = vmatprep.subr.mxu0 0.0
        %1473 = vmatpush1.msra.mxu0 0.0
        %1474 = vmatprep.subr.mxu0 0.0
        %1475 = vmatpush1.msra.mxu0 0.0
        %1476 = vmatprep.subr.mxu0 0.0
        %1477 = vmatpush1.msra.mxu0 0.0
        %1478 = vmatprep.subr.mxu0 0.0
        %1479 = vmatpush1.msra.mxu0 0.0
        %1480 = vmatprep.subr.mxu0 0.0
        %1481 = vmatpush1.msra.mxu0 0.0
        %1482 = vmatprep.subr.mxu0 0.0
        %1483 = vmatpush1.msra.mxu0 0.0
        %1484 = vmatprep.subr.mxu0 0.0
        %1485 = vmatpush1.msra.mxu0 0.0
        %1486 = vmatprep.subr.mxu0 0.0
        %1487 = vmatpush1.msra.mxu0 0.0
        %1488 = vmatprep.subr.mxu0 0.0
        %1489 = vmatpush1.msra.mxu0 0.0
        %1490 = vmatprep.subr.mxu0 0.0
        %1491 = vmatpush1.msra.mxu0 0.0
        %1492 = vmatprep.subr.mxu0 0.0
        %1493 = vmatpush1.msra.mxu0 0.0
        %1494 = vmatprep.subr.mxu0 0.0
        %1495 = vmatpush1.msra.mxu0 0.0
        %1496 = vmatprep.subr.mxu0 0.0
        %1497 = vmatpush1.msra.mxu0 0.0
        %1498 = vmatprep.subr.mxu0 0.0
        %1499 = vmatpush1.msra.mxu0 0.0
        %1500 = vmatprep.subr.mxu0 0.0
        %1501 = vmatpush1.msra.mxu0 0.0
        %1502 = vmatprep.subr.mxu0 0.0
        %1503 = vmatpush1.msra.mxu0 0.0
        %1504 = vmatprep.subr.mxu0 0.0
        %1505 = vmatpush1.msra.mxu0 0.0
        %1506 = vmatprep.subr.mxu0 0.0
        %1507 = vmatpush1.msra.mxu0 0.0
        %1508 = vmatprep.subr.mxu0 0.0
        %1509 = vmatpush1.msra.mxu0 0.0
        %1510 = vmatprep.subr.mxu0 0.0
        %1511 = vmatpush1.msra.mxu0 0.0
        %1512 = vmatprep.mubr.f32.mxu0 0.0
        %1513 = vmatmul.mubr.f32.gmra.mrb[0].mxu0 %v886
        %v1514 = vpop.f32.mrb[0].mxu0
        %v1515 = vadd.f32 %v859, %v1514
        %v1516 = vpop.f32.mrb[0].mxu0
        %1517 = vdwg.mxu0
        %1518 = vmatprep.subr.mxu0 0.0
        %1519 = vmatpush1.msra.mxu0 %v788
        %1520 = vmatprep.subr.mxu0 0.0
        %1521 = vmatpush1.msra.mxu0 %v789
        %1522 = vmatprep.subr.mxu0 0.0
        %1523 = vmatpush1.msra.mxu0 %v790
        %1524 = vmatprep.subr.mxu0 0.0
        %1525 = vmatpush1.msra.mxu0 %v791
        %1526 = vmatprep.subr.mxu0 0.0
        %1527 = vmatpush1.msra.mxu0 0.0
        %1528 = vmatprep.subr.mxu0 0.0
        %1529 = vmatpush1.msra.mxu0 0.0
        %1530 = vmatprep.subr.mxu0 0.0
        %1531 = vmatpush1.msra.mxu0 0.0
        %1532 = vmatprep.subr.mxu0 0.0
        %1533 = vmatpush1.msra.mxu0 0.0
        %1534 = vmatprep.subr.mxu0 0.0
        %1535 = vmatpush1.msra.mxu0 0.0
        %1536 = vmatprep.subr.mxu0 0.0
        %1537 = vmatpush1.msra.mxu0 0.0
        %1538 = vmatprep.subr.mxu0 0.0
        %1539 = vmatpush1.msra.mxu0 0.0
        %1540 = vmatprep.subr.mxu0 0.0
        %1541 = vmatpush1.msra.mxu0 0.0
        %1542 = vmatprep.subr.mxu0 0.0
        %1543 = vmatpush1.msra.mxu0 0.0
        %1544 = vmatprep.subr.mxu0 0.0
        %1545 = vmatpush1.msra.mxu0 0.0
        %1546 = vmatprep.subr.mxu0 0.0
        %1547 = vmatpush1.msra.mxu0 0.0
        %1548 = vmatprep.subr.mxu0 0.0
        %1549 = vmatpush1.msra.mxu0 0.0
        %1550 = vmatprep.subr.mxu0 0.0
        %1551 = vmatpush1.msra.mxu0 0.0
        %1552 = vmatprep.subr.mxu0 0.0
        %1553 = vmatpush1.msra.mxu0 0.0
        %1554 = vmatprep.subr.mxu0 0.0
        %1555 = vmatpush1.msra.mxu0 0.0
        %1556 = vmatprep.subr.mxu0 0.0
        %1557 = vmatpush1.msra.mxu0 0.0
        %1558 = vmatprep.subr.mxu0 0.0
        %1559 = vmatpush1.msra.mxu0 0.0
        %1560 = vmatprep.subr.mxu0 0.0
        %1561 = vmatpush1.msra.mxu0 0.0
        %1562 = vmatprep.subr.mxu0 0.0
        %1563 = vmatpush1.msra.mxu0 0.0
        %1564 = vmatprep.subr.mxu0 0.0
        %1565 = vmatpush1.msra.mxu0 0.0
        %1566 = vmatprep.subr.mxu0 0.0
        %1567 = vmatpush1.msra.mxu0 0.0
        %1568 = vmatprep.subr.mxu0 0.0
        %1569 = vmatpush1.msra.mxu0 0.0
        %1570 = vmatprep.subr.mxu0 0.0
        %1571 = vmatpush1.msra.mxu0 0.0
        %1572 = vmatprep.subr.mxu0 0.0
        %1573 = vmatpush1.msra.mxu0 0.0
        %1574 = vmatprep.subr.mxu0 0.0
        %1575 = vmatpush1.msra.mxu0 0.0
        %1576 = vmatprep.subr.mxu0 0.0
        %1577 = vmatpush1.msra.mxu0 0.0
        %1578 = vmatprep.subr.mxu0 0.0
        %1579 = vmatpush1.msra.mxu0 0.0
        %1580 = vmatprep.subr.mxu0 0.0
        %1581 = vmatpush1.msra.mxu0 0.0
        %1582 = vmatprep.mubr.f32.mxu0 0.0
        %1583 = vmatmul.mubr.f32.gmra.mrb[0].mxu0 %v886
        %v1584 = vpop.f32.mrb[0].mxu0
        %v1585 = vadd.f32 %v863, %v1584
        %v1586 = vpop.f32.mrb[0].mxu0
        %1587 = vdwg.mxu0
        %1588 = vmatprep.subr.mxu0 0.0
        %1589 = vmatpush1.msra.mxu0 %v792
        %1590 = vmatprep.subr.mxu0 0.0
        %1591 = vmatpush1.msra.mxu0 %v793
        %1592 = vmatprep.subr.mxu0 0.0
        %1593 = vmatpush1.msra.mxu0 %v794
        %1594 = vmatprep.subr.mxu0 0.0
        %1595 = vmatpush1.msra.mxu0 %v795
        %1596 = vmatprep.subr.mxu0 0.0
        %1597 = vmatpush1.msra.mxu0 0.0
        %1598 = vmatprep.subr.mxu0 0.0
        %1599 = vmatpush1.msra.mxu0 0.0
        %1600 = vmatprep.subr.mxu0 0.0
        %1601 = vmatpush1.msra.mxu0 0.0
        %1602 = vmatprep.subr.mxu0 0.0
        %1603 = vmatpush1.msra.mxu0 0.0
        %1604 = vmatprep.subr.mxu0 0.0
        %1605 = vmatpush1.msra.mxu0 0.0
        %1606 = vmatprep.subr.mxu0 0.0
        %1607 = vmatpush1.msra.mxu0 0.0
        %1608 = vmatprep.subr.mxu0 0.0
        %1609 = vmatpush1.msra.mxu0 0.0
        %1610 = vmatprep.subr.mxu0 0.0
        %1611 = vmatpush1.msra.mxu0 0.0
        %1612 = vmatprep.subr.mxu0 0.0
        %1613 = vmatpush1.msra.mxu0 0.0
        %1614 = vmatprep.subr.mxu0 0.0
        %1615 = vmatpush1.msra.mxu0 0.0
        %1616 = vmatprep.subr.mxu0 0.0
        %1617 = vmatpush1.msra.mxu0 0.0
        %1618 = vmatprep.subr.mxu0 0.0
        %1619 = vmatpush1.msra.mxu0 0.0
        %1620 = vmatprep.subr.mxu0 0.0
        %1621 = vmatpush1.msra.mxu0 0.0
        %1622 = vmatprep.subr.mxu0 0.0
        %1623 = vmatpush1.msra.mxu0 0.0
        %1624 = vmatprep.subr.mxu0 0.0
        %1625 = vmatpush1.msra.mxu0 0.0
        %1626 = vmatprep.subr.mxu0 0.0
        %1627 = vmatpush1.msra.mxu0 0.0
        %1628 = vmatprep.subr.mxu0 0.0
        %1629 = vmatpush1.msra.mxu0 0.0
        %1630 = vmatprep.subr.mxu0 0.0
        %1631 = vmatpush1.msra.mxu0 0.0
        %1632 = vmatprep.subr.mxu0 0.0
        %1633 = vmatpush1.msra.mxu0 0.0
        %1634 = vmatprep.subr.mxu0 0.0
        %1635 = vmatpush1.msra.mxu0 0.0
        %1636 = vmatprep.subr.mxu0 0.0
        %1637 = vmatpush1.msra.mxu0 0.0
        %1638 = vmatprep.subr.mxu0 0.0
        %1639 = vmatpush1.msra.mxu0 0.0
        %1640 = vmatprep.subr.mxu0 0.0
        %1641 = vmatpush1.msra.mxu0 0.0
        %1642 = vmatprep.subr.mxu0 0.0
        %1643 = vmatpush1.msra.mxu0 0.0
        %1644 = vmatprep.subr.mxu0 0.0
        %1645 = vmatpush1.msra.mxu0 0.0
        %1646 = vmatprep.subr.mxu0 0.0
        %1647 = vmatpush1.msra.mxu0 0.0
        %1648 = vmatprep.subr.mxu0 0.0
        %1649 = vmatpush1.msra.mxu0 0.0
        %1650 = vmatprep.subr.mxu0 0.0
        %1651 = vmatpush1.msra.mxu0 0.0
        %1652 = vmatprep.mubr.f32.mxu0 0.0
        %1653 = vmatmul.mubr.f32.gmra.mrb[0].mxu0 %v886
        %v1654 = vpop.f32.mrb[0].mxu0
        %v1655 = vadd.f32 %v867, %v1654
        %v1656 = vpop.f32.mrb[0].mxu0
        %1657 = vdwg.mxu0
        %1658 = vmatprep.subr.mxu0 0.0
        %1659 = vmatpush1.msra.mxu0 %v796
        %1660 = vmatprep.subr.mxu0 0.0
        %1661 = vmatpush1.msra.mxu0 %v797
        %1662 = vmatprep.subr.mxu0 0.0
        %1663 = vmatpush1.msra.mxu0 %v798
        %1664 = vmatprep.subr.mxu0 0.0
        %1665 = vmatpush1.msra.mxu0 %v799
        %1666 = vmatprep.subr.mxu0 0.0
        %1667 = vmatpush1.msra.mxu0 0.0
        %1668 = vmatprep.subr.mxu0 0.0
        %1669 = vmatpush1.msra.mxu0 0.0
        %1670 = vmatprep.subr.mxu0 0.0
        %1671 = vmatpush1.msra.mxu0 0.0
        %1672 = vmatprep.subr.mxu0 0.0
        %1673 = vmatpush1.msra.mxu0 0.0
        %1674 = vmatprep.subr.mxu0 0.0
        %1675 = vmatpush1.msra.mxu0 0.0
        %1676 = vmatprep.subr.mxu0 0.0
        %1677 = vmatpush1.msra.mxu0 0.0
        %1678 = vmatprep.subr.mxu0 0.0
        %1679 = vmatpush1.msra.mxu0 0.0
        %1680 = vmatprep.subr.mxu0 0.0
        %1681 = vmatpush1.msra.mxu0 0.0
        %1682 = vmatprep.subr.mxu0 0.0
        %1683 = vmatpush1.msra.mxu0 0.0
        %1684 = vmatprep.subr.mxu0 0.0
        %1685 = vmatpush1.msra.mxu0 0.0
        %1686 = vmatprep.subr.mxu0 0.0
        %1687 = vmatpush1.msra.mxu0 0.0
        %1688 = vmatprep.subr.mxu0 0.0
        %1689 = vmatpush1.msra.mxu0 0.0
        %1690 = vmatprep.subr.mxu0 0.0
        %1691 = vmatpush1.msra.mxu0 0.0
        %1692 = vmatprep.subr.mxu0 0.0
        %1693 = vmatpush1.msra.mxu0 0.0
        %1694 = vmatprep.subr.mxu0 0.0
        %1695 = vmatpush1.msra.mxu0 0.0
        %1696 = vmatprep.subr.mxu0 0.0
        %1697 = vmatpush1.msra.mxu0 0.0
        %1698 = vmatprep.subr.mxu0 0.0
        %1699 = vmatpush1.msra.mxu0 0.0
        %1700 = vmatprep.subr.mxu0 0.0
        %1701 = vmatpush1.msra.mxu0 0.0
        %1702 = vmatprep.subr.mxu0 0.0
        %1703 = vmatpush1.msra.mxu0 0.0
        %1704 = vmatprep.subr.mxu0 0.0
        %1705 = vmatpush1.msra.mxu0 0.0
        %1706 = vmatprep.subr.mxu0 0.0
        %1707 = vmatpush1.msra.mxu0 0.0
        %1708 = vmatprep.subr.mxu0 0.0
        %1709 = vmatpush1.msra.mxu0 0.0
        %1710 = vmatprep.subr.mxu0 0.0
        %1711 = vmatpush1.msra.mxu0 0.0
        %1712 = vmatprep.subr.mxu0 0.0
        %1713 = vmatpush1.msra.mxu0 0.0
        %1714 = vmatprep.subr.mxu0 0.0
        %1715 = vmatpush1.msra.mxu0 0.0
        %1716 = vmatprep.subr.mxu0 0.0
        %1717 = vmatpush1.msra.mxu0 0.0
        %1718 = vmatprep.subr.mxu0 0.0
        %1719 = vmatpush1.msra.mxu0 0.0
        %1720 = vmatprep.subr.mxu0 0.0
        %1721 = vmatpush1.msra.mxu0 0.0
        %1722 = vmatprep.mubr.f32.mxu0 0.0
        %1723 = vmatmul.mubr.f32.gmra.mrb[0].mxu0 %v886
        %v1724 = vpop.f32.mrb[0].mxu0
        %v1725 = vadd.f32 %v871, %v1724
        %v1726 = vpop.f32.mrb[0].mxu0
        %1727 = vdwg.mxu0
        %v1728 = vld [vmem:[%s574] sm:$0x1]
        %v1730 = vlaneseq
        %v1731 = vshrl.u32 %v1730, 7
        %v1732 = vsub.s32 0, %v1731
        %v1733 = vrot.slane %v1728, %v1732
        %vm1735 = vcmask 64512
        %v1737 = vsel %vm1735, %v955, 0
        %v1740 = vsel %vm1735, %v1235, 0
        %1742 = vmatprep.subr.mxu0 0.0
        %1743 = vmatpush1.xpose.msra.mxu0 %v1740
        %1744 = vmatprep.subr.mxu0 0.0
        %1745 = vmatpush1.xpose.msra.mxu0 0.0
        %1746 = vmatprep.subr.mxu0 0.0
        %1747 = vmatpush1.xpose.msra.mxu0 0.0
        %1748 = vmatprep.subr.mxu0 0.0
        %1749 = vmatpush1.xpose.msra.mxu0 0.0
        %1750 = vmatprep.subr.mxu0 0.0
        %1751 = vmatpush1.xpose.msra.mxu0 0.0
        %1752 = vmatprep.subr.mxu0 0.0
        %1753 = vmatpush1.xpose.msra.mxu0 0.0
        %1754 = vmatprep.subr.mxu0 0.0
        %1755 = vmatpush1.xpose.msra.mxu0 0.0
        %1756 = vmatprep.subr.mxu0 0.0
        %1757 = vmatpush1.xpose.msra.mxu0 0.0
        %1758 = vmatprep.subr.mxu0 0.0
        %1759 = vmatpush1.xpose.msra.mxu0 0.0
        %1760 = vmatprep.subr.mxu0 0.0
        %1761 = vmatpush1.xpose.msra.mxu0 0.0
        %1762 = vmatprep.subr.mxu0 0.0
        %1763 = vmatpush1.xpose.msra.mxu0 0.0
        %1764 = vmatprep.subr.mxu0 0.0
        %1765 = vmatpush1.xpose.msra.mxu0 0.0
        %1766 = vmatprep.subr.mxu0 0.0
        %1767 = vmatpush1.xpose.msra.mxu0 0.0
        %1768 = vmatprep.subr.mxu0 0.0
        %1769 = vmatpush1.xpose.msra.mxu0 0.0
        %1770 = vmatprep.subr.mxu0 0.0
        %1771 = vmatpush1.xpose.msra.mxu0 0.0
        %1772 = vmatprep.subr.mxu0 0.0
        %1773 = vmatpush1.xpose.msra.mxu0 0.0
        %1774 = vmatprep.subr.mxu0 0.0
        %1775 = vmatpush1.xpose.msra.mxu0 0.0
        %1776 = vmatprep.subr.mxu0 0.0
        %1777 = vmatpush1.xpose.msra.mxu0 0.0
        %1778 = vmatprep.subr.mxu0 0.0
        %1779 = vmatpush1.xpose.msra.mxu0 0.0
        %1780 = vmatprep.subr.mxu0 0.0
        %1781 = vmatpush1.xpose.msra.mxu0 0.0
        %1782 = vmatprep.subr.mxu0 0.0
        %1783 = vmatpush1.xpose.msra.mxu0 0.0
        %1784 = vmatprep.subr.mxu0 0.0
        %1785 = vmatpush1.xpose.msra.mxu0 0.0
        %1786 = vmatprep.subr.mxu0 0.0
        %1787 = vmatpush1.xpose.msra.mxu0 0.0
        %1788 = vmatprep.subr.mxu0 0.0
        %1789 = vmatpush1.xpose.msra.mxu0 0.0
        %1790 = vmatprep.subr.mxu0 0.0
        %1791 = vmatpush1.xpose.msra.mxu0 0.0
        %1792 = vmatprep.subr.mxu0 0.0
        %1793 = vmatpush1.xpose.msra.mxu0 0.0
        %1794 = vmatprep.subr.mxu0 0.0
        %1795 = vmatpush1.xpose.msra.mxu0 0.0
        %1796 = vmatprep.subr.mxu0 0.0
        %1797 = vmatpush1.xpose.msra.mxu0 0.0
        %1798 = vmatprep.subr.mxu0 0.0
        %1799 = vmatpush1.xpose.msra.mxu0 0.0
        %1800 = vmatprep.subr.mxu0 0.0
        %1801 = vmatpush1.xpose.msra.mxu0 0.0
        %1802 = vmatprep.subr.mxu0 0.0
        %1803 = vmatpush1.xpose.msra.mxu0 0.0
        %1804 = vmatprep.subr.mxu0 0.0
        %1805 = vmatpush1.xpose.msra.mxu0 0.0
        %1806 = vmatprep.mubr.f32.mxu0 0.0
        %1807 = vmatmul.mubr.f32.gmra.mrb[0].mxu0 %v1737
        %v1808 = vpop.f32.mrb[0].mxu0
        %v1809 = vadd.f32 %v1733, %v1808
        %v1810 = vpop.f32.mrb[0].mxu0
        %1811 = vdwg.mxu0
        %v1813 = vsel %vm1735, %v1025, 0
        %v1816 = vsel %vm1735, %v1305, 0
        %1818 = vmatprep.subr.mxu0 0.0
        %1819 = vmatpush1.xpose.msra.mxu0 %v1816
        %1820 = vmatprep.subr.mxu0 0.0
        %1821 = vmatpush1.xpose.msra.mxu0 0.0
        %1822 = vmatprep.subr.mxu0 0.0
        %1823 = vmatpush1.xpose.msra.mxu0 0.0
        %1824 = vmatprep.subr.mxu0 0.0
        %1825 = vmatpush1.xpose.msra.mxu0 0.0
        %1826 = vmatprep.subr.mxu0 0.0
        %1827 = vmatpush1.xpose.msra.mxu0 0.0
        %1828 = vmatprep.subr.mxu0 0.0
        %1829 = vmatpush1.xpose.msra.mxu0 0.0
        %1830 = vmatprep.subr.mxu0 0.0
        %1831 = vmatpush1.xpose.msra.mxu0 0.0
        %1832 = vmatprep.subr.mxu0 0.0
        %1833 = vmatpush1.xpose.msra.mxu0 0.0
        %1834 = vmatprep.subr.mxu0 0.0
        %1835 = vmatpush1.xpose.msra.mxu0 0.0
        %1836 = vmatprep.subr.mxu0 0.0
        %1837 = vmatpush1.xpose.msra.mxu0 0.0
        %1838 = vmatprep.subr.mxu0 0.0
        %1839 = vmatpush1.xpose.msra.mxu0 0.0
        %1840 = vmatprep.subr.mxu0 0.0
        %1841 = vmatpush1.xpose.msra.mxu0 0.0
        %1842 = vmatprep.subr.mxu0 0.0
        %1843 = vmatpush1.xpose.msra.mxu0 0.0
        %1844 = vmatprep.subr.mxu0 0.0
        %1845 = vmatpush1.xpose.msra.mxu0 0.0
        %1846 = vmatprep.subr.mxu0 0.0
        %1847 = vmatpush1.xpose.msra.mxu0 0.0
        %1848 = vmatprep.subr.mxu0 0.0
        %1849 = vmatpush1.xpose.msra.mxu0 0.0
        %1850 = vmatprep.subr.mxu0 0.0
        %1851 = vmatpush1.xpose.msra.mxu0 0.0
        %1852 = vmatprep.subr.mxu0 0.0
        %1853 = vmatpush1.xpose.msra.mxu0 0.0
        %1854 = vmatprep.subr.mxu0 0.0
        %1855 = vmatpush1.xpose.msra.mxu0 0.0
        %1856 = vmatprep.subr.mxu0 0.0
        %1857 = vmatpush1.xpose.msra.mxu0 0.0
        %1858 = vmatprep.subr.mxu0 0.0
        %1859 = vmatpush1.xpose.msra.mxu0 0.0
        %1860 = vmatprep.subr.mxu0 0.0
        %1861 = vmatpush1.xpose.msra.mxu0 0.0
        %1862 = vmatprep.subr.mxu0 0.0
        %1863 = vmatpush1.xpose.msra.mxu0 0.0
        %1864 = vmatprep.subr.mxu0 0.0
        %1865 = vmatpush1.xpose.msra.mxu0 0.0
        %1866 = vmatprep.subr.mxu0 0.0
        %1867 = vmatpush1.xpose.msra.mxu0 0.0
        %1868 = vmatprep.subr.mxu0 0.0
        %1869 = vmatpush1.xpose.msra.mxu0 0.0
        %1870 = vmatprep.subr.mxu0 0.0
        %1871 = vmatpush1.xpose.msra.mxu0 0.0
        %1872 = vmatprep.subr.mxu0 0.0
        %1873 = vmatpush1.xpose.msra.mxu0 0.0
        %1874 = vmatprep.subr.mxu0 0.0
        %1875 = vmatpush1.xpose.msra.mxu0 0.0
        %1876 = vmatprep.subr.mxu0 0.0
        %1877 = vmatpush1.xpose.msra.mxu0 0.0
        %1878 = vmatprep.subr.mxu0 0.0
        %1879 = vmatpush1.xpose.msra.mxu0 0.0
        %1880 = vmatprep.subr.mxu0 0.0
        %1881 = vmatpush1.xpose.msra.mxu0 0.0
        %1882 = vmatprep.mubr.f32.mxu0 0.0
        %1883 = vmatmul.mubr.f32.gmra.mrb[0].mxu0 %v1813
        %v1884 = vpop.f32.mrb[0].mxu0
        %v1885 = vadd.f32 %v1733, %v1884
        %v1886 = vpop.f32.mrb[0].mxu0
        %1887 = vdwg.mxu0
        %v1889 = vsel %vm1735, %v1095, 0
        %v1892 = vsel %vm1735, %v1375, 0
        %1894 = vmatprep.subr.mxu0 0.0
        %1895 = vmatpush1.xpose.msra.mxu0 %v1892
        %1896 = vmatprep.subr.mxu0 0.0
        %1897 = vmatpush1.xpose.msra.mxu0 0.0
        %1898 = vmatprep.subr.mxu0 0.0
        %1899 = vmatpush1.xpose.msra.mxu0 0.0
        %1900 = vmatprep.subr.mxu0 0.0
        %1901 = vmatpush1.xpose.msra.mxu0 0.0
        %1902 = vmatprep.subr.mxu0 0.0
        %1903 = vmatpush1.xpose.msra.mxu0 0.0
        %1904 = vmatprep.subr.mxu0 0.0
        %1905 = vmatpush1.xpose.msra.mxu0 0.0
        %1906 = vmatprep.subr.mxu0 0.0
        %1907 = vmatpush1.xpose.msra.mxu0 0.0
        %1908 = vmatprep.subr.mxu0 0.0
        %1909 = vmatpush1.xpose.msra.mxu0 0.0
        %1910 = vmatprep.subr.mxu0 0.0
        %1911 = vmatpush1.xpose.msra.mxu0 0.0
        %1912 = vmatprep.subr.mxu0 0.0
        %1913 = vmatpush1.xpose.msra.mxu0 0.0
        %1914 = vmatprep.subr.mxu0 0.0
        %1915 = vmatpush1.xpose.msra.mxu0 0.0
        %1916 = vmatprep.subr.mxu0 0.0
        %1917 = vmatpush1.xpose.msra.mxu0 0.0
        %1918 = vmatprep.subr.mxu0 0.0
        %1919 = vmatpush1.xpose.msra.mxu0 0.0
        %1920 = vmatprep.subr.mxu0 0.0
        %1921 = vmatpush1.xpose.msra.mxu0 0.0
        %1922 = vmatprep.subr.mxu0 0.0
        %1923 = vmatpush1.xpose.msra.mxu0 0.0
        %1924 = vmatprep.subr.mxu0 0.0
        %1925 = vmatpush1.xpose.msra.mxu0 0.0
        %1926 = vmatprep.subr.mxu0 0.0
        %1927 = vmatpush1.xpose.msra.mxu0 0.0
        %1928 = vmatprep.subr.mxu0 0.0
        %1929 = vmatpush1.xpose.msra.mxu0 0.0
        %1930 = vmatprep.subr.mxu0 0.0
        %1931 = vmatpush1.xpose.msra.mxu0 0.0
        %1932 = vmatprep.subr.mxu0 0.0
        %1933 = vmatpush1.xpose.msra.mxu0 0.0
        %1934 = vmatprep.subr.mxu0 0.0
        %1935 = vmatpush1.xpose.msra.mxu0 0.0
        %1936 = vmatprep.subr.mxu0 0.0
        %1937 = vmatpush1.xpose.msra.mxu0 0.0
        %1938 = vmatprep.subr.mxu0 0.0
        %1939 = vmatpush1.xpose.msra.mxu0 0.0
        %1940 = vmatprep.subr.mxu0 0.0
        %1941 = vmatpush1.xpose.msra.mxu0 0.0
        %1942 = vmatprep.subr.mxu0 0.0
        %1943 = vmatpush1.xpose.msra.mxu0 0.0
        %1944 = vmatprep.subr.mxu0 0.0
        %1945 = vmatpush1.xpose.msra.mxu0 0.0
        %1946 = vmatprep.subr.mxu0 0.0
        %1947 = vmatpush1.xpose.msra.mxu0 0.0
        %1948 = vmatprep.subr.mxu0 0.0
        %1949 = vmatpush1.xpose.msra.mxu0 0.0
        %1950 = vmatprep.subr.mxu0 0.0
        %1951 = vmatpush1.xpose.msra.mxu0 0.0
        %1952 = vmatprep.subr.mxu0 0.0
        %1953 = vmatpush1.xpose.msra.mxu0 0.0
        %1954 = vmatprep.subr.mxu0 0.0
        %1955 = vmatpush1.xpose.msra.mxu0 0.0
        %1956 = vmatprep.subr.mxu0 0.0
        %1957 = vmatpush1.xpose.msra.mxu0 0.0
        %1958 = vmatprep.mubr.f32.mxu0 0.0
        %1959 = vmatmul.mubr.f32.gmra.mrb[0].mxu0 %v1889
        %v1960 = vpop.f32.mrb[0].mxu0
        %v1961 = vadd.f32 %v1733, %v1960
        %v1962 = vpop.f32.mrb[0].mxu0
        %1963 = vdwg.mxu0
        %v1965 = vsel %vm1735, %v1165, 0
        %v1968 = vsel %vm1735, %v1445, 0
        %1970 = vmatprep.subr.mxu0 0.0
        %1971 = vmatpush1.xpose.msra.mxu0 %v1968
        %1972 = vmatprep.subr.mxu0 0.0
        %1973 = vmatpush1.xpose.msra.mxu0 0.0
        %1974 = vmatprep.subr.mxu0 0.0
        %1975 = vmatpush1.xpose.msra.mxu0 0.0
        %1976 = vmatprep.subr.mxu0 0.0
        %1977 = vmatpush1.xpose.msra.mxu0 0.0
        %1978 = vmatprep.subr.mxu0 0.0
        %1979 = vmatpush1.xpose.msra.mxu0 0.0
        %1980 = vmatprep.subr.mxu0 0.0
        %1981 = vmatpush1.xpose.msra.mxu0 0.0
        %1982 = vmatprep.subr.mxu0 0.0
        %1983 = vmatpush1.xpose.msra.mxu0 0.0
        %1984 = vmatprep.subr.mxu0 0.0
        %1985 = vmatpush1.xpose.msra.mxu0 0.0
        %1986 = vmatprep.subr.mxu0 0.0
        %1987 = vmatpush1.xpose.msra.mxu0 0.0
        %1988 = vmatprep.subr.mxu0 0.0
        %1989 = vmatpush1.xpose.msra.mxu0 0.0
        %1990 = vmatprep.subr.mxu0 0.0
        %1991 = vmatpush1.xpose.msra.mxu0 0.0
        %1992 = vmatprep.subr.mxu0 0.0
        %1993 = vmatpush1.xpose.msra.mxu0 0.0
        %1994 = vmatprep.subr.mxu0 0.0
        %1995 = vmatpush1.xpose.msra.mxu0 0.0
        %1996 = vmatprep.subr.mxu0 0.0
        %1997 = vmatpush1.xpose.msra.mxu0 0.0
        %1998 = vmatprep.subr.mxu0 0.0
        %1999 = vmatpush1.xpose.msra.mxu0 0.0
        %2000 = vmatprep.subr.mxu0 0.0
        %2001 = vmatpush1.xpose.msra.mxu0 0.0
        %2002 = vmatprep.subr.mxu0 0.0
        %2003 = vmatpush1.xpose.msra.mxu0 0.0
        %2004 = vmatprep.subr.mxu0 0.0
        %2005 = vmatpush1.xpose.msra.mxu0 0.0
        %2006 = vmatprep.subr.mxu0 0.0
        %2007 = vmatpush1.xpose.msra.mxu0 0.0
        %2008 = vmatprep.subr.mxu0 0.0
        %2009 = vmatpush1.xpose.msra.mxu0 0.0
        %2010 = vmatprep.subr.mxu0 0.0
        %2011 = vmatpush1.xpose.msra.mxu0 0.0
        %2012 = vmatprep.subr.mxu0 0.0
        %2013 = vmatpush1.xpose.msra.mxu0 0.0
        %2014 = vmatprep.subr.mxu0 0.0
        %2015 = vmatpush1.xpose.msra.mxu0 0.0
        %2016 = vmatprep.subr.mxu0 0.0
        %2017 = vmatpush1.xpose.msra.mxu0 0.0
        %2018 = vmatprep.subr.mxu0 0.0
        %2019 = vmatpush1.xpose.msra.mxu0 0.0
        %2020 = vmatprep.subr.mxu0 0.0
        %2021 = vmatpush1.xpose.msra.mxu0 0.0
        %2022 = vmatprep.subr.mxu0 0.0
        %2023 = vmatpush1.xpose.msra.mxu0 0.0
        %2024 = vmatprep.subr.mxu0 0.0
        %2025 = vmatpush1.xpose.msra.mxu0 0.0
        %2026 = vmatprep.subr.mxu0 0.0
        %2027 = vmatpush1.xpose.msra.mxu0 0.0
        %2028 = vmatprep.subr.mxu0 0.0
        %2029 = vmatpush1.xpose.msra.mxu0 0.0
        %2030 = vmatprep.subr.mxu0 0.0
        %2031 = vmatpush1.xpose.msra.mxu0 0.0
        %2032 = vmatprep.subr.mxu0 0.0
        %2033 = vmatpush1.xpose.msra.mxu0 0.0
        %2034 = vmatprep.mubr.f32.mxu0 0.0
        %2035 = vmatmul.mubr.f32.gmra.mrb[0].mxu0 %v1965
        %v2036 = vpop.f32.mrb[0].mxu0
        %v2037 = vadd.f32 %v1733, %v2036
        %v2038 = vpop.f32.mrb[0].mxu0
        %2039 = vdwg.mxu0
        %v2040 = vsel %vm1735, %v1809, -inf
        %2041 = vmax.xlane.f32.xlu0 %v2040
        %v2042 = vpop.xlane.xlu0 %2041
        %v2043 = vsel %vm1735, %v1885, -inf
        %2044 = vmax.xlane.f32.xlu0 %v2043
        %v2045 = vpop.xlane.xlu0 %2044
        %v2046 = vsel %vm1735, %v1961, -inf
        %2047 = vmax.xlane.f32.xlu0 %v2046
        %v2048 = vpop.xlane.xlu0 %2047
        %v2049 = vsel %vm1735, %v2037, -inf
        %2050 = vmax.xlane.f32.xlu0 %v2049
        %v2051 = vpop.xlane.xlu0 %2050
        %v2052 = vsub.f32 %v1809, %v2042
        %v2053 = vsub.f32 %v1885, %v2045
        %v2054 = vsub.f32 %v1961, %v2048
        %v2055 = vsub.f32 %v2037, %v2051
        %v2056 = vmul.f32 %v2052, 1.442695
        %v2057 = vpow.pop %v2056
        %v2058 = vmul.f32 %v2053, 1.442695
        %v2059 = vpow.pop %v2058
        %v2060 = vmul.f32 %v2054, 1.442695
        %v2061 = vpow.pop %v2060
        %v2062 = vmul.f32 %v2055, 1.442695
        %v2063 = vpow.pop %v2062
        %v2064 = vsel %vm1735, %v2057, 0.0
        %2065 = vadd.xlane.f32.xlu0 %v2064
        %v2066 = vpop.xlane.xlu0 %2065
        %v2067 = vsel %vm1735, %v2059, 0.0
        %2068 = vadd.xlane.f32.xlu0 %v2067
        %v2069 = vpop.xlane.xlu0 %2068
        %v2070 = vsel %vm1735, %v2061, 0.0
        %2071 = vadd.xlane.f32.xlu0 %v2070
        %v2072 = vpop.xlane.xlu0 %2071
        %v2073 = vsel %vm1735, %v2063, 0.0
        %2074 = vadd.xlane.f32.xlu0 %v2073
        %v2075 = vpop.xlane.xlu0 %2074
        %v2076 = vrcp.pop %v2066
        %v2077 = vrcp.pop %v2069
        %v2078 = vrcp.pop %v2072
        %v2079 = vrcp.pop %v2075
        %v2081 = vsel %vm1735, %v2057, 0
        %2083 = vmatprep.subr.mxu0 0.0
        %2084 = vmatpush1.msra.mxu0 %v1515
        %2085 = vmatprep.subr.mxu0 0.0
        %2086 = vmatpush1.msra.mxu0 0.0
        %2087 = vmatprep.subr.mxu0 0.0
        %2088 = vmatpush1.msra.mxu0 0.0
        %2089 = vmatprep.subr.mxu0 0.0
        %2090 = vmatpush1.msra.mxu0 0.0
        %2091 = vmatprep.subr.mxu0 0.0
        %2092 = vmatpush1.msra.mxu0 0.0
        %2093 = vmatprep.subr.mxu0 0.0
        %2094 = vmatpush1.msra.mxu0 0.0
        %2095 = vmatprep.subr.mxu0 0.0
        %2096 = vmatpush1.msra.mxu0 0.0
        %2097 = vmatprep.subr.mxu0 0.0
        %2098 = vmatpush1.msra.mxu0 0.0
        %2099 = vmatprep.subr.mxu0 0.0
        %2100 = vmatpush1.msra.mxu0 0.0
        %2101 = vmatprep.subr.mxu0 0.0
        %2102 = vmatpush1.msra.mxu0 0.0
        %2103 = vmatprep.subr.mxu0 0.0
        %2104 = vmatpush1.msra.mxu0 0.0
        %2105 = vmatprep.subr.mxu0 0.0
        %2106 = vmatpush1.msra.mxu0 0.0
        %2107 = vmatprep.subr.mxu0 0.0
        %2108 = vmatpush1.msra.mxu0 0.0
        %2109 = vmatprep.subr.mxu0 0.0
        %2110 = vmatpush1.msra.mxu0 0.0
        %2111 = vmatprep.subr.mxu0 0.0
        %2112 = vmatpush1.msra.mxu0 0.0
        %2113 = vmatprep.subr.mxu0 0.0
        %2114 = vmatpush1.msra.mxu0 0.0
        %2115 = vmatprep.subr.mxu0 0.0
        %2116 = vmatpush1.msra.mxu0 0.0
        %2117 = vmatprep.subr.mxu0 0.0
        %2118 = vmatpush1.msra.mxu0 0.0
        %2119 = vmatprep.subr.mxu0 0.0
        %2120 = vmatpush1.msra.mxu0 0.0
        %2121 = vmatprep.subr.mxu0 0.0
        %2122 = vmatpush1.msra.mxu0 0.0
        %2123 = vmatprep.subr.mxu0 0.0
        %2124 = vmatpush1.msra.mxu0 0.0
        %2125 = vmatprep.subr.mxu0 0.0
        %2126 = vmatpush1.msra.mxu0 0.0
        %2127 = vmatprep.subr.mxu0 0.0
        %2128 = vmatpush1.msra.mxu0 0.0
        %2129 = vmatprep.subr.mxu0 0.0
        %2130 = vmatpush1.msra.mxu0 0.0
        %2131 = vmatprep.subr.mxu0 0.0
        %2132 = vmatpush1.msra.mxu0 0.0
        %2133 = vmatprep.subr.mxu0 0.0
        %2134 = vmatpush1.msra.mxu0 0.0
        %2135 = vmatprep.subr.mxu0 0.0
        %2136 = vmatpush1.msra.mxu0 0.0
        %2137 = vmatprep.subr.mxu0 0.0
        %2138 = vmatpush1.msra.mxu0 0.0
        %2139 = vmatprep.subr.mxu0 0.0
        %2140 = vmatpush1.msra.mxu0 0.0
        %2141 = vmatprep.subr.mxu0 0.0
        %2142 = vmatpush1.msra.mxu0 0.0
        %2143 = vmatprep.subr.mxu0 0.0
        %2144 = vmatpush1.msra.mxu0 0.0
        %2145 = vmatprep.subr.mxu0 0.0
        %2146 = vmatpush1.msra.mxu0 0.0
        %2147 = vmatprep.mubr.f32.mxu0 0.0
        %2148 = vmatmul.mubr.f32.gmra.mrb[0].mxu0 %v2081
        %v2149 = vpop.f32.mrb[0].mxu0
        %v2150 = vadd.f32 0.0, %v2149
        %v2151 = vpop.f32.mrb[0].mxu0
        %2152 = vdwg.mxu0
        %v2154 = vsel %vm1735, %v2059, 0
        %2156 = vmatprep.subr.mxu0 0.0
        %2157 = vmatpush1.msra.mxu0 %v1585
        %2158 = vmatprep.subr.mxu0 0.0
        %2159 = vmatpush1.msra.mxu0 0.0
        %2160 = vmatprep.subr.mxu0 0.0
        %2161 = vmatpush1.msra.mxu0 0.0
        %2162 = vmatprep.subr.mxu0 0.0
        %2163 = vmatpush1.msra.mxu0 0.0
        %2164 = vmatprep.subr.mxu0 0.0
        %2165 = vmatpush1.msra.mxu0 0.0
        %2166 = vmatprep.subr.mxu0 0.0
        %2167 = vmatpush1.msra.mxu0 0.0
        %2168 = vmatprep.subr.mxu0 0.0
        %2169 = vmatpush1.msra.mxu0 0.0
        %2170 = vmatprep.subr.mxu0 0.0
        %2171 = vmatpush1.msra.mxu0 0.0
        %2172 = vmatprep.subr.mxu0 0.0
        %2173 = vmatpush1.msra.mxu0 0.0
        %2174 = vmatprep.subr.mxu0 0.0
        %2175 = vmatpush1.msra.mxu0 0.0
        %2176 = vmatprep.subr.mxu0 0.0
        %2177 = vmatpush1.msra.mxu0 0.0
        %2178 = vmatprep.subr.mxu0 0.0
        %2179 = vmatpush1.msra.mxu0 0.0
        %2180 = vmatprep.subr.mxu0 0.0
        %2181 = vmatpush1.msra.mxu0 0.0
        %2182 = vmatprep.subr.mxu0 0.0
        %2183 = vmatpush1.msra.mxu0 0.0
        %2184 = vmatprep.subr.mxu0 0.0
        %2185 = vmatpush1.msra.mxu0 0.0
        %2186 = vmatprep.subr.mxu0 0.0
        %2187 = vmatpush1.msra.mxu0 0.0
        %2188 = vmatprep.subr.mxu0 0.0
        %2189 = vmatpush1.msra.mxu0 0.0
        %2190 = vmatprep.subr.mxu0 0.0
        %2191 = vmatpush1.msra.mxu0 0.0
        %2192 = vmatprep.subr.mxu0 0.0
        %2193 = vmatpush1.msra.mxu0 0.0
        %2194 = vmatprep.subr.mxu0 0.0
        %2195 = vmatpush1.msra.mxu0 0.0
        %2196 = vmatprep.subr.mxu0 0.0
        %2197 = vmatpush1.msra.mxu0 0.0
        %2198 = vmatprep.subr.mxu0 0.0
        %2199 = vmatpush1.msra.mxu0 0.0
        %2200 = vmatprep.subr.mxu0 0.0
        %2201 = vmatpush1.msra.mxu0 0.0
        %2202 = vmatprep.subr.mxu0 0.0
        %2203 = vmatpush1.msra.mxu0 0.0
        %2204 = vmatprep.subr.mxu0 0.0
        %2205 = vmatpush1.msra.mxu0 0.0
        %2206 = vmatprep.subr.mxu0 0.0
        %2207 = vmatpush1.msra.mxu0 0.0
        %2208 = vmatprep.subr.mxu0 0.0
        %2209 = vmatpush1.msra.mxu0 0.0
        %2210 = vmatprep.subr.mxu0 0.0
        %2211 = vmatpush1.msra.mxu0 0.0
        %2212 = vmatprep.subr.mxu0 0.0
        %2213 = vmatpush1.msra.mxu0 0.0
        %2214 = vmatprep.subr.mxu0 0.0
        %2215 = vmatpush1.msra.mxu0 0.0
        %2216 = vmatprep.subr.mxu0 0.0
        %2217 = vmatpush1.msra.mxu0 0.0
        %2218 = vmatprep.subr.mxu0 0.0
        %2219 = vmatpush1.msra.mxu0 0.0
        %2220 = vmatprep.mubr.f32.mxu0 0.0
        %2221 = vmatmul.mubr.f32.gmra.mrb[0].mxu0 %v2154
        %v2222 = vpop.f32.mrb[0].mxu0
        %v2223 = vadd.f32 0.0, %v2222
        %v2224 = vpop.f32.mrb[0].mxu0
        %2225 = vdwg.mxu0
        %v2227 = vsel %vm1735, %v2061, 0
        %2229 = vmatprep.subr.mxu0 0.0
        %2230 = vmatpush1.msra.mxu0 %v1655
        %2231 = vmatprep.subr.mxu0 0.0
        %2232 = vmatpush1.msra.mxu0 0.0
        %2233 = vmatprep.subr.mxu0 0.0
        %2234 = vmatpush1.msra.mxu0 0.0
        %2235 = vmatprep.subr.mxu0 0.0
        %2236 = vmatpush1.msra.mxu0 0.0
        %2237 = vmatprep.subr.mxu0 0.0
        %2238 = vmatpush1.msra.mxu0 0.0
        %2239 = vmatprep.subr.mxu0 0.0
        %2240 = vmatpush1.msra.mxu0 0.0
        %2241 = vmatprep.subr.mxu0 0.0
        %2242 = vmatpush1.msra.mxu0 0.0
        %2243 = vmatprep.subr.mxu0 0.0
        %2244 = vmatpush1.msra.mxu0 0.0
        %2245 = vmatprep.subr.mxu0 0.0
        %2246 = vmatpush1.msra.mxu0 0.0
        %2247 = vmatprep.subr.mxu0 0.0
        %2248 = vmatpush1.msra.mxu0 0.0
        %2249 = vmatprep.subr.mxu0 0.0
        %2250 = vmatpush1.msra.mxu0 0.0
        %2251 = vmatprep.subr.mxu0 0.0
        %2252 = vmatpush1.msra.mxu0 0.0
        %2253 = vmatprep.subr.mxu0 0.0
        %2254 = vmatpush1.msra.mxu0 0.0
        %2255 = vmatprep.subr.mxu0 0.0
        %2256 = vmatpush1.msra.mxu0 0.0
        %2257 = vmatprep.subr.mxu0 0.0
        %2258 = vmatpush1.msra.mxu0 0.0
        %2259 = vmatprep.subr.mxu0 0.0
        %2260 = vmatpush1.msra.mxu0 0.0
        %2261 = vmatprep.subr.mxu0 0.0
        %2262 = vmatpush1.msra.mxu0 0.0
        %2263 = vmatprep.subr.mxu0 0.0
        %2264 = vmatpush1.msra.mxu0 0.0
        %2265 = vmatprep.subr.mxu0 0.0
        %2266 = vmatpush1.msra.mxu0 0.0
        %2267 = vmatprep.subr.mxu0 0.0
        %2268 = vmatpush1.msra.mxu0 0.0
        %2269 = vmatprep.subr.mxu0 0.0
        %2270 = vmatpush1.msra.mxu0 0.0
        %2271 = vmatprep.subr.mxu0 0.0
        %2272 = vmatpush1.msra.mxu0 0.0
        %2273 = vmatprep.subr.mxu0 0.0
        %2274 = vmatpush1.msra.mxu0 0.0
        %2275 = vmatprep.subr.mxu0 0.0
        %2276 = vmatpush1.msra.mxu0 0.0
        %2277 = vmatprep.subr.mxu0 0.0
        %2278 = vmatpush1.msra.mxu0 0.0
        %2279 = vmatprep.subr.mxu0 0.0
        %2280 = vmatpush1.msra.mxu0 0.0
        %2281 = vmatprep.subr.mxu0 0.0
        %2282 = vmatpush1.msra.mxu0 0.0
        %2283 = vmatprep.subr.mxu0 0.0
        %2284 = vmatpush1.msra.mxu0 0.0
        %2285 = vmatprep.subr.mxu0 0.0
        %2286 = vmatpush1.msra.mxu0 0.0
        %2287 = vmatprep.subr.mxu0 0.0
        %2288 = vmatpush1.msra.mxu0 0.0
        %2289 = vmatprep.subr.mxu0 0.0
        %2290 = vmatpush1.msra.mxu0 0.0
        %2291 = vmatprep.subr.mxu0 0.0
        %2292 = vmatpush1.msra.mxu0 0.0
        %2293 = vmatprep.mubr.f32.mxu0 0.0
        %2294 = vmatmul.mubr.f32.gmra.mrb[0].mxu0 %v2227
        %v2295 = vpop.f32.mrb[0].mxu0
        %v2296 = vadd.f32 0.0, %v2295
        %v2297 = vpop.f32.mrb[0].mxu0
        %2298 = vdwg.mxu0
        %v2300 = vsel %vm1735, %v2063, 0
        %2302 = vmatprep.subr.mxu0 0.0
        %2303 = vmatpush1.msra.mxu0 %v1725
        %2304 = vmatprep.subr.mxu0 0.0
        %2305 = vmatpush1.msra.mxu0 0.0
        %2306 = vmatprep.subr.mxu0 0.0
        %2307 = vmatpush1.msra.mxu0 0.0
        %2308 = vmatprep.subr.mxu0 0.0
        %2309 = vmatpush1.msra.mxu0 0.0
        %2310 = vmatprep.subr.mxu0 0.0
        %2311 = vmatpush1.msra.mxu0 0.0
        %2312 = vmatprep.subr.mxu0 0.0
        %2313 = vmatpush1.msra.mxu0 0.0
        %2314 = vmatprep.subr.mxu0 0.0
        %2315 = vmatpush1.msra.mxu0 0.0
        %2316 = vmatprep.subr.mxu0 0.0
        %2317 = vmatpush1.msra.mxu0 0.0
        %2318 = vmatprep.subr.mxu0 0.0
        %2319 = vmatpush1.msra.mxu0 0.0
        %2320 = vmatprep.subr.mxu0 0.0
        %2321 = vmatpush1.msra.mxu0 0.0
        %2322 = vmatprep.subr.mxu0 0.0
        %2323 = vmatpush1.msra.mxu0 0.0
        %2324 = vmatprep.subr.mxu0 0.0
        %2325 = vmatpush1.msra.mxu0 0.0
        %2326 = vmatprep.subr.mxu0 0.0
        %2327 = vmatpush1.msra.mxu0 0.0
        %2328 = vmatprep.subr.mxu0 0.0
        %2329 = vmatpush1.msra.mxu0 0.0
        %2330 = vmatprep.subr.mxu0 0.0
        %2331 = vmatpush1.msra.mxu0 0.0
        %2332 = vmatprep.subr.mxu0 0.0
        %2333 = vmatpush1.msra.mxu0 0.0
        %2334 = vmatprep.subr.mxu0 0.0
        %2335 = vmatpush1.msra.mxu0 0.0
        %2336 = vmatprep.subr.mxu0 0.0
        %2337 = vmatpush1.msra.mxu0 0.0
        %2338 = vmatprep.subr.mxu0 0.0
        %2339 = vmatpush1.msra.mxu0 0.0
        %2340 = vmatprep.subr.mxu0 0.0
        %2341 = vmatpush1.msra.mxu0 0.0
        %2342 = vmatprep.subr.mxu0 0.0
        %2343 = vmatpush1.msra.mxu0 0.0
        %2344 = vmatprep.subr.mxu0 0.0
        %2345 = vmatpush1.msra.mxu0 0.0
        %2346 = vmatprep.subr.mxu0 0.0
        %2347 = vmatpush1.msra.mxu0 0.0
        %2348 = vmatprep.subr.mxu0 0.0
        %2349 = vmatpush1.msra.mxu0 0.0
        %2350 = vmatprep.subr.mxu0 0.0
        %2351 = vmatpush1.msra.mxu0 0.0
        %2352 = vmatprep.subr.mxu0 0.0
        %2353 = vmatpush1.msra.mxu0 0.0
        %2354 = vmatprep.subr.mxu0 0.0
        %2355 = vmatpush1.msra.mxu0 0.0
        %2356 = vmatprep.subr.mxu0 0.0
        %2357 = vmatpush1.msra.mxu0 0.0
        %2358 = vmatprep.subr.mxu0 0.0
        %2359 = vmatpush1.msra.mxu0 0.0
        %2360 = vmatprep.subr.mxu0 0.0
        %2361 = vmatpush1.msra.mxu0 0.0
        %2362 = vmatprep.subr.mxu0 0.0
        %2363 = vmatpush1.msra.mxu0 0.0
        %2364 = vmatprep.subr.mxu0 0.0
        %2365 = vmatpush1.msra.mxu0 0.0
        %2366 = vmatprep.mubr.f32.mxu0 0.0
        %2367 = vmatmul.mubr.f32.gmra.mrb[0].mxu0 %v2300
        %v2368 = vpop.f32.mrb[0].mxu0
        %v2369 = vadd.f32 0.0, %v2368
        %v2370 = vpop.f32.mrb[0].mxu0
        %2371 = vdwg.mxu0
        %v2372 = vmul.f32 %v2150, %v2076
        %v2373 = vmul.f32 %v2223, %v2077
        %v2374 = vmul.f32 %v2296, %v2078
        %v2375 = vmul.f32 %v2369, %v2079
        %v2376 = vld [vmem:[%s605] sm:$0x3f]
        %v2377 = vld [vmem:[%s588] sm:$0xff]
        %v2378 = vld [vmem:[%s588 + $0x8] sm:$0xff]
        %v2379 = vld [vmem:[%s588 + $0x10] sm:$0xff]
        %v2380 = vld [vmem:[%s588 + $0x18] sm:$0xff]
        %v2382 = vsel %vm1735, %v2372, 0
        %2384 = vmatprep.subr.mxu0 0.0
        %2385 = vmatpush1.msra.mxu0 %v2377
        %2386 = vmatprep.subr.mxu0 0.0
        %2387 = vmatpush1.msra.mxu0 0.0
        %2388 = vmatprep.subr.mxu0 0.0
        %2389 = vmatpush1.msra.mxu0 0.0
        %2390 = vmatprep.subr.mxu0 0.0
        %2391 = vmatpush1.msra.mxu0 0.0
        %2392 = vmatprep.subr.mxu0 0.0
        %2393 = vmatpush1.msra.mxu0 0.0
        %2394 = vmatprep.subr.mxu0 0.0
        %2395 = vmatpush1.msra.mxu0 0.0
        %2396 = vmatprep.subr.mxu0 0.0
        %2397 = vmatpush1.msra.mxu0 0.0
        %2398 = vmatprep.subr.mxu0 0.0
        %2399 = vmatpush1.msra.mxu0 0.0
        %2400 = vmatprep.subr.mxu0 0.0
        %2401 = vmatpush1.msra.mxu0 0.0
        %2402 = vmatprep.subr.mxu0 0.0
        %2403 = vmatpush1.msra.mxu0 0.0
        %2404 = vmatprep.subr.mxu0 0.0
        %2405 = vmatpush1.msra.mxu0 0.0
        %2406 = vmatprep.subr.mxu0 0.0
        %2407 = vmatpush1.msra.mxu0 0.0
        %2408 = vmatprep.subr.mxu0 0.0
        %2409 = vmatpush1.msra.mxu0 0.0
        %2410 = vmatprep.subr.mxu0 0.0
        %2411 = vmatpush1.msra.mxu0 0.0
        %2412 = vmatprep.subr.mxu0 0.0
        %2413 = vmatpush1.msra.mxu0 0.0
        %2414 = vmatprep.subr.mxu0 0.0
        %2415 = vmatpush1.msra.mxu0 0.0
        %2416 = vmatprep.subr.mxu0 0.0
        %2417 = vmatpush1.msra.mxu0 0.0
        %2418 = vmatprep.subr.mxu0 0.0
        %2419 = vmatpush1.msra.mxu0 0.0
        %2420 = vmatprep.subr.mxu0 0.0
        %2421 = vmatpush1.msra.mxu0 0.0
        %2422 = vmatprep.subr.mxu0 0.0
        %2423 = vmatpush1.msra.mxu0 0.0
        %2424 = vmatprep.subr.mxu0 0.0
        %2425 = vmatpush1.msra.mxu0 0.0
        %2426 = vmatprep.subr.mxu0 0.0
        %2427 = vmatpush1.msra.mxu0 0.0
        %2428 = vmatprep.subr.mxu0 0.0
        %2429 = vmatpush1.msra.mxu0 0.0
        %2430 = vmatprep.subr.mxu0 0.0
        %2431 = vmatpush1.msra.mxu0 0.0
        %2432 = vmatprep.subr.mxu0 0.0
        %2433 = vmatpush1.msra.mxu0 0.0
        %2434 = vmatprep.subr.mxu0 0.0
        %2435 = vmatpush1.msra.mxu0 0.0
        %2436 = vmatprep.subr.mxu0 0.0
        %2437 = vmatpush1.msra.mxu0 0.0
        %2438 = vmatprep.subr.mxu0 0.0
        %2439 = vmatpush1.msra.mxu0 0.0
        %2440 = vmatprep.subr.mxu0 0.0
        %2441 = vmatpush1.msra.mxu0 0.0
        %2442 = vmatprep.subr.mxu0 0.0
        %2443 = vmatpush1.msra.mxu0 0.0
        %2444 = vmatprep.subr.mxu0 0.0
        %2445 = vmatpush1.msra.mxu0 0.0
        %2446 = vmatprep.subr.mxu0 0.0
        %2447 = vmatpush1.msra.mxu0 0.0
        %2448 = vmatprep.mubr.f32.mxu0 0.0
        %2449 = vmatmul.mubr.f32.gmra.mrb[0].mxu0 %v2382
        %v2450 = vpop.f32.mrb[0].mxu0
        %v2451 = vadd.f32 0.0, %v2450
        %v2452 = vpop.f32.mrb[0].mxu0
        %2453 = vdwg.mxu0
        %v2455 = vsel %vm1735, %v2373, 0
        %2457 = vmatprep.subr.mxu0 0.0
        %2458 = vmatpush1.msra.mxu0 %v2378
        %2459 = vmatprep.subr.mxu0 0.0
        %2460 = vmatpush1.msra.mxu0 0.0
        %2461 = vmatprep.subr.mxu0 0.0
        %2462 = vmatpush1.msra.mxu0 0.0
        %2463 = vmatprep.subr.mxu0 0.0
        %2464 = vmatpush1.msra.mxu0 0.0
        %2465 = vmatprep.subr.mxu0 0.0
        %2466 = vmatpush1.msra.mxu0 0.0
        %2467 = vmatprep.subr.mxu0 0.0
        %2468 = vmatpush1.msra.mxu0 0.0
        %2469 = vmatprep.subr.mxu0 0.0
        %2470 = vmatpush1.msra.mxu0 0.0
        %2471 = vmatprep.subr.mxu0 0.0
        %2472 = vmatpush1.msra.mxu0 0.0
        %2473 = vmatprep.subr.mxu0 0.0
        %2474 = vmatpush1.msra.mxu0 0.0
        %2475 = vmatprep.subr.mxu0 0.0
        %2476 = vmatpush1.msra.mxu0 0.0
        %2477 = vmatprep.subr.mxu0 0.0
        %2478 = vmatpush1.msra.mxu0 0.0
        %2479 = vmatprep.subr.mxu0 0.0
        %2480 = vmatpush1.msra.mxu0 0.0
        %2481 = vmatprep.subr.mxu0 0.0
        %2482 = vmatpush1.msra.mxu0 0.0
        %2483 = vmatprep.subr.mxu0 0.0
        %2484 = vmatpush1.msra.mxu0 0.0
        %2485 = vmatprep.subr.mxu0 0.0
        %2486 = vmatpush1.msra.mxu0 0.0
        %2487 = vmatprep.subr.mxu0 0.0
        %2488 = vmatpush1.msra.mxu0 0.0
        %2489 = vmatprep.subr.mxu0 0.0
        %2490 = vmatpush1.msra.mxu0 0.0
        %2491 = vmatprep.subr.mxu0 0.0
        %2492 = vmatpush1.msra.mxu0 0.0
        %2493 = vmatprep.subr.mxu0 0.0
        %2494 = vmatpush1.msra.mxu0 0.0
        %2495 = vmatprep.subr.mxu0 0.0
        %2496 = vmatpush1.msra.mxu0 0.0
        %2497 = vmatprep.subr.mxu0 0.0
        %2498 = vmatpush1.msra.mxu0 0.0
        %2499 = vmatprep.subr.mxu0 0.0
        %2500 = vmatpush1.msra.mxu0 0.0
        %2501 = vmatprep.subr.mxu0 0.0
        %2502 = vmatpush1.msra.mxu0 0.0
        %2503 = vmatprep.subr.mxu0 0.0
        %2504 = vmatpush1.msra.mxu0 0.0
        %2505 = vmatprep.subr.mxu0 0.0
        %2506 = vmatpush1.msra.mxu0 0.0
        %2507 = vmatprep.subr.mxu0 0.0
        %2508 = vmatpush1.msra.mxu0 0.0
        %2509 = vmatprep.subr.mxu0 0.0
        %2510 = vmatpush1.msra.mxu0 0.0
        %2511 = vmatprep.subr.mxu0 0.0
        %2512 = vmatpush1.msra.mxu0 0.0
        %2513 = vmatprep.subr.mxu0 0.0
        %2514 = vmatpush1.msra.mxu0 0.0
        %2515 = vmatprep.subr.mxu0 0.0
        %2516 = vmatpush1.msra.mxu0 0.0
        %2517 = vmatprep.subr.mxu0 0.0
        %2518 = vmatpush1.msra.mxu0 0.0
        %2519 = vmatprep.subr.mxu0 0.0
        %2520 = vmatpush1.msra.mxu0 0.0
        %2521 = vmatprep.mubr.f32.mxu0 0.0
        %2522 = vmatmul.mubr.f32.gmra.mrb[0].mxu0 %v2455
        %v2523 = vpop.f32.mrb[0].mxu0
        %v2524 = vadd.f32 0.0, %v2523
        %v2525 = vpop.f32.mrb[0].mxu0
        %2526 = vdwg.mxu0
        %v2528 = vsel %vm1735, %v2374, 0
        %2530 = vmatprep.subr.mxu0 0.0
        %2531 = vmatpush1.msra.mxu0 %v2379
        %2532 = vmatprep.subr.mxu0 0.0
        %2533 = vmatpush1.msra.mxu0 0.0
        %2534 = vmatprep.subr.mxu0 0.0
        %2535 = vmatpush1.msra.mxu0 0.0
        %2536 = vmatprep.subr.mxu0 0.0
        %2537 = vmatpush1.msra.mxu0 0.0
        %2538 = vmatprep.subr.mxu0 0.0
        %2539 = vmatpush1.msra.mxu0 0.0
        %2540 = vmatprep.subr.mxu0 0.0
        %2541 = vmatpush1.msra.mxu0 0.0
        %2542 = vmatprep.subr.mxu0 0.0
        %2543 = vmatpush1.msra.mxu0 0.0
        %2544 = vmatprep.subr.mxu0 0.0
        %2545 = vmatpush1.msra.mxu0 0.0
        %2546 = vmatprep.subr.mxu0 0.0
        %2547 = vmatpush1.msra.mxu0 0.0
        %2548 = vmatprep.subr.mxu0 0.0
        %2549 = vmatpush1.msra.mxu0 0.0
        %2550 = vmatprep.subr.mxu0 0.0
        %2551 = vmatpush1.msra.mxu0 0.0
        %2552 = vmatprep.subr.mxu0 0.0
        %2553 = vmatpush1.msra.mxu0 0.0
        %2554 = vmatprep.subr.mxu0 0.0
        %2555 = vmatpush1.msra.mxu0 0.0
        %2556 = vmatprep.subr.mxu0 0.0
        %2557 = vmatpush1.msra.mxu0 0.0
        %2558 = vmatprep.subr.mxu0 0.0
        %2559 = vmatpush1.msra.mxu0 0.0
        %2560 = vmatprep.subr.mxu0 0.0
        %2561 = vmatpush1.msra.mxu0 0.0
        %2562 = vmatprep.subr.mxu0 0.0
        %2563 = vmatpush1.msra.mxu0 0.0
        %2564 = vmatprep.subr.mxu0 0.0
        %2565 = vmatpush1.msra.mxu0 0.0
        %2566 = vmatprep.subr.mxu0 0.0
        %2567 = vmatpush1.msra.mxu0 0.0
        %2568 = vmatprep.subr.mxu0 0.0
        %2569 = vmatpush1.msra.mxu0 0.0
        %2570 = vmatprep.subr.mxu0 0.0
        %2571 = vmatpush1.msra.mxu0 0.0
        %2572 = vmatprep.subr.mxu0 0.0
        %2573 = vmatpush1.msra.mxu0 0.0
        %2574 = vmatprep.subr.mxu0 0.0
        %2575 = vmatpush1.msra.mxu0 0.0
        %2576 = vmatprep.subr.mxu0 0.0
        %2577 = vmatpush1.msra.mxu0 0.0
        %2578 = vmatprep.subr.mxu0 0.0
        %2579 = vmatpush1.msra.mxu0 0.0
        %2580 = vmatprep.subr.mxu0 0.0
        %2581 = vmatpush1.msra.mxu0 0.0
        %2582 = vmatprep.subr.mxu0 0.0
        %2583 = vmatpush1.msra.mxu0 0.0
        %2584 = vmatprep.subr.mxu0 0.0
        %2585 = vmatpush1.msra.mxu0 0.0
        %2586 = vmatprep.subr.mxu0 0.0
        %2587 = vmatpush1.msra.mxu0 0.0
        %2588 = vmatprep.subr.mxu0 0.0
        %2589 = vmatpush1.msra.mxu0 0.0
        %2590 = vmatprep.subr.mxu0 0.0
        %2591 = vmatpush1.msra.mxu0 0.0
        %2592 = vmatprep.subr.mxu0 0.0
        %2593 = vmatpush1.msra.mxu0 0.0
        %2594 = vmatprep.mubr.f32.mxu0 0.0
        %2595 = vmatmul.mubr.f32.gmra.mrb[0].mxu0 %v2528
        %v2596 = vpop.f32.mrb[0].mxu0
        %v2597 = vadd.f32 0.0, %v2596
        %v2598 = vpop.f32.mrb[0].mxu0
        %2599 = vdwg.mxu0
        %v2601 = vsel %vm1735, %v2375, 0
        %2603 = vmatprep.subr.mxu0 0.0
        %2604 = vmatpush1.msra.mxu0 %v2380
        %2605 = vmatprep.subr.mxu0 0.0
        %2606 = vmatpush1.msra.mxu0 0.0
        %2607 = vmatprep.subr.mxu0 0.0
        %2608 = vmatpush1.msra.mxu0 0.0
        %2609 = vmatprep.subr.mxu0 0.0
        %2610 = vmatpush1.msra.mxu0 0.0
        %2611 = vmatprep.subr.mxu0 0.0
        %2612 = vmatpush1.msra.mxu0 0.0
        %2613 = vmatprep.subr.mxu0 0.0
        %2614 = vmatpush1.msra.mxu0 0.0
        %2615 = vmatprep.subr.mxu0 0.0
        %2616 = vmatpush1.msra.mxu0 0.0
        %2617 = vmatprep.subr.mxu0 0.0
        %2618 = vmatpush1.msra.mxu0 0.0
        %2619 = vmatprep.subr.mxu0 0.0
        %2620 = vmatpush1.msra.mxu0 0.0
        %2621 = vmatprep.subr.mxu0 0.0
        %2622 = vmatpush1.msra.mxu0 0.0
        %2623 = vmatprep.subr.mxu0 0.0
        %2624 = vmatpush1.msra.mxu0 0.0
        %2625 = vmatprep.subr.mxu0 0.0
        %2626 = vmatpush1.msra.mxu0 0.0
        %2627 = vmatprep.subr.mxu0 0.0
        %2628 = vmatpush1.msra.mxu0 0.0
        %2629 = vmatprep.subr.mxu0 0.0
        %2630 = vmatpush1.msra.mxu0 0.0
        %2631 = vmatprep.subr.mxu0 0.0
        %2632 = vmatpush1.msra.mxu0 0.0
        %2633 = vmatprep.subr.mxu0 0.0
        %2634 = vmatpush1.msra.mxu0 0.0
        %2635 = vmatprep.subr.mxu0 0.0
        %2636 = vmatpush1.msra.mxu0 0.0
        %2637 = vmatprep.subr.mxu0 0.0
        %2638 = vmatpush1.msra.mxu0 0.0
        %2639 = vmatprep.subr.mxu0 0.0
        %2640 = vmatpush1.msra.mxu0 0.0
        %2641 = vmatprep.subr.mxu0 0.0
        %2642 = vmatpush1.msra.mxu0 0.0
        %2643 = vmatprep.subr.mxu0 0.0
        %2644 = vmatpush1.msra.mxu0 0.0
        %2645 = vmatprep.subr.mxu0 0.0
        %2646 = vmatpush1.msra.mxu0 0.0
        %2647 = vmatprep.subr.mxu0 0.0
        %2648 = vmatpush1.msra.mxu0 0.0
        %2649 = vmatprep.subr.mxu0 0.0
        %2650 = vmatpush1.msra.mxu0 0.0
        %2651 = vmatprep.subr.mxu0 0.0
        %2652 = vmatpush1.msra.mxu0 0.0
        %2653 = vmatprep.subr.mxu0 0.0
        %2654 = vmatpush1.msra.mxu0 0.0
        %2655 = vmatprep.subr.mxu0 0.0
        %2656 = vmatpush1.msra.mxu0 0.0
        %2657 = vmatprep.subr.mxu0 0.0
        %2658 = vmatpush1.msra.mxu0 0.0
        %2659 = vmatprep.subr.mxu0 0.0
        %2660 = vmatpush1.msra.mxu0 0.0
        %2661 = vmatprep.subr.mxu0 0.0
        %2662 = vmatpush1.msra.mxu0 0.0
        %2663 = vmatprep.subr.mxu0 0.0
        %2664 = vmatpush1.msra.mxu0 0.0
        %2665 = vmatprep.subr.mxu0 0.0
        %2666 = vmatpush1.msra.mxu0 0.0
        %2667 = vmatprep.mubr.f32.mxu0 0.0
        %2668 = vmatmul.mubr.f32.gmra.mrb[0].mxu0 %v2601
        %v2669 = vpop.f32.mrb[0].mxu0
        %v2670 = vadd.f32 0.0, %v2669
        %v2671 = vpop.f32.mrb[0].mxu0
        %2672 = vdwg.mxu0
        %v2673 = vsel %vm884, %v2451, 0.0
        %v2674 = vsel %vm884, %v2524, 0.0
        %v2675 = vadd.f32 %v2673, %v2674
        %v2676 = vsel %vm884, %v2597, 0.0
        %v2677 = vadd.f32 %v2675, %v2676
        %v2678 = vsel %vm884, %v2670, 0.0
        %v2679 = vadd.f32 %v2677, %v2678
        %v2680 = vlaneseq
        %v2681 = vshrl.u32 %v2680, 7
        %v2682 = vsub.s32 0, %v2681
        %v2683 = vrot.slane %v2376, %v2682
        %v2684 = vadd.f32 %v2679, %v2683
        %v2685 = vadd.f32 %v2684, %v751
        %v2686 = vsel %vm884, %v2685, 0.0
        %2687 = vadd.xlane.f32.xlu0 %v2686
        %v2688 = vpop.xlane.xlu0 %2687
        %v2689 = vrcp.pop 32.0
        %v2690 = vmul.f32 %v2688, %v2689
        %v2691 = vsub.f32 %v2685, %v2690
        %v2692 = vmul.f32 %v2691, %v2691
        %v2693 = vsel %vm884, %v2692, 0.0
        %2694 = vadd.xlane.f32.xlu0 %v2693
        %v2695 = vpop.xlane.xlu0 %2694
        %v2696 = vmul.f32 %v2695, %v2689
        %v2697 = vadd.f32 %v2696, 1e-12
        %v2698 = vrsqrt.pop %v2697
        %v2699 = vmul.f32 %v2691, %v2698
        %v2700 = vlaneseq
        %v2701 = vshrl.u32 %v2700, 7
        %v2702 = vsub.s32 1, %v2701
        %v2703 = vrot.slane %v2376, %v2702
        %v2704 = vmul.f32 %v2699, %v2703
        %v2705 = vlaneseq
        %v2706 = vshrl.u32 %v2705, 7
        %v2707 = vsub.s32 2, %v2706
        %v2708 = vrot.slane %v2376, %v2707
        %v2709 = vadd.f32 %v2704, %v2708
        %v2710 = vld [vmem:[%s593] sm:$0xff]
        %v2711 = vld [vmem:[%s593 + $0x8] sm:$0xff]
        %v2712 = vld [vmem:[%s593 + $0x10] sm:$0xff]
        %v2713 = vld [vmem:[%s593 + $0x18] sm:$0xff]
        %v2714 = vld [vmem:[%s596] sm:$0x1]
        %v2716 = vlaneseq
        %v2717 = vshrl.u32 %v2716, 7
        %v2718 = vsub.s32 0, %v2717
        %v2719 = vrot.slane %v2714, %v2718
        %v2722 = vsel %vm884, %v2709, 0
        %2724 = vmatprep.subr.mxu0 0.0
        %2725 = vmatpush1.msra.mxu0 %v2710
        %2726 = vmatprep.subr.mxu0 0.0
        %2727 = vmatpush1.msra.mxu0 %v2711
        %2728 = vmatprep.subr.mxu0 0.0
        %2729 = vmatpush1.msra.mxu0 %v2712
        %2730 = vmatprep.subr.mxu0 0.0
        %2731 = vmatpush1.msra.mxu0 %v2713
        %2732 = vmatprep.subr.mxu0 0.0
        %2733 = vmatpush1.msra.mxu0 0.0
        %2734 = vmatprep.subr.mxu0 0.0
        %2735 = vmatpush1.msra.mxu0 0.0
        %2736 = vmatprep.subr.mxu0 0.0
        %2737 = vmatpush1.msra.mxu0 0.0
        %2738 = vmatprep.subr.mxu0 0.0
        %2739 = vmatpush1.msra.mxu0 0.0
        %2740 = vmatprep.subr.mxu0 0.0
        %2741 = vmatpush1.msra.mxu0 0.0
        %2742 = vmatprep.subr.mxu0 0.0
        %2743 = vmatpush1.msra.mxu0 0.0
        %2744 = vmatprep.subr.mxu0 0.0
        %2745 = vmatpush1.msra.mxu0 0.0
        %2746 = vmatprep.subr.mxu0 0.0
        %2747 = vmatpush1.msra.mxu0 0.0
        %2748 = vmatprep.subr.mxu0 0.0
        %2749 = vmatpush1.msra.mxu0 0.0
        %2750 = vmatprep.subr.mxu0 0.0
        %2751 = vmatpush1.msra.mxu0 0.0
        %2752 = vmatprep.subr.mxu0 0.0
        %2753 = vmatpush1.msra.mxu0 0.0
        %2754 = vmatprep.subr.mxu0 0.0
        %2755 = vmatpush1.msra.mxu0 0.0
        %2756 = vmatprep.subr.mxu0 0.0
        %2757 = vmatpush1.msra.mxu0 0.0
        %2758 = vmatprep.subr.mxu0 0.0
        %2759 = vmatpush1.msra.mxu0 0.0
        %2760 = vmatprep.subr.mxu0 0.0
        %2761 = vmatpush1.msra.mxu0 0.0
        %2762 = vmatprep.subr.mxu0 0.0
        %2763 = vmatpush1.msra.mxu0 0.0
        %2764 = vmatprep.subr.mxu0 0.0
        %2765 = vmatpush1.msra.mxu0 0.0
        %2766 = vmatprep.subr.mxu0 0.0
        %2767 = vmatpush1.msra.mxu0 0.0
        %2768 = vmatprep.subr.mxu0 0.0
        %2769 = vmatpush1.msra.mxu0 0.0
        %2770 = vmatprep.subr.mxu0 0.0
        %2771 = vmatpush1.msra.mxu0 0.0
        %2772 = vmatprep.subr.mxu0 0.0
        %2773 = vmatpush1.msra.mxu0 0.0
        %2774 = vmatprep.subr.mxu0 0.0
        %2775 = vmatpush1.msra.mxu0 0.0
        %2776 = vmatprep.subr.mxu0 0.0
        %2777 = vmatpush1.msra.mxu0 0.0
        %2778 = vmatprep.subr.mxu0 0.0
        %2779 = vmatpush1.msra.mxu0 0.0
        %2780 = vmatprep.subr.mxu0 0.0
        %2781 = vmatpush1.msra.mxu0 0.0
        %2782 = vmatprep.subr.mxu0 0.0
        %2783 = vmatpush1.msra.mxu0 0.0
        %2784 = vmatprep.subr.mxu0 0.0
        %2785 = vmatpush1.msra.mxu0 0.0
        %2786 = vmatprep.subr.mxu0 0.0
        %2787 = vmatpush1.msra.mxu0 0.0
        %2788 = vmatprep.mubr.f32.mxu0 0.0
        %2789 = vmatmul.mubr.f32.gmra.mrb[0].mxu0 %v2722
        %v2790 = vpop.f32.mrb[0].mxu0
        %v2791 = vadd.f32 %v2719, %v2790
        %v2792 = vpop.f32.mrb[0].mxu0
        %2793 = vdwg.mxu0
        %v2794 = vmul.f32 %v2791, 0.5
        %v2795 = vmul.f32 %v2791, 0.70710677
        %vm2796 = vcmp.lt.f32.partialorder %v2795, 0.0
        %v2797 = vsel %vm2796, -1.0, 1.0
        %v2798 = vand.u32 2147483647, %v2795
        %v2799 = vmul.f32 %v2798, 0.3275911
        %v2800 = vadd.f32 %v2799, 1.0
        %v2801 = vrcp.pop %v2800
        %v2802 = vmul.f32 %v2801, 1.0614054
        %v2803 = vadd.f32 %v2802, -1.4531521
        %v2804 = vmul.f32 %v2801, %v2803
        %v2805 = vadd.f32 %v2804, 1.4214138
        %v2806 = vmul.f32 %v2801, %v2805
        %v2807 = vadd.f32 %v2806, -0.28449672
        %v2808 = vmul.f32 %v2801, %v2807
        %v2809 = vadd.f32 %v2808, 0.2548296
        %v2810 = vmul.f32 %v2801, %v2809
        %v2811 = vsub.f32 0.0, %v2798
        %v2812 = vmul.f32 %v2811, %v2798
        %v2813 = vmul.f32 %v2812, 1.442695
        %v2814 = vpow.pop %v2813
        %v2815 = vmul.f32 %v2810, %v2814
        %v2816 = vsub.f32 1.0, %v2815
        %v2817 = vmul.f32 %v2797, %v2816
        %v2818 = vadd.f32 %v2817, 1.0
        %v2819 = vmul.f32 %v2794, %v2818
        %v2820 = vld [vmem:[%s601] sm:$0xff]
        %v2821 = vld [vmem:[%s601 + $0x8] sm:$0xff]
        %v2822 = vld [vmem:[%s601 + $0x10] sm:$0xff]
        %v2823 = vld [vmem:[%s601 + $0x18] sm:$0xff]
        %v2824 = vld [vmem:[%s601 + $0x20] sm:$0xff]
        %v2825 = vld [vmem:[%s601 + $0x28] sm:$0xff]
        %v2826 = vld [vmem:[%s601 + $0x30] sm:$0xff]
        %v2827 = vld [vmem:[%s601 + $0x38] sm:$0xff]
        %v2828 = vlaneseq
        %v2829 = vshrl.u32 %v2828, 7
        %v2830 = vsub.s32 3, %v2829
        %v2831 = vrot.slane %v2376, %v2830
        %vm2832 = vcmask 523264
        %v2834 = vsel %vm2832, %v2819, 0
        %2836 = vmatprep.subr.mxu0 0.0
        %2837 = vmatpush1.msra.mxu0 %v2820
        %2838 = vmatprep.subr.mxu0 0.0
        %2839 = vmatpush1.msra.mxu0 %v2821
        %2840 = vmatprep.subr.mxu0 0.0
        %2841 = vmatpush1.msra.mxu0 %v2822
        %2842 = vmatprep.subr.mxu0 0.0
        %2843 = vmatpush1.msra.mxu0 %v2823
        %2844 = vmatprep.subr.mxu0 0.0
        %2845 = vmatpush1.msra.mxu0 %v2824
        %2846 = vmatprep.subr.mxu0 0.0
        %2847 = vmatpush1.msra.mxu0 %v2825
        %2848 = vmatprep.subr.mxu0 0.0
        %2849 = vmatpush1.msra.mxu0 %v2826
        %2850 = vmatprep.subr.mxu0 0.0
        %2851 = vmatpush1.msra.mxu0 %v2827
        %2852 = vmatprep.subr.mxu0 0.0
        %2853 = vmatpush1.msra.mxu0 0.0
        %2854 = vmatprep.subr.mxu0 0.0
        %2855 = vmatpush1.msra.mxu0 0.0
        %2856 = vmatprep.subr.mxu0 0.0
        %2857 = vmatpush1.msra.mxu0 0.0
        %2858 = vmatprep.subr.mxu0 0.0
        %2859 = vmatpush1.msra.mxu0 0.0
        %2860 = vmatprep.subr.mxu0 0.0
        %2861 = vmatpush1.msra.mxu0 0.0
        %2862 = vmatprep.subr.mxu0 0.0
        %2863 = vmatpush1.msra.mxu0 0.0
        %2864 = vmatprep.subr.mxu0 0.0
        %2865 = vmatpush1.msra.mxu0 0.0
        %2866 = vmatprep.subr.mxu0 0.0
        %2867 = vmatpush1.msra.mxu0 0.0
        %2868 = vmatprep.subr.mxu0 0.0
        %2869 = vmatpush1.msra.mxu0 0.0
        %2870 = vmatprep.subr.mxu0 0.0
        %2871 = vmatpush1.msra.mxu0 0.0
        %2872 = vmatprep.subr.mxu0 0.0
        %2873 = vmatpush1.msra.mxu0 0.0
        %2874 = vmatprep.subr.mxu0 0.0
        %2875 = vmatpush1.msra.mxu0 0.0
        %2876 = vmatprep.subr.mxu0 0.0
        %2877 = vmatpush1.msra.mxu0 0.0
        %2878 = vmatprep.subr.mxu0 0.0
        %2879 = vmatpush1.msra.mxu0 0.0
        %2880 = vmatprep.subr.mxu0 0.0
        %2881 = vmatpush1.msra.mxu0 0.0
        %2882 = vmatprep.subr.mxu0 0.0
        %2883 = vmatpush1.msra.mxu0 0.0
        %2884 = vmatprep.subr.mxu0 0.0
        %2885 = vmatpush1.msra.mxu0 0.0
        %2886 = vmatprep.subr.mxu0 0.0
        %2887 = vmatpush1.msra.mxu0 0.0
        %2888 = vmatprep.subr.mxu0 0.0
        %2889 = vmatpush1.msra.mxu0 0.0
        %2890 = vmatprep.subr.mxu0 0.0
        %2891 = vmatpush1.msra.mxu0 0.0
        %2892 = vmatprep.subr.mxu0 0.0
        %2893 = vmatpush1.msra.mxu0 0.0
        %2894 = vmatprep.subr.mxu0 0.0
        %2895 = vmatpush1.msra.mxu0 0.0
        %2896 = vmatprep.subr.mxu0 0.0
        %2897 = vmatpush1.msra.mxu0 0.0
        %2898 = vmatprep.subr.mxu0 0.0
        %2899 = vmatpush1.msra.mxu0 0.0
        %2900 = vmatprep.mubr.f32.mxu0 0.0
        %2901 = vmatmul.mubr.f32.gmra.mrb[0].mxu0 %v2834
        %v2902 = vpop.f32.mrb[0].mxu0
        %v2903 = vadd.f32 %v2831, %v2902
        %v2904 = vpop.f32.mrb[0].mxu0
        %2905 = vdwg.mxu0
        %v2906 = vadd.f32 %v2903, %v2709
        %v2907 = vsel %vm884, %v2906, 0.0
        %2908 = vadd.xlane.f32.xlu0 %v2907
        %v2909 = vpop.xlane.xlu0 %2908
        %v2910 = vmul.f32 %v2909, %v2689
        %v2911 = vsub.f32 %v2906, %v2910
        %v2912 = vmul.f32 %v2911, %v2911
        %v2913 = vsel %vm884, %v2912, 0.0
        %2914 = vadd.xlane.f32.xlu0 %v2913
        %v2915 = vpop.xlane.xlu0 %2914
        %v2916 = vmul.f32 %v2915, %v2689
        %v2917 = vadd.f32 %v2916, 1e-12
        %v2918 = vrsqrt.pop %v2917
        %v2919 = vmul.f32 %v2911, %v2918
        %v2920 = vlaneseq
        %v2921 = vshrl.u32 %v2920, 7
        %v2922 = vsub.s32 4, %v2921
        %v2923 = vrot.slane %v2376, %v2922
        %v2924 = vmul.f32 %v2919, %v2923
        %v2925 = vlaneseq
        %v2926 = vshrl.u32 %v2925, 7
        %v2927 = vsub.s32 5, %v2926
        %v2928 = vrot.slane %v2376, %v2927
        %v2929 = vadd.f32 %v2924, %v2928
        %2930 = vst.msk [vmem:[#allocation2] sm:$0xff] %vm884, %v2929
        %2931 = vst.msk [vmem:[%s613] sm:$0xff] %vm884, %v2929
        %s2932 = sand.u32 %s345, 1
        %s2933 = scalar_lea.sflag [#allocation4], %s2932
        %s2934 = sand.u32 %s345, 1
        %s2935 = smul.addr %s2934, 8
        %s2936 = scalar_lea.vmem [#allocation3], %s2935
        %p2937 = scmp.lt.s32.totalorder %s33, 1
        %s2938 = scalar_select %p2937, %s33, 1
        %p2939 = scmp.lt.s32.totalorder %s32, 1
        %s2940 = scalar_select %p2939, %s32, 1
        %s2941 = smul.addr %s2938, 2
        %s2942 = sadd.s32 %s2940, %s2941
        %s2943 = smul.addr %s2942, 8
        %s2944 = scalar_lea.vmem %s13, %s2943
        // Predicated region
        $region73: #{_lambda_.1} parent=67 // pred_check
          %p2945 = pneg %p355
        $region74: #{_lambda_.1} parent=67 // pred_check_branch
          %2947 = sbr.rel (%p2945) target = $region76
        $region75: #{_lambda_.1} parent=67 // pred_region
          %s2949 = ssub.s32 128, 128
          %2950 = vsyncadd %s2933, %s2949
          %s2951 = smul.addr %s32, 128
          %s2952 = scalar_lea.hbm %s12, %s2951
          %s2954 = sshll.u32 %s2936, 4
          %s2955 = int_to_ptr.vmem [resolvable:$true] %s2954
          %2957 = dma.vmem_to_hbm [thread:$0]  %s2955, 128, %s2952, %s2933
        $region76: #{_lambda_.1} parent=67 // pred_fallthru
          _
        // Predicated region
        $region77: #{_lambda_.1} parent=67 // pred_check
          %p2958 = pneg %p383
        $region78: #{_lambda_.1} parent=67 // pred_check_branch
          %2960 = sbr.rel (%p2958) target = $region80
        $region79: #{_lambda_.1} parent=67 // pred_region
          _
        $region80: #{_lambda_.1} parent=67 // pred_fallthru
          _
      $region68: #{_lambda_.1} parent=5 // pred_fallthru
        _
      %p2961 = scmp.le.s32.totalorder 2, %s23
      // Predicated region
      $region81: #{_lambda_.1} parent=5 // pred_check
        %p2962 = pneg %p2961
      $region82: #{_lambda_.1} parent=5 // pred_check_branch
        %2964 = sbr.rel (%p2962) target = $region84
      $region83: #{_lambda_.1} parent=5 // pred_region
        %s2965 = ssub.s32 %s23, 2
        // Predicated region
        $region85: #{_lambda_.1} parent=83 // pred_check
          %p2966 = pneg %p361
        $region86: #{_lambda_.1} parent=83 // pred_check_branch
          %2968 = sbr.rel (%p2966) target = $region88
        $region87: #{_lambda_.1} parent=83 // pred_region
          %s2969 = sand.u32 %s346, 1
          %s2970 = scalar_lea.sflag [#allocation4], %s2969
          %s2971 = sand.u32 %s346, 1
          %s2972 = smul.addr %s2971, 8
          %s2973 = scalar_lea.vmem [#allocation3], %s2972
          %2974 = dma.done %s2970, 128
        $region88: #{_lambda_.1} parent=83 // pred_fallthru
          _
        // Predicated region
        $region89: #{_lambda_.1} parent=83 // pred_check
          %p2975 = pneg %p389
        $region90: #{_lambda_.1} parent=83 // pred_check_branch
          %2977 = sbr.rel (%p2975) target = $region92
        $region91: #{_lambda_.1} parent=83 // pred_region
          %p2978 = scmp.lt.s32.totalorder %s35, 1
          %s2979 = scalar_select %p2978, %s35, 1
          %p2980 = scmp.lt.s32.totalorder %s34, 1
          %s2981 = scalar_select %p2980, %s34, 1
          %s2982 = smul.addr %s2979, 2
          %s2983 = sadd.s32 %s2981, %s2982
          %s2984 = smul.addr %s2983, 8
          %s2985 = scalar_lea.vmem %s13, %s2984
        $region92: #{_lambda_.1} parent=83 // pred_fallthru
          _
      $region84: #{_lambda_.1} parent=5 // pred_fallthru
        _
    $region6: #{_lambda_.1} parent=1 // loop_footer
      %s27 = sadd.s32 1, %s23
    $region7: #{_lambda_.1} parent=1 // loop_footer_branch
      %22 = sbr.rel target = $region3
    $region8: #{_lambda_.1} parent=1 // loop_exit
      _
    %2986 = vsyncpa [#allocation4], 1
    %s2987 = scalar_lea.sflag [#allocation4], 1
    %2988 = vsyncpa %s2987, 1

</llo_original>
